<compile_context>
chip_gen: v5e
topology: v5e:2x2
jax: 0.10.0
libtpu: 0.0.40
codegen_flags: <defaults>
</compile_context>

<pallas_src>
import functools

import jax
import jax.numpy as jnp
from jax.experimental import pallas as pl
from jax.experimental.pallas import tpu as pltpu


_LANE = 128
_VMEM_TILE_BUDGET = 12 << 20        # per-grid-step working-set target
_VMEM_LIMIT = 48 * 1024 * 1024      # scoped-VMEM limit handed to Mosaic (v7x-safe)


def _ceil_to(v, m):
    return ((v + m - 1) // m) * m


# ----------------------------------------------------------------------------
# GELU (exact erf formulation -- matches torch.nn.GELU() default)
# ----------------------------------------------------------------------------
def _erf_poly(x):
    # Abramowitz & Stegun 7.1.26 (|err| < 1.5e-7); lowers everywhere (VPU + EUP exp).
    a1, a2, a3, a4, a5 = 0.254829592, -0.284496736, 1.421413741, -1.453152027, 1.061405429
    p = 0.3275911
    s = jnp.where(x >= 0.0, 1.0, -1.0)
    ax = jnp.abs(x)
    t = 1.0 / (1.0 + p * ax)
    poly = ((((a5 * t + a4) * t + a3) * t + a2) * t + a1) * t
    return s * (1.0 - poly * jnp.exp(-ax * ax))


def _gelu(x):
    return 0.5 * x * (1.0 + _erf_poly(x * 0.7071067811865476))


# ----------------------------------------------------------------------------
# Kernel A: row-tiled conv3x3 (pad=1, bias=False) + per-tile BN partial stats.
# ----------------------------------------------------------------------------
def _conv_kernel(xm_ref, xh_ref, w_ref, y_ref, st_ref, xwin_ref, lhs_ref,
                 *, TM, W, Cip, Cop):
    # Assemble the (TM+2)-row halo window once, casting to bf16 (MXU operand dtype).
    xwin_ref[0:TM] = xm_ref[0].astype(jnp.bfloat16)
    xwin_ref[TM:TM + 2] = xh_ref[0].astype(jnp.bfloat16)

    # im2col: fold all 9 taps of the 3x3 stencil into the contraction dimension.
    # Lane offsets are multiples of Cip (itself a multiple of 128) -> aligned stores.
    for t in range(9):
        ky, kx = divmod(t, 3)
        lhs_ref[:, :, t * Cip:(t + 1) * Cip] = xwin_ref[ky:ky + TM, kx:kx + W, :]

    # Single MXU matmul per tile: (TM*W, 9*Cip) @ (9*Cip, Cop), bf16 x bf16 -> f32.
    acc = jnp.dot(lhs_ref[...].reshape(TM * W, 9 * Cip), w_ref[...],
                  preferred_element_type=jnp.float32)
    y_ref[...] = acc.reshape(1, TM, W, Cop)

    # Per-tile BN partials: tile mean + tile-centered sum of squares.  Combined
    # across tiles with Chan's parallel-variance formula in the wrapper.
    mean = jnp.mean(acc, axis=0, keepdims=True)             # (1, Cop)
    cent = acc - mean
    m2 = jnp.sum(cent * cent, axis=0, keepdims=True)        # (1, Cop)
    st_ref[:, :, 0:1, :] = mean.reshape(1, 1, 1, Cop)
    st_ref[:, :, 1:2, :] = m2.reshape(1, 1, 1, Cop)


def _pick_row_tile(H, W, Cip, Cop):
    """Largest even row tile dividing H whose kernel-A working set fits the VMEM
    budget; prefers >=2 tiles per image so the grid pipelines / megacore-shards."""

    def footprint(tm):
        b = 2 * tm * (W + 2) * Cip * 4            # main input block (f32, double-buffered)
        b += 2 * 2 * (W + 2) * Cip * 4            # 2-row halo block
        b += 2 * 9 * Cip * Cop * 2                # folded weights (bf16)
        b += 2 * tm * W * Cop * 4                 # conv output block (f32)
        b += 2 * 8 * Cop * 4                      # stats block
        b += (tm + 2) * (W + 2) * Cip * 2         # halo-window scratch (bf16)
        b += tm * W * 9 * Cip * 2                 # im2col scratch (bf16)
        return b

    cands = [tm for tm in range(2, H + 1, 2) if H % tm == 0]
    if not cands:
        # TODO(synk): odd spatial heights would need a different halo-indexing scheme.
        raise NotImplementedError("row tiler requires an even spatial height")
    fitting = [tm for tm in cands if footprint(tm) <= _VMEM_TILE_BUDGET] or cands[:1]
    multi = [tm for tm in fitting if tm < H]
    return max(multi) if multi else max(fitting)


def _conv_partial_stats(x, w_folded, TM):
    """Row-tiled 3x3 conv (pad=1, bias=False) + per-tile BN partial statistics."""
    N, H, W, Cip = x.shape
    Cop = w_folded.shape[1]
    T = H // TM
    half = TM // 2

    # 1-px zero halo on top/left/right; bottom padded to TM-1 zero rows so every
    # blocked leading dim is an exact multiple of its block size (extra rows unread).
    xp = jnp.pad(x, ((0, 0), (1, TM - 1), (1, 1), (0, 0)))

    kern = functools.partial(_conv_kernel, TM=TM, W=W, Cip=Cip, Cop=Cop)
    return pl.pallas_call(
        kern,
        out_shape=(jax.ShapeDtypeStruct((N, H, W, Cop), jnp.float32),
                   jax.ShapeDtypeStruct((N, T, 8, Cop), jnp.float32)),
        grid=(N, T),
        in_specs=[
            # rows [i*TM, (i+1)*TM) of the padded input
            pl.BlockSpec((1, TM, W + 2, Cip), lambda n, i: (n, i, 0, 0)),
            # 2-row bottom halo: rows [(i+1)*TM, (i+1)*TM + 2)
            pl.BlockSpec((1, 2, W + 2, Cip), lambda n, i: (n, (i + 1) * half, 0, 0)),
            # folded weights (constant block index -> fetched once, stays resident)
            pl.BlockSpec((9 * Cip, Cop), lambda n, i: (0, 0)),
        ],
        out_specs=(
            pl.BlockSpec((1, TM, W, Cop), lambda n, i: (n, i, 0, 0)),
            pl.BlockSpec((1, 1, 8, Cop), lambda n, i: (n, i, 0, 0)),
        ),
        scratch_shapes=[
            pltpu.VMEM((TM + 2, W + 2, Cip), jnp.bfloat16),   # halo window (bf16)
            pltpu.VMEM((TM, W, 9 * Cip), jnp.bfloat16),       # im2col / K-folded LHS
        ],
        compiler_params=pltpu.CompilerParams(
            dimension_semantics=("parallel", "parallel"),
            vmem_limit_bytes=_VMEM_LIMIT),
    )(xp, xp, w_folded)


# ----------------------------------------------------------------------------
# Kernel B: lane-dense elementwise BatchNorm + GELU (+ optional residual).
# ----------------------------------------------------------------------------
def _bn_act_kernel(*refs, has_residual):
    if has_residual:
        y_ref, sc_ref, sh_ref, r_ref, o_ref = refs
    else:
        y_ref, sc_ref, sh_ref, o_ref = refs
        r_ref = None
    z = y_ref[...] * sc_ref[...] + sh_ref[...]
    z = _gelu(z)
    if r_ref is not None:
        z = z + r_ref[...]
    o_ref[...] = z.astype(o_ref.dtype)


def _bn_gelu(y, scale, shift, residual, TM):
    N, H, W, Cop = y.shape
    T = H // TM
    has_res = residual is not None

    in_specs = [
        pl.BlockSpec((1, TM, W, Cop), lambda n, i: (n, i, 0, 0)),
        pl.BlockSpec((1, Cop), lambda n, i: (0, 0)),
        pl.BlockSpec((1, Cop), lambda n, i: (0, 0)),
    ]
    args = [y, scale, shift]
    if has_res:
        in_specs.append(pl.BlockSpec((1, TM, W, Cop), lambda n, i: (n, i, 0, 0)))
        args.append(residual)

    kern = functools.partial(_bn_act_kernel, has_residual=has_res)
    return pl.pallas_call(
        kern,
        out_shape=jax.ShapeDtypeStruct((N, H, W, Cop), jnp.float32),
        grid=(N, T),
        in_specs=in_specs,
        out_specs=pl.BlockSpec((1, TM, W, Cop), lambda n, i: (n, i, 0, 0)),
        compiler_params=pltpu.CompilerParams(
            dimension_semantics=("parallel", "parallel"),
            vmem_limit_bytes=_VMEM_LIMIT),
    )(*args)


# ----------------------------------------------------------------------------
# One layer: conv3x3 -> BatchNorm2d (training-mode batch stats) -> GELU (+res).
# ----------------------------------------------------------------------------
def conv3x3_bn_gelu(x, w_oihw, gamma, beta, *, residual=None, eps=1e-5):
    """x: (N, H, W, Cin_pad) f32, channels zero-padded to a multiple of 128.
    Returns (N, H, W, Cout_pad) f32; padded output channels are exactly zero."""
    N, H, W, Cip = x.shape
    Cout, Cin = int(w_oihw.shape[0]), int(w_oihw.shape[1])
    Cop = _ceil_to(Cout, _LANE)
    TM = _pick_row_tile(H, W, Cip, Cop)
    T = H // TM

    # Fold the 3x3 taps into the contraction dim and zero-pad channels:
    # (Cout, Cin, 3, 3) -> (ky, kx, ci, co) -> (9*Cip, Cop), bf16 MXU operand.
    w_t = jnp.transpose(w_oihw, (2, 3, 1, 0)).reshape(9, Cin, Cout)
    w_pad = jnp.zeros((9, Cip, Cop), jnp.float32).at[:, :Cin, :Cout].set(w_t)
    w_folded = w_pad.reshape(9 * Cip, Cop).astype(jnp.bfloat16)

    y, stats = _conv_partial_stats(x, w_folded, TM)

    # Chan combine of per-tile (mean, centered M2) -> global batch stats (tiny XLA
    # math on (Cop,) vectors; every tile has exactly TM*W elements).
    tmean = stats[:, :, 0, :].reshape(N * T, Cop)
    tm2 = stats[:, :, 1, :].reshape(N * T, Cop)
    gmean = jnp.mean(tmean, axis=0)
    gm2 = jnp.sum(tm2, axis=0) + float(TM * W) * jnp.sum((tmean - gmean) ** 2, axis=0)
    var = gm2 / float(N * H * W)                          # biased var (BN training mode)

    gamma_p = jnp.zeros((Cop,), jnp.float32).at[:Cout].set(gamma.astype(jnp.float32))
    beta_p = jnp.zeros((Cop,), jnp.float32).at[:Cout].set(beta.astype(jnp.float32))
    scale = gamma_p * jax.lax.rsqrt(var + eps)            # padded channels: scale = 0
    shift = beta_p - gmean * scale

    return _bn_gelu(y, scale.reshape(1, Cop), shift.reshape(1, Cop), residual, TM)


# ----------------------------------------------------------------------------
# XLA glue: bilinear 2x upsample (align_corners=True), pad, NHWC concat + C-pad.
# ----------------------------------------------------------------------------
def _bilinear_up2x_align_corners(x_nchw):
    N, C, H, W = x_nchw.shape
    Ho, Wo = 2 * H, 2 * W

    def axis_coords(n_in, n_out):
        if n_in == 1:
            z = jnp.zeros((n_out,), jnp.int32)
            return z, z, jnp.zeros((n_out,), jnp.float32)
        src = jnp.arange(n_out, dtype=jnp.float32) * (n_in - 1) / (n_out - 1)
        i0 = jnp.clip(jnp.floor(src).astype(jnp.int32), 0, n_in - 2)
        frac = src - i0.astype(jnp.float32)
        return i0, i0 + 1, frac

    y0, y1, fy = axis_coords(H, Ho)
    x0, x1, fx = axis_coords(W, Wo)
    r0 = x_nchw[:, :, y0, :]
    r1 = x_nchw[:, :, y1, :]
    fy4 = fy[None, None, :, None]
    rows = r0 * (1.0 - fy4) + r1 * fy4
    c0 = rows[:, :, :, x0]
    c1 = rows[:, :, :, x1]
    fx4 = fx[None, None, None, :]
    return c0 * (1.0 - fx4) + c1 * fx4


# ----------------------------------------------------------------------------
# Parameters (deterministic init) and forward pass
# ----------------------------------------------------------------------------
def init_params(key, in_channels, out_channels):
    mid = in_channels // 2
    ks = jax.random.split(key, 4)

    def conv_w(k, co, ci):
        bound = 1.0 / jnp.sqrt(ci * 9.0)
        return jax.random.uniform(k, (co, ci, 3, 3), jnp.float32, -bound, bound)

    return {
        # conv1 = ResBlock(C, C, C//2, gelu): DoubleConv(C, C, C//2) + identity skip
        "c1a_w": conv_w(ks[0], mid, in_channels),
        "c1a_g": jnp.ones((mid,), jnp.float32), "c1a_b": jnp.zeros((mid,), jnp.float32),
        "c1b_w": conv_w(ks[1], in_channels, mid),
        "c1b_g": jnp.ones((in_channels,), jnp.float32),
        "c1b_b": jnp.zeros((in_channels,), jnp.float32),
        # conv2 = DoubleConv(C, C_out, C//2, gelu)
        "c2a_w": conv_w(ks[2], mid, in_channels),
        "c2a_g": jnp.ones((mid,), jnp.float32), "c2a_b": jnp.zeros((mid,), jnp.float32),
        "c2b_w": conv_w(ks[3], out_channels, mid),
        "c2b_g": jnp.ones((out_channels,), jnp.float32),
        "c2b_b": jnp.zeros((out_channels,), jnp.float32),
    }


def unet_double_up(params, x1_nchw, x2_nchw):
    """UNetDoubleUp.forward (use_upsample=True branch)."""
    up = _bilinear_up2x_align_corners(x1_nchw)
    dy = x2_nchw.shape[2] - up.shape[2]
    dx = x2_nchw.shape[3] - up.shape[3]
    up = jnp.pad(up, ((0, 0), (0, 0),
                      (dy // 2, dy - dy // 2), (dx // 2, dx - dx // 2)))

    # NHWC transpose + channel concat + zero-pad channels to a lane-dense 128, once.
    x2n = jnp.transpose(x2_nchw, (0, 2, 3, 1))
    upn = jnp.transpose(up, (0, 2, 3, 1))
    N, H, W, c2 = x2n.shape
    c1 = upn.shape[-1]
    cp = _ceil_to(c2 + c1, _LANE)
    x = jnp.zeros((N, H, W, cp), jnp.float32)
    x = x.at[..., :c2].set(x2n).at[..., c2:c2 + c1].set(upn)

    # TODO(synk): ResBlock/DoubleConv bodies are not in the provided source; implemented
    # as (conv3x3 bias=False -> BN(batch stats) -> GELU) x 2, identity skip for ResBlock.
    h = conv3x3_bn_gelu(x, params["c1a_w"], params["c1a_g"], params["c1a_b"])
    h = conv3x3_bn_gelu(h, params["c1b_w"], params["c1b_g"], params["c1b_b"], residual=x)
    h = conv3x3_bn_gelu(h, params["c2a_w"], params["c2a_g"], params["c2a_b"])
    h = conv3x3_bn_gelu(h, params["c2b_w"], params["c2b_g"], params["c2b_b"])

    out_channels = params["c2b_w"].shape[0]
    return jnp.transpose(h[..., :out_channels], (0, 3, 1, 2))   # back to NCHW


if __name__ == "__main__":
    key = jax.random.PRNGKey(0)
    k1, k2, kp = jax.random.split(key, 3)
    in_channels, out_channels = 8, 4
    # x1: deeper feature map (C_in//2 channels, half resolution); x2: skip connection.
    x1 = jax.random.normal(k1, (2, in_channels // 2, 8, 8), jnp.float32)
    x2 = jax.random.normal(k2, (2, in_channels // 2, 16, 16), jnp.float32)
    params = init_params(kp, in_channels, out_channels)

    out = jax.jit(unet_double_up)(params, x1, x2)
    jax.block_until_ready(out)
    assert out.shape == (2, out_channels, 16, 16), out.shape
    assert out.dtype == jnp.float32
    print("KERNEL_OK")
</pallas_src>

<mosaic_0001>
module attributes {stable_mosaic.version = 11 : i64} {
  func.func @_conv_kernel(%arg0: i32, %arg1: i32, %arg2: memref<1x8x18x128xf32, #tpu.memory_space<vmem>>, %arg3: memref<1x2x18x128xf32, #tpu.memory_space<vmem>>, %arg4: memref<1152x128xbf16, #tpu.memory_space<vmem>>, %arg5: memref<1x8x16x128xf32, #tpu.memory_space<vmem>>, %arg6: memref<1x1x8x128xf32, #tpu.memory_space<vmem>>, %arg7: memref<10x18x128xbf16, #tpu.memory_space<vmem>>, %arg8: memref<8x16x1152xbf16, #tpu.memory_space<vmem>>) attributes {dimension_semantics = [#tpu.dimension_semantics<parallel>, #tpu.dimension_semantics<parallel>], iteration_bounds = array<i64: 2, 2>, scalar_prefetch = 0 : i64, scratch_operands = 2 : i64, tpu.core_type = #tpu.core_type<tc>, window_params = [{transform_indices = @transform_0, window_bounds = array<i64: 1, 8, 18, 128>}, {transform_indices = @transform_1, window_bounds = array<i64: 1, 2, 18, 128>}, {pipeline_mode = #tpu.pipeline_mode<synchronous>, transform_indices = @transform_2, window_bounds = array<i64: 1152, 128>}, {transform_indices = @transform_3, window_bounds = array<i64: 1, 8, 16, 128>}, {transform_indices = @transform_4, window_bounds = array<i64: 1, 1, 8, 128>}]} {
    %c0 = arith.constant 0 : index
    %c0_0 = arith.constant 0 : index
    %c0_1 = arith.constant 0 : index
    %c0_2 = arith.constant 0 : index
    %0 = vector.load %arg2[%c0, %c0_0, %c0_1, %c0_2] : memref<1x8x18x128xf32, #tpu.memory_space<vmem>>, vector<1x8x18x128xf32>
    %1 = vector.shape_cast %0 : vector<1x8x18x128xf32> to vector<8x18x128xf32>
    %2 = arith.truncf %1 : vector<8x18x128xf32> to vector<8x18x128xbf16>
    %c0_3 = arith.constant 0 : index
    %c0_4 = arith.constant 0 : index
    %c0_5 = arith.constant 0 : index
    %3 = vector.load %arg7[%c0_3, %c0_4, %c0_5] : memref<10x18x128xbf16, #tpu.memory_space<vmem>>, vector<8x18x128xbf16>
    tpu.vector_store %arg7[%c0_3, %c0_4, %c0_5], %2 {strides = array<i32>} : memref<10x18x128xbf16, #tpu.memory_space<vmem>>, vector<8x18x128xbf16>,
    %c0_6 = arith.constant 0 : index
    %c0_7 = arith.constant 0 : index
    %c0_8 = arith.constant 0 : index
    %c0_9 = arith.constant 0 : index
    %4 = vector.load %arg3[%c0_6, %c0_7, %c0_8, %c0_9] : memref<1x2x18x128xf32, #tpu.memory_space<vmem>>, vector<1x2x18x128xf32>
    %5 = vector.shape_cast %4 : vector<1x2x18x128xf32> to vector<2x18x128xf32>
    %6 = arith.truncf %5 : vector<2x18x128xf32> to vector<2x18x128xbf16>
    %c8 = arith.constant 8 : index
    %c0_10 = arith.constant 0 : index
    %c0_11 = arith.constant 0 : index
    %7 = vector.load %arg7[%c8, %c0_10, %c0_11] : memref<10x18x128xbf16, #tpu.memory_space<vmem>>, vector<2x18x128xbf16>
    tpu.vector_store %arg7[%c8, %c0_10, %c0_11], %6 {strides = array<i32>} : memref<10x18x128xbf16, #tpu.memory_space<vmem>>, vector<2x18x128xbf16>,
    %c0_12 = arith.constant 0 : index
    %c0_13 = arith.constant 0 : index
    %c0_14 = arith.constant 0 : index
    %8 = vector.load %arg7[%c0_12, %c0_13, %c0_14] : memref<10x18x128xbf16, #tpu.memory_space<vmem>>, vector<8x16x128xbf16>
    %c0_15 = arith.constant 0 : index
    %c0_16 = arith.constant 0 : index
    %c0_17 = arith.constant 0 : index
    %9 = vector.load %arg8[%c0_15, %c0_16, %c0_17] : memref<8x16x1152xbf16, #tpu.memory_space<vmem>>, vector<8x16x128xbf16>
    tpu.vector_store %arg8[%c0_15, %c0_16, %c0_17], %8 {strides = array<i32>} : memref<8x16x1152xbf16, #tpu.memory_space<vmem>>, vector<8x16x128xbf16>,
    %c0_18 = arith.constant 0 : index
    %c1 = arith.constant 1 : index
    %c0_19 = arith.constant 0 : index
    %10 = vector.load %arg7[%c0_18, %c1, %c0_19] : memref<10x18x128xbf16, #tpu.memory_space<vmem>>, vector<8x16x128xbf16>
    %c0_20 = arith.constant 0 : index
    %c0_21 = arith.constant 0 : index
    %c128 = arith.constant 128 : index
    %11 = vector.load %arg8[%c0_20, %c0_21, %c128] : memref<8x16x1152xbf16, #tpu.memory_space<vmem>>, vector<8x16x128xbf16>
    tpu.vector_store %arg8[%c0_20, %c0_21, %c128], %10 {strides = array<i32>} : memref<8x16x1152xbf16, #tpu.memory_space<vmem>>, vector<8x16x128xbf16>,
    %c0_22 = arith.constant 0 : index
    %c2 = arith.constant 2 : index
    %c0_23 = arith.constant 0 : index
    %12 = vector.load %arg7[%c0_22, %c2, %c0_23] : memref<10x18x128xbf16, #tpu.memory_space<vmem>>, vector<8x16x128xbf16>
    %c0_24 = arith.constant 0 : index
    %c0_25 = arith.constant 0 : index
    %c256 = arith.constant 256 : index
    %13 = vector.load %arg8[%c0_24, %c0_25, %c256] : memref<8x16x1152xbf16, #tpu.memory_space<vmem>>, vector<8x16x128xbf16>
    tpu.vector_store %arg8[%c0_24, %c0_25, %c256], %12 {strides = array<i32>} : memref<8x16x1152xbf16, #tpu.memory_space<vmem>>, vector<8x16x128xbf16>,
    %c1_26 = arith.constant 1 : index
    %c0_27 = arith.constant 0 : index
    %c0_28 = arith.constant 0 : index
    %14 = vector.load %arg7[%c1_26, %c0_27, %c0_28] : memref<10x18x128xbf16, #tpu.memory_space<vmem>>, vector<8x16x128xbf16>
    %c0_29 = arith.constant 0 : index
    %c0_30 = arith.constant 0 : index
    %c384 = arith.constant 384 : index
    %15 = vector.load %arg8[%c0_29, %c0_30, %c384] : memref<8x16x1152xbf16, #tpu.memory_space<vmem>>, vector<8x16x128xbf16>
    tpu.vector_store %arg8[%c0_29, %c0_30, %c384], %14 {strides = array<i32>} : memref<8x16x1152xbf16, #tpu.memory_space<vmem>>, vector<8x16x128xbf16>,
    %c1_31 = arith.constant 1 : index
    %c1_32 = arith.constant 1 : index
    %c0_33 = arith.constant 0 : index
    %16 = vector.load %arg7[%c1_31, %c1_32, %c0_33] : memref<10x18x128xbf16, #tpu.memory_space<vmem>>, vector<8x16x128xbf16>
    %c0_34 = arith.constant 0 : index
    %c0_35 = arith.constant 0 : index
    %c512 = arith.constant 512 : index
    %17 = vector.load %arg8[%c0_34, %c0_35, %c512] : memref<8x16x1152xbf16, #tpu.memory_space<vmem>>, vector<8x16x128xbf16>
    tpu.vector_store %arg8[%c0_34, %c0_35, %c512], %16 {strides = array<i32>} : memref<8x16x1152xbf16, #tpu.memory_space<vmem>>, vector<8x16x128xbf16>,
    %c1_36 = arith.constant 1 : index
    %c2_37 = arith.constant 2 : index
    %c0_38 = arith.constant 0 : index
    %18 = vector.load %arg7[%c1_36, %c2_37, %c0_38] : memref<10x18x128xbf16, #tpu.memory_space<vmem>>, vector<8x16x128xbf16>
    %c0_39 = arith.constant 0 : index
    %c0_40 = arith.constant 0 : index
    %c640 = arith.constant 640 : index
    %19 = vector.load %arg8[%c0_39, %c0_40, %c640] : memref<8x16x1152xbf16, #tpu.memory_space<vmem>>, vector<8x16x128xbf16>
    tpu.vector_store %arg8[%c0_39, %c0_40, %c640], %18 {strides = array<i32>} : memref<8x16x1152xbf16, #tpu.memory_space<vmem>>, vector<8x16x128xbf16>,
    %c2_41 = arith.constant 2 : index
    %c0_42 = arith.constant 0 : index
    %c0_43 = arith.constant 0 : index
    %20 = vector.load %arg7[%c2_41, %c0_42, %c0_43] : memref<10x18x128xbf16, #tpu.memory_space<vmem>>, vector<8x16x128xbf16>
    %c0_44 = arith.constant 0 : index
    %c0_45 = arith.constant 0 : index
    %c768 = arith.constant 768 : index
    %21 = vector.load %arg8[%c0_44, %c0_45, %c768] : memref<8x16x1152xbf16, #tpu.memory_space<vmem>>, vector<8x16x128xbf16>
    tpu.vector_store %arg8[%c0_44, %c0_45, %c768], %20 {strides = array<i32>} : memref<8x16x1152xbf16, #tpu.memory_space<vmem>>, vector<8x16x128xbf16>,
    %c2_46 = arith.constant 2 : index
    %c1_47 = arith.constant 1 : index
    %c0_48 = arith.constant 0 : index
    %22 = vector.load %arg7[%c2_46, %c1_47, %c0_48] : memref<10x18x128xbf16, #tpu.memory_space<vmem>>, vector<8x16x128xbf16>
    %c0_49 = arith.constant 0 : index
    %c0_50 = arith.constant 0 : index
    %c896 = arith.constant 896 : index
    %23 = vector.load %arg8[%c0_49, %c0_50, %c896] : memref<8x16x1152xbf16, #tpu.memory_space<vmem>>, vector<8x16x128xbf16>
    tpu.vector_store %arg8[%c0_49, %c0_50, %c896], %22 {strides = array<i32>} : memref<8x16x1152xbf16, #tpu.memory_space<vmem>>, vector<8x16x128xbf16>,
    %c2_51 = arith.constant 2 : index
    %c2_52 = arith.constant 2 : index
    %c0_53 = arith.constant 0 : index
    %24 = vector.load %arg7[%c2_51, %c2_52, %c0_53] : memref<10x18x128xbf16, #tpu.memory_space<vmem>>, vector<8x16x128xbf16>
    %c0_54 = arith.constant 0 : index
    %c0_55 = arith.constant 0 : index
    %c1024 = arith.constant 1024 : index
    %25 = vector.load %arg8[%c0_54, %c0_55, %c1024] : memref<8x16x1152xbf16, #tpu.memory_space<vmem>>, vector<8x16x128xbf16>
    tpu.vector_store %arg8[%c0_54, %c0_55, %c1024], %24 {strides = array<i32>} : memref<8x16x1152xbf16, #tpu.memory_space<vmem>>, vector<8x16x128xbf16>,
    %c0_56 = arith.constant 0 : index
    %c0_57 = arith.constant 0 : index
    %c0_58 = arith.constant 0 : index
    %26 = vector.load %arg8[%c0_56, %c0_57, %c0_58] : memref<8x16x1152xbf16, #tpu.memory_space<vmem>>, vector<8x16x1152xbf16>
    %27 = vector.shape_cast %26 : vector<8x16x1152xbf16> to vector<128x1152xbf16>
    %c0_59 = arith.constant 0 : index
    %c0_60 = arith.constant 0 : index
    %28 = vector.load %arg4[%c0_59, %c0_60] : memref<1152x128xbf16, #tpu.memory_space<vmem>>, vector<1152x128xbf16>
    %cst = arith.constant dense<0.000000e+00> : vector<128x128xf32>
    %29 = tpu.matmul %27, %28, %cst {dimension_numbers = #tpu.dot_dimension_numbers<[1], [0], [0], [1], [0, 0, 1, 1], [], []>} : vector<128x1152xbf16>, vector<1152x128xbf16>, vector<128x128xf32> -> vector<128x128xf32>
    %30 = vector.shape_cast %29 : vector<128x128xf32> to vector<1x8x16x128xf32>
    %c0_61 = arith.constant 0 : index
    %c0_62 = arith.constant 0 : index
    %c0_63 = arith.constant 0 : index
    %c0_64 = arith.constant 0 : index
    %31 = vector.load %arg5[%c0_61, %c0_62, %c0_63, %c0_64] : memref<1x8x16x128xf32, #tpu.memory_space<vmem>>, vector<1x8x16x128xf32>
    tpu.vector_store %arg5[%c0_61, %c0_62, %c0_63, %c0_64], %30 {strides = array<i32>} : memref<1x8x16x128xf32, #tpu.memory_space<vmem>>, vector<1x8x16x128xf32>,
    %cst_65 = arith.constant dense<0.000000e+00> : vector<128xf32>
    %32 = vector.multi_reduction <add>, %29, %cst_65 [0] : vector<128x128xf32> to vector<128xf32>
    %33 = vector.shape_cast %32 : vector<128xf32> to vector<1x128xf32>
    %cst_66 = arith.constant 1.280000e+02 : f32
    %34 = vector.broadcast %cst_66 : f32 to vector<1x128xf32>
    %35 = arith.divf %33, %34 : vector<1x128xf32>
    %36 = vector.broadcast %35 : vector<1x128xf32> to vector<128x128xf32>
    %37 = arith.subf %29, %36 : vector<128x128xf32>
    %38 = arith.mulf %37, %37 : vector<128x128xf32>
    %cst_67 = arith.constant dense<0.000000e+00> : vector<128xf32>
    %39 = vector.multi_reduction <add>, %38, %cst_67 [0] : vector<128x128xf32> to vector<128xf32>
    %40 = vector.shape_cast %39 : vector<128xf32> to vector<1x128xf32>
    %41 = vector.shape_cast %35 : vector<1x128xf32> to vector<1x1x1x128xf32>
    %c0_68 = arith.constant 0 : index
    %c0_69 = arith.constant 0 : index
    %c0_70 = arith.constant 0 : index
    %c0_71 = arith.constant 0 : index
    %42 = vector.load %arg6[%c0_68, %c0_69, %c0_70, %c0_71] : memref<1x1x8x128xf32, #tpu.memory_space<vmem>>, vector<1x1x1x128xf32>
    tpu.vector_store %arg6[%c0_68, %c0_69, %c0_70, %c0_71], %41 {strides = array<i32>} : memref<1x1x8x128xf32, #tpu.memory_space<vmem>>, vector<1x1x1x128xf32>,
    %43 = vector.shape_cast %40 : vector<1x128xf32> to vector<1x1x1x128xf32>
    %c0_72 = arith.constant 0 : index
    %c0_73 = arith.constant 0 : index
    %c1_74 = arith.constant 1 : index
    %c0_75 = arith.constant 0 : index
    %44 = vector.load %arg6[%c0_72, %c0_73, %c1_74, %c0_75] : memref<1x1x8x128xf32, #tpu.memory_space<vmem>>, vector<1x1x1x128xf32>
    tpu.vector_store %arg6[%c0_72, %c0_73, %c1_74, %c0_75], %43 {strides = array<i32>} : memref<1x1x8x128xf32, #tpu.memory_space<vmem>>, vector<1x1x1x128xf32>,
    return
  }
  func.func @transform_0(%arg0: i32, %arg1: i32) -> (i32, i32, i32, i32) {
    %c0_i32 = arith.constant 0 : i32
    %c0_i32_0 = arith.constant 0 : i32
    %c0_i32_1 = arith.constant 0 : i32
    return %arg0, %arg1, %c0_i32, %c0_i32_0 : i32, i32, i32, i32
  }
  func.func @transform_1(%arg0: i32, %arg1: i32) -> (i32, i32, i32, i32) {
    %c1_i32 = arith.constant 1 : i32
    %0 = arith.addi %arg1, %c1_i32 : i32
    %c4_i32 = arith.constant 4 : i32
    %1 = arith.muli %0, %c4_i32 : i32
    %c0_i32 = arith.constant 0 : i32
    %c0_i32_0 = arith.constant 0 : i32
    %c0_i32_1 = arith.constant 0 : i32
    return %arg0, %1, %c0_i32, %c0_i32_0 : i32, i32, i32, i32
  }
  func.func @transform_2(%arg0: i32, %arg1: i32) -> (i32, i32) {
    %c0_i32 = arith.constant 0 : i32
    %c0_i32_0 = arith.constant 0 : i32
    %c0_i32_1 = arith.constant 0 : i32
    return %c0_i32, %c0_i32_0 : i32, i32
  }
  func.func @transform_3(%arg0: i32, %arg1: i32) -> (i32, i32, i32, i32) {
    %c0_i32 = arith.constant 0 : i32
    %c0_i32_0 = arith.constant 0 : i32
    %c0_i32_1 = arith.constant 0 : i32
    return %arg0, %arg1, %c0_i32, %c0_i32_0 : i32, i32, i32, i32
  }
  func.func @transform_4(%arg0: i32, %arg1: i32) -> (i32, i32, i32, i32) {
    %c0_i32 = arith.constant 0 : i32
    %c0_i32_0 = arith.constant 0 : i32
    %c0_i32_1 = arith.constant 0 : i32
    return %arg0, %arg1, %c0_i32, %c0_i32_0 : i32, i32, i32, i32
  }
}

module attributes {stable_mosaic.version = 11 : i64} {
  func.func @_bn_act_kernel(%arg0: i32, %arg1: i32, %arg2: memref<1x8x16x128xf32, #tpu.memory_space<vmem>>, %arg3: memref<1x128xf32, #tpu.memory_space<vmem>>, %arg4: memref<1x128xf32, #tpu.memory_space<vmem>>, %arg5: memref<1x8x16x128xf32, #tpu.memory_space<vmem>>) attributes {dimension_semantics = [#tpu.dimension_semantics<parallel>, #tpu.dimension_semantics<parallel>], iteration_bounds = array<i64: 2, 2>, scalar_prefetch = 0 : i64, scratch_operands = 0 : i64, tpu.core_type = #tpu.core_type<tc>, window_params = [{transform_indices = @transform_0, window_bounds = array<i64: 1, 8, 16, 128>}, {pipeline_mode = #tpu.pipeline_mode<synchronous>, transform_indices = @transform_1, window_bounds = array<i64: 1, 128>}, {pipeline_mode = #tpu.pipeline_mode<synchronous>, transform_indices = @transform_2, window_bounds = array<i64: 1, 128>}, {transform_indices = @transform_3, window_bounds = array<i64: 1, 8, 16, 128>}]} {
    %c0 = arith.constant 0 : index
    %c0_0 = arith.constant 0 : index
    %c0_1 = arith.constant 0 : index
    %c0_2 = arith.constant 0 : index
    %0 = vector.load %arg2[%c0, %c0_0, %c0_1, %c0_2] : memref<1x8x16x128xf32, #tpu.memory_space<vmem>>, vector<1x8x16x128xf32>
    %c0_3 = arith.constant 0 : index
    %c0_4 = arith.constant 0 : index
    %1 = vector.load %arg3[%c0_3, %c0_4] : memref<1x128xf32, #tpu.memory_space<vmem>>, vector<1x128xf32>
    %2 = vector.shape_cast %1 : vector<1x128xf32> to vector<1x1x1x128xf32>
    %3 = vector.broadcast %2 : vector<1x1x1x128xf32> to vector<1x8x16x128xf32>
    %4 = arith.mulf %0, %3 : vector<1x8x16x128xf32>
    %c0_5 = arith.constant 0 : index
    %c0_6 = arith.constant 0 : index
    %5 = vector.load %arg4[%c0_5, %c0_6] : memref<1x128xf32, #tpu.memory_space<vmem>>, vector<1x128xf32>
    %6 = vector.shape_cast %5 : vector<1x128xf32> to vector<1x1x1x128xf32>
    %7 = vector.broadcast %6 : vector<1x1x1x128xf32> to vector<1x8x16x128xf32>
    %8 = arith.addf %4, %7 : vector<1x8x16x128xf32>
    %cst = arith.constant 5.000000e-01 : f32
    %9 = vector.broadcast %cst : f32 to vector<1x8x16x128xf32>
    %10 = arith.mulf %9, %8 : vector<1x8x16x128xf32>
    %cst_7 = arith.constant 0.707106769 : f32
    %11 = vector.broadcast %cst_7 : f32 to vector<1x8x16x128xf32>
    %12 = arith.mulf %8, %11 : vector<1x8x16x128xf32>
    %cst_8 = arith.constant 0.000000e+00 : f32
    %13 = vector.broadcast %cst_8 : f32 to vector<1x8x16x128xf32>
    %14 = arith.cmpf oge, %12, %13 : vector<1x8x16x128xf32>
    %cst_9 = arith.constant 1.000000e+00 : f32
    %cst_10 = arith.constant -1.000000e+00 : f32
    %15 = vector.broadcast %cst_9 : f32 to vector<1x8x16x128xf32>
    %16 = vector.broadcast %cst_10 : f32 to vector<1x8x16x128xf32>
    %17 = arith.select %14, %15, %16 : vector<1x8x16x128xi1>, vector<1x8x16x128xf32>
    %18 = math.absf %12 : vector<1x8x16x128xf32>
    %cst_11 = arith.constant 0.327591091 : f32
    %19 = vector.broadcast %cst_11 : f32 to vector<1x8x16x128xf32>
    %20 = arith.mulf %19, %18 : vector<1x8x16x128xf32>
    %cst_12 = arith.constant 1.000000e+00 : f32
    %21 = vector.broadcast %cst_12 : f32 to vector<1x8x16x128xf32>
    %22 = arith.addf %21, %20 : vector<1x8x16x128xf32>
    %cst_13 = arith.constant 1.000000e+00 : f32
    %23 = vector.broadcast %cst_13 : f32 to vector<1x8x16x128xf32>
    %24 = arith.divf %23, %22 : vector<1x8x16x128xf32>
    %cst_14 = arith.constant 1.06140542 : f32
    %25 = vector.broadcast %cst_14 : f32 to vector<1x8x16x128xf32>
    %26 = arith.mulf %25, %24 : vector<1x8x16x128xf32>
    %cst_15 = arith.constant -1.45315206 : f32
    %27 = vector.broadcast %cst_15 : f32 to vector<1x8x16x128xf32>
    %28 = arith.addf %26, %27 : vector<1x8x16x128xf32>
    %29 = arith.mulf %28, %24 : vector<1x8x16x128xf32>
    %cst_16 = arith.constant 1.42141378 : f32
    %30 = vector.broadcast %cst_16 : f32 to vector<1x8x16x128xf32>
    %31 = arith.addf %29, %30 : vector<1x8x16x128xf32>
    %32 = arith.mulf %31, %24 : vector<1x8x16x128xf32>
    %cst_17 = arith.constant -0.284496725 : f32
    %33 = vector.broadcast %cst_17 : f32 to vector<1x8x16x128xf32>
    %34 = arith.addf %32, %33 : vector<1x8x16x128xf32>
    %35 = arith.mulf %34, %24 : vector<1x8x16x128xf32>
    %cst_18 = arith.constant 0.254829586 : f32
    %36 = vector.broadcast %cst_18 : f32 to vector<1x8x16x128xf32>
    %37 = arith.addf %35, %36 : vector<1x8x16x128xf32>
    %38 = arith.mulf %37, %24 : vector<1x8x16x128xf32>
    %cst_19 = arith.constant 0.000000e+00 : f32
    %39 = vector.broadcast %cst_19 : f32 to vector<1x8x16x128xf32>
    %40 = arith.subf %39, %18 : vector<1x8x16x128xf32>
    %41 = arith.mulf %40, %18 : vector<1x8x16x128xf32>
    %42 = math.exp %41 : vector<1x8x16x128xf32>
    %43 = arith.mulf %38, %42 : vector<1x8x16x128xf32>
    %cst_20 = arith.constant 1.000000e+00 : f32
    %44 = vector.broadcast %cst_20 : f32 to vector<1x8x16x128xf32>
    %45 = arith.subf %44, %43 : vector<1x8x16x128xf32>
    %46 = arith.mulf %17, %45 : vector<1x8x16x128xf32>
    %cst_21 = arith.constant 1.000000e+00 : f32
    %47 = vector.broadcast %cst_21 : f32 to vector<1x8x16x128xf32>
    %48 = arith.addf %47, %46 : vector<1x8x16x128xf32>
    %49 = arith.mulf %10, %48 : vector<1x8x16x128xf32>
    %c0_22 = arith.constant 0 : index
    %c0_23 = arith.constant 0 : index
    %c0_24 = arith.constant 0 : index
    %c0_25 = arith.constant 0 : index
    %50 = vector.load %arg5[%c0_22, %c0_23, %c0_24, %c0_25] : memref<1x8x16x128xf32, #tpu.memory_space<vmem>>, vector<1x8x16x128xf32>
    tpu.vector_store %arg5[%c0_22, %c0_23, %c0_24, %c0_25], %49 {strides = array<i32>} : memref<1x8x16x128xf32, #tpu.memory_space<vmem>>, vector<1x8x16x128xf32>,
    return
  }
  func.func @transform_0(%arg0: i32, %arg1: i32) -> (i32, i32, i32, i32) {
    %c0_i32 = arith.constant 0 : i32
    %c0_i32_0 = arith.constant 0 : i32
    %c0_i32_1 = arith.constant 0 : i32
    return %arg0, %arg1, %c0_i32, %c0_i32_0 : i32, i32, i32, i32
  }
  func.func @transform_1(%arg0: i32, %arg1: i32) -> (i32, i32) {
    %c0_i32 = arith.constant 0 : i32
    %c0_i32_0 = arith.constant 0 : i32
    %c0_i32_1 = arith.constant 0 : i32
    return %c0_i32, %c0_i32_0 : i32, i32
  }
  func.func @transform_2(%arg0: i32, %arg1: i32) -> (i32, i32) {
    %c0_i32 = arith.constant 0 : i32
    %c0_i32_0 = arith.constant 0 : i32
    %c0_i32_1 = arith.constant 0 : i32
    return %c0_i32, %c0_i32_0 : i32, i32
  }
  func.func @transform_3(%arg0: i32, %arg1: i32) -> (i32, i32, i32, i32) {
    %c0_i32 = arith.constant 0 : i32
    %c0_i32_0 = arith.constant 0 : i32
    %c0_i32_1 = arith.constant 0 : i32
    return %arg0, %arg1, %c0_i32, %c0_i32_0 : i32, i32, i32, i32
  }
}

module attributes {stable_mosaic.version = 11 : i64} {
  func.func @_bn_act_kernel(%arg0: i32, %arg1: i32, %arg2: memref<1x8x16x128xf32, #tpu.memory_space<vmem>>, %arg3: memref<1x128xf32, #tpu.memory_space<vmem>>, %arg4: memref<1x128xf32, #tpu.memory_space<vmem>>, %arg5: memref<1x8x16x128xf32, #tpu.memory_space<vmem>>, %arg6: memref<1x8x16x128xf32, #tpu.memory_space<vmem>>) attributes {dimension_semantics = [#tpu.dimension_semantics<parallel>, #tpu.dimension_semantics<parallel>], iteration_bounds = array<i64: 2, 2>, scalar_prefetch = 0 : i64, scratch_operands = 0 : i64, tpu.core_type = #tpu.core_type<tc>, window_params = [{transform_indices = @transform_0, window_bounds = array<i64: 1, 8, 16, 128>}, {pipeline_mode = #tpu.pipeline_mode<synchronous>, transform_indices = @transform_1, window_bounds = array<i64: 1, 128>}, {pipeline_mode = #tpu.pipeline_mode<synchronous>, transform_indices = @transform_2, window_bounds = array<i64: 1, 128>}, {transform_indices = @transform_3, window_bounds = array<i64: 1, 8, 16, 128>}, {transform_indices = @transform_4, window_bounds = array<i64: 1, 8, 16, 128>}]} {
    %c0 = arith.constant 0 : index
    %c0_0 = arith.constant 0 : index
    %c0_1 = arith.constant 0 : index
    %c0_2 = arith.constant 0 : index
    %0 = vector.load %arg2[%c0, %c0_0, %c0_1, %c0_2] : memref<1x8x16x128xf32, #tpu.memory_space<vmem>>, vector<1x8x16x128xf32>
    %c0_3 = arith.constant 0 : index
    %c0_4 = arith.constant 0 : index
    %1 = vector.load %arg3[%c0_3, %c0_4] : memref<1x128xf32, #tpu.memory_space<vmem>>, vector<1x128xf32>
    %2 = vector.shape_cast %1 : vector<1x128xf32> to vector<1x1x1x128xf32>
    %3 = vector.broadcast %2 : vector<1x1x1x128xf32> to vector<1x8x16x128xf32>
    %4 = arith.mulf %0, %3 : vector<1x8x16x128xf32>
    %c0_5 = arith.constant 0 : index
    %c0_6 = arith.constant 0 : index
    %5 = vector.load %arg4[%c0_5, %c0_6] : memref<1x128xf32, #tpu.memory_space<vmem>>, vector<1x128xf32>
    %6 = vector.shape_cast %5 : vector<1x128xf32> to vector<1x1x1x128xf32>
    %7 = vector.broadcast %6 : vector<1x1x1x128xf32> to vector<1x8x16x128xf32>
    %8 = arith.addf %4, %7 : vector<1x8x16x128xf32>
    %cst = arith.constant 5.000000e-01 : f32
    %9 = vector.broadcast %cst : f32 to vector<1x8x16x128xf32>
    %10 = arith.mulf %9, %8 : vector<1x8x16x128xf32>
    %cst_7 = arith.constant 0.707106769 : f32
    %11 = vector.broadcast %cst_7 : f32 to vector<1x8x16x128xf32>
    %12 = arith.mulf %8, %11 : vector<1x8x16x128xf32>
    %cst_8 = arith.constant 0.000000e+00 : f32
    %13 = vector.broadcast %cst_8 : f32 to vector<1x8x16x128xf32>
    %14 = arith.cmpf oge, %12, %13 : vector<1x8x16x128xf32>
    %cst_9 = arith.constant 1.000000e+00 : f32
    %cst_10 = arith.constant -1.000000e+00 : f32
    %15 = vector.broadcast %cst_9 : f32 to vector<1x8x16x128xf32>
    %16 = vector.broadcast %cst_10 : f32 to vector<1x8x16x128xf32>
    %17 = arith.select %14, %15, %16 : vector<1x8x16x128xi1>, vector<1x8x16x128xf32>
    %18 = math.absf %12 : vector<1x8x16x128xf32>
    %cst_11 = arith.constant 0.327591091 : f32
    %19 = vector.broadcast %cst_11 : f32 to vector<1x8x16x128xf32>
    %20 = arith.mulf %19, %18 : vector<1x8x16x128xf32>
    %cst_12 = arith.constant 1.000000e+00 : f32
    %21 = vector.broadcast %cst_12 : f32 to vector<1x8x16x128xf32>
    %22 = arith.addf %21, %20 : vector<1x8x16x128xf32>
    %cst_13 = arith.constant 1.000000e+00 : f32
    %23 = vector.broadcast %cst_13 : f32 to vector<1x8x16x128xf32>
    %24 = arith.divf %23, %22 : vector<1x8x16x128xf32>
    %cst_14 = arith.constant 1.06140542 : f32
    %25 = vector.broadcast %cst_14 : f32 to vector<1x8x16x128xf32>
    %26 = arith.mulf %25, %24 : vector<1x8x16x128xf32>
    %cst_15 = arith.constant -1.45315206 : f32
    %27 = vector.broadcast %cst_15 : f32 to vector<1x8x16x128xf32>
    %28 = arith.addf %26, %27 : vector<1x8x16x128xf32>
    %29 = arith.mulf %28, %24 : vector<1x8x16x128xf32>
    %cst_16 = arith.constant 1.42141378 : f32
    %30 = vector.broadcast %cst_16 : f32 to vector<1x8x16x128xf32>
    %31 = arith.addf %29, %30 : vector<1x8x16x128xf32>
    %32 = arith.mulf %31, %24 : vector<1x8x16x128xf32>
    %cst_17 = arith.constant -0.284496725 : f32
    %33 = vector.broadcast %cst_17 : f32 to vector<1x8x16x128xf32>
    %34 = arith.addf %32, %33 : vector<1x8x16x128xf32>
    %35 = arith.mulf %34, %24 : vector<1x8x16x128xf32>
    %cst_18 = arith.constant 0.254829586 : f32
    %36 = vector.broadcast %cst_18 : f32 to vector<1x8x16x128xf32>
    %37 = arith.addf %35, %36 : vector<1x8x16x128xf32>
    %38 = arith.mulf %37, %24 : vector<1x8x16x128xf32>
    %cst_19 = arith.constant 0.000000e+00 : f32
    %39 = vector.broadcast %cst_19 : f32 to vector<1x8x16x128xf32>
    %40 = arith.subf %39, %18 : vector<1x8x16x128xf32>
    %41 = arith.mulf %40, %18 : vector<1x8x16x128xf32>
    %42 = math.exp %41 : vector<1x8x16x128xf32>
    %43 = arith.mulf %38, %42 : vector<1x8x16x128xf32>
    %cst_20 = arith.constant 1.000000e+00 : f32
    %44 = vector.broadcast %cst_20 : f32 to vector<1x8x16x128xf32>
    %45 = arith.subf %44, %43 : vector<1x8x16x128xf32>
    %46 = arith.mulf %17, %45 : vector<1x8x16x128xf32>
    %cst_21 = arith.constant 1.000000e+00 : f32
    %47 = vector.broadcast %cst_21 : f32 to vector<1x8x16x128xf32>
    %48 = arith.addf %47, %46 : vector<1x8x16x128xf32>
    %49 = arith.mulf %10, %48 : vector<1x8x16x128xf32>
    %c0_22 = arith.constant 0 : index
    %c0_23 = arith.constant 0 : index
    %c0_24 = arith.constant 0 : index
    %c0_25 = arith.constant 0 : index
    %50 = vector.load %arg5[%c0_22, %c0_23, %c0_24, %c0_25] : memref<1x8x16x128xf32, #tpu.memory_space<vmem>>, vector<1x8x16x128xf32>
    %51 = arith.addf %49, %50 : vector<1x8x16x128xf32>
    %c0_26 = arith.constant 0 : index
    %c0_27 = arith.constant 0 : index
    %c0_28 = arith.constant 0 : index
    %c0_29 = arith.constant 0 : index
    %52 = vector.load %arg6[%c0_26, %c0_27, %c0_28, %c0_29] : memref<1x8x16x128xf32, #tpu.memory_space<vmem>>, vector<1x8x16x128xf32>
    tpu.vector_store %arg6[%c0_26, %c0_27, %c0_28, %c0_29], %51 {strides = array<i32>} : memref<1x8x16x128xf32, #tpu.memory_space<vmem>>, vector<1x8x16x128xf32>,
    return
  }
  func.func @transform_0(%arg0: i32, %arg1: i32) -> (i32, i32, i32, i32) {
    %c0_i32 = arith.constant 0 : i32
    %c0_i32_0 = arith.constant 0 : i32
    %c0_i32_1 = arith.constant 0 : i32
    return %arg0, %arg1, %c0_i32, %c0_i32_0 : i32, i32, i32, i32
  }
  func.func @transform_1(%arg0: i32, %arg1: i32) -> (i32, i32) {
    %c0_i32 = arith.constant 0 : i32
    %c0_i32_0 = arith.constant 0 : i32
    %c0_i32_1 = arith.constant 0 : i32
    return %c0_i32, %c0_i32_0 : i32, i32
  }
  func.func @transform_2(%arg0: i32, %arg1: i32) -> (i32, i32) {
    %c0_i32 = arith.constant 0 : i32
    %c0_i32_0 = arith.constant 0 : i32
    %c0_i32_1 = arith.constant 0 : i32
    return %c0_i32, %c0_i32_0 : i32, i32
  }
  func.func @transform_3(%arg0: i32, %arg1: i32) -> (i32, i32, i32, i32) {
    %c0_i32 = arith.constant 0 : i32
    %c0_i32_0 = arith.constant 0 : i32
    %c0_i32_1 = arith.constant 0 : i32
    return %arg0, %arg1, %c0_i32, %c0_i32_0 : i32, i32, i32, i32
  }
  func.func @transform_4(%arg0: i32, %arg1: i32) -> (i32, i32, i32, i32) {
    %c0_i32 = arith.constant 0 : i32
    %c0_i32_0 = arith.constant 0 : i32
    %c0_i32_1 = arith.constant 0 : i32
    return %arg0, %arg1, %c0_i32, %c0_i32_0 : i32, i32, i32, i32
  }
}

</mosaic_0001>

<llo_original>
// kernel: unet_double_up.9
$region0: #{unet_double_up.9}
  #allocation0 [shape = 'u32[]', space=smem, size = 0x4, offset = 0x4, fixed_abs, tag = 'smem constant byte address 0x4 - core index']
  #allocation1 [shape = 'u32[72,128]{1,0:T(1,128)}', space=vmem, size = 0x9000, scoped, tag = 'internal scratch']
  %s0 = inlined_call_operand.vmem [shape: f32[2,16,16,128], index: 0, kind: input, shape index: {}]
  %s1 = inlined_call_operand.vmem [shape: f32[1,128], index: 1, kind: input, shape index: {}]
  %s2 = inlined_call_operand.vmem [shape: f32[1,128], index: 2, kind: input, shape index: {}]
  %s3 = inlined_call_operand.vmem [shape: f32[2,16,16,128], index: 3, kind: output, shape index: {}]
  %s4 = sld [smem:[#allocation0]]
  $region45: #{unet_double_up.9} parent=0
    _
  %s6 = ssub.s32 1, %s4
  %s7 = scalar_select 0, %s6, %s4
  loop: start=0, step=1, limit=6
  $region2: #{unet_double_up.9} parent=0 // loop_pre_header
    _
  $region3: #{unet_double_up.9} parent=0 // loop_header
    %s9 = sphi 0, %s13
    %p10 = scmp.ge.s32.totalorder %s9, 6
    %s16 = sphi 0, %s28
    %s17 = sphi 0, %s24
    %s18 = sphi 0, %s16
    %s19 = sphi 0, %s17
    %s20 = sphi 0, %s18
    %s21 = sphi 0, %s19
    %s33 = sphi 0, %s35
    %s36 = sphi 0, %s33
    %s37 = sphi 0, %s36
    %s53 = sphi 0, %s37
    %s57 = sphi 0, %s57
    %s59 = sphi 0, %s57
    %s60 = sphi 0, %s59
    %s74 = sphi 0, %s60
    %s78 = sphi 0, %s78
    %s80 = sphi 0, %s78
    %s81 = sphi 0, %s80
    %s95 = sphi 0, %s81
    %s103 = sphi 0, %s105
    %s106 = sphi 0, %s103
    %s107 = sphi 0, %s106
    %s123 = sphi 0, %s107
  $region4: #{unet_double_up.9} parent=0 // loop_header_branch
    %12 = sbr.rel (%p10) target = $region8
  $region5: #{unet_double_up.9} parent=0 // loop_body
    %s14 = ssub.s32 %s9, 1
    %s15 = ssub.s32 %s9, 2
    %s22 = sadd.s32 1, %s17
    %p23 = scmp.ge.s32.totalorder %s22, 2
    %s24 = scalar_select %p23, 0, %s22
    %s25 = sadd.s32 1, %s16
    %s26 = scalar_select %p23, %s25, %s16
    %p27 = scmp.ge.s32.totalorder %s26, 2
    %s28 = scalar_select %p27, 0, %s26
    %s29 = ssub.s32 %s16, %s28
    %s30 = ssub.s32 %s17, %s24
    %s31 = sor.u32 %s29, %s30
    %p32 = scmp.eq.s32.totalorder %s31, 0
    %s34 = sadd.s32 %s33, 1
    %s35 = scalar_select %p32, %s33, %s34
    %p38 = pneg %p32
    %p39 = scmp.eq.s32.totalorder %s9, 3
    %p40 = por %p38, %p39
    %p41 = scmp.ne.s32.totalorder %s33, %s36
    %p42 = scmp.eq.s32.totalorder %s9, 0
    %p43 = por %p41, %p42
    %p44 = scmp.ne.s32.totalorder %s33, %s36
    %p45 = scmp.eq.s32.totalorder %s14, 3
    %p46 = por %p44, %p45
    %p47 = scmp.ne.s32.totalorder %s36, %s37
    %p48 = scmp.eq.s32.totalorder %s14, 0
    %p49 = por %p47, %p48
    %p50 = scmp.ne.s32.totalorder %s36, %s37
    %p51 = scmp.eq.s32.totalorder %s15, 3
    %p52 = por %p50, %p51
    %p54 = scmp.ne.s32.totalorder %s37, %s53
    %p55 = scmp.eq.s32.totalorder %s15, 0
    %p56 = por %p54, %p55
    %s58 = sadd.s32 %s57, 1
    %p61 = scmp.eq.s32.totalorder %s9, 3
    %p62 = scmp.ne.s32.totalorder %s57, %s59
    %p63 = scmp.eq.s32.totalorder %s9, 0
    %p64 = por %p62, %p63
    %p65 = scmp.ne.s32.totalorder %s57, %s59
    %p66 = scmp.eq.s32.totalorder %s14, 3
    %p67 = por %p65, %p66
    %p68 = scmp.ne.s32.totalorder %s59, %s60
    %p69 = scmp.eq.s32.totalorder %s14, 0
    %p70 = por %p68, %p69
    %p71 = scmp.ne.s32.totalorder %s59, %s60
    %p72 = scmp.eq.s32.totalorder %s15, 3
    %p73 = por %p71, %p72
    %p75 = scmp.ne.s32.totalorder %s60, %s74
    %p76 = scmp.eq.s32.totalorder %s15, 0
    %p77 = por %p75, %p76
    %s79 = sadd.s32 %s78, 1
    %p82 = scmp.eq.s32.totalorder %s9, 3
    %p83 = scmp.ne.s32.totalorder %s78, %s80
    %p84 = scmp.eq.s32.totalorder %s9, 0
    %p85 = por %p83, %p84
    %p86 = scmp.ne.s32.totalorder %s78, %s80
    %p87 = scmp.eq.s32.totalorder %s14, 3
    %p88 = por %p86, %p87
    %p89 = scmp.ne.s32.totalorder %s80, %s81
    %p90 = scmp.eq.s32.totalorder %s14, 0
    %p91 = por %p89, %p90
    %p92 = scmp.ne.s32.totalorder %s80, %s81
    %p93 = scmp.eq.s32.totalorder %s15, 3
    %p94 = por %p92, %p93
    %p96 = scmp.ne.s32.totalorder %s81, %s95
    %p97 = scmp.eq.s32.totalorder %s15, 0
    %p98 = por %p96, %p97
    %s99 = ssub.s32 %s16, %s28
    %s100 = ssub.s32 %s17, %s24
    %s101 = sor.u32 %s99, %s100
    %p102 = scmp.eq.s32.totalorder %s101, 0
    %s104 = sadd.s32 %s103, 1
    %s105 = scalar_select %p102, %s103, %s104
    %p108 = pneg %p102
    %p109 = scmp.eq.s32.totalorder %s9, 3
    %p110 = por %p108, %p109
    %p111 = scmp.ne.s32.totalorder %s103, %s106
    %p112 = scmp.eq.s32.totalorder %s9, 0
    %p113 = por %p111, %p112
    %p114 = scmp.ne.s32.totalorder %s103, %s106
    %p115 = scmp.eq.s32.totalorder %s14, 3
    %p116 = por %p114, %p115
    %p117 = scmp.ne.s32.totalorder %s106, %s107
    %p118 = scmp.eq.s32.totalorder %s14, 0
    %p119 = por %p117, %p118
    %p120 = scmp.ne.s32.totalorder %s106, %s107
    %p121 = scmp.eq.s32.totalorder %s15, 3
    %p122 = por %p120, %p121
    %p124 = scmp.ne.s32.totalorder %s107, %s123
    %p125 = scmp.eq.s32.totalorder %s15, 0
    %p126 = por %p124, %p125
    %p127 = scmp.le.s32.totalorder 1, %s9
    %p128 = scmp.lt.s32.totalorder %s9, 5
    %p129 = pnand %p127, %p128
    %p130 = pneg %p129
    // Predicated region
    $region9: #{unet_double_up.9} parent=5 // pred_check
      _
    $region10: #{unet_double_up.9} parent=5 // pred_check_branch
      %132 = sbr.rel (%p129) target = $region12
    $region11: #{unet_double_up.9} parent=5 // pred_region
      %s133 = ssub.s32 %s9, 1
      // Predicated region
      $region13: #{unet_double_up.9} parent=11 // pred_check
        %p134 = pneg %p70
      $region14: #{unet_double_up.9} parent=11 // pred_check_branch
        %136 = sbr.rel (%p134) target = $region16
      $region15: #{unet_double_up.9} parent=11 // pred_region
        _
      $region16: #{unet_double_up.9} parent=11 // pred_fallthru
        _
      // Predicated region
      $region17: #{unet_double_up.9} parent=11 // pred_check
        %p137 = pneg %p91
      $region18: #{unet_double_up.9} parent=11 // pred_check_branch
        %139 = sbr.rel (%p137) target = $region20
      $region19: #{unet_double_up.9} parent=11 // pred_region
        _
      $region20: #{unet_double_up.9} parent=11 // pred_fallthru
        _
    $region12: #{unet_double_up.9} parent=5 // pred_fallthru
      _
    %p140 = scmp.lt.s32.totalorder %s9, 4
    // Predicated region
    $region21: #{unet_double_up.9} parent=5 // pred_check
      %p141 = pneg %p140
    $region22: #{unet_double_up.9} parent=5 // pred_check_branch
      %143 = sbr.rel (%p141) target = $region24
    $region23: #{unet_double_up.9} parent=5 // pred_region
      // Predicated region
      $region25: #{unet_double_up.9} parent=23 // pred_check
        %p144 = pneg %p43
      $region26: #{unet_double_up.9} parent=23 // pred_check_branch
        %146 = sbr.rel (%p144) target = $region28
      $region27: #{unet_double_up.9} parent=23 // pred_region
        %s147 = smul.u32 8, %s17
        %p148 = scmp.lt.s32.totalorder %s16, 1
        %s149 = scalar_select %p148, %s16, 1
        %p150 = scmp.lt.s32.totalorder %s147, 15
        %s151 = scalar_select %p150, %s147, 15
        %s152 = smul.addr %s151, 2
        %s153 = smul.addr %s149, 32
        %s154 = sadd.s32 %s152, %s153
        %s155 = smul.addr %s154, 8
        %s156 = scalar_lea.vmem %s0, %s155
        %s157 = smul.u32 8, %s17
      $region28: #{unet_double_up.9} parent=23 // pred_fallthru
        _
    $region24: #{unet_double_up.9} parent=5 // pred_fallthru
      _
    %p158 = scmp.le.s32.totalorder 1, %s9
    %p159 = scmp.lt.s32.totalorder %s9, 5
    %p160 = pnand %p158, %p159
    %p161 = pneg %p160
    // Predicated region
    $region29: #{unet_double_up.9} parent=5 // pred_check
      _
    $region30: #{unet_double_up.9} parent=5 // pred_check_branch
      %163 = sbr.rel (%p160) target = $region32
    $region31: #{unet_double_up.9} parent=5 // pred_region
      %s164 = ssub.s32 %s9, 1
      %s165 = smul.u32 8, %s19
      %p166 = scmp.lt.s32.totalorder %s18, 1
      %s167 = scalar_select %p166, %s18, 1
      %p168 = scmp.lt.s32.totalorder %s165, 15
      %s169 = scalar_select %p168, %s165, 15
      %s170 = smul.addr %s169, 2
      %s171 = smul.addr %s167, 32
      %s172 = sadd.s32 %s170, %s171
      %s173 = smul.addr %s172, 8
      %s174 = scalar_lea.vmem %s0, %s173
      %p175 = pneg %p49
      %p176 = pneg %p46
      %p177 = pneg %p70
      %p178 = pneg %p67
      %p179 = pneg %p91
      %p180 = pneg %p88
      %p181 = pneg %p119
      %p182 = pneg %p116
      %s183 = smul.u32 8, %s19
      %p184 = scmp.lt.s32.totalorder %s18, 1
      %s185 = scalar_select %p184, %s18, 1
      %p186 = scmp.lt.s32.totalorder %s183, 15
      %s187 = scalar_select %p186, %s183, 15
      %s188 = smul.addr %s187, 2
      %s189 = smul.addr %s185, 32
      %s190 = sadd.s32 %s188, %s189
      %s191 = smul.addr %s190, 8
      %s192 = scalar_lea.vmem %s3, %s191
      %s193 = smul.u32 8, %s19
      %p194 = scmp.lt.s32.totalorder %s18, 1
      %s195 = scalar_select %p194, %s18, 1
      %p196 = scmp.lt.s32.totalorder %s193, 15
      %s197 = scalar_select %p196, %s193, 15
      %s198 = smul.addr %s197, 2
      %s199 = smul.addr %s195, 32
      %s200 = sadd.s32 %s198, %s199
      %s201 = smul.addr %s200, 8
      %s202 = scalar_lea.vmem %s0, %s201
      %s203 = smul.u32 8, %s19
      %s204 = smul.u32 8, %s19
      %p205 = scmp.lt.s32.totalorder %s18, 1
      %s206 = scalar_select %p205, %s18, 1
      %p207 = scmp.lt.s32.totalorder %s204, 15
      %s208 = scalar_select %p207, %s204, 15
      %s209 = smul.addr %s208, 2
      %s210 = smul.addr %s206, 32
      %s211 = sadd.s32 %s209, %s210
      %s212 = smul.addr %s211, 8
      %s213 = scalar_lea.vmem %s3, %s212
      %s214 = smul.u32 8, %s19
      %v215 = vld [vmem:[%s202] sm:$0xff]
      %v216 = vld [vmem:[%s202 + $0x8] sm:$0xff]
      %v217 = vld [vmem:[%s202 + $0x10] sm:$0xff]
      %v218 = vld [vmem:[%s202 + $0x18] sm:$0xff]
      %v219 = vld [vmem:[%s202 + $0x20] sm:$0xff]
      %v220 = vld [vmem:[%s202 + $0x28] sm:$0xff]
      %v221 = vld [vmem:[%s202 + $0x30] sm:$0xff]
      %v222 = vld [vmem:[%s202 + $0x38] sm:$0xff]
      %v223 = vld [vmem:[%s202 + $0x40] sm:$0xff]
      %v224 = vld [vmem:[%s202 + $0x48] sm:$0xff]
      %v225 = vld [vmem:[%s202 + $0x50] sm:$0xff]
      %v226 = vld [vmem:[%s202 + $0x58] sm:$0xff]
      %v227 = vld [vmem:[%s202 + $0x60] sm:$0xff]
      %v228 = vld [vmem:[%s202 + $0x68] sm:$0xff]
      %v229 = vld [vmem:[%s202 + $0x70] sm:$0xff]
      %v230 = vld [vmem:[%s202 + $0x78] sm:$0xff]
      %v231 = vld [vmem:[%s1] sm:$0x1]
      %v233 = vperm.slane %v231, 0
      %v235 = vmul.f32 %v215, %v233
      %v236 = vmul.f32 %v216, %v233
      %v237 = vmul.f32 %v217, %v233
      %v238 = vmul.f32 %v218, %v233
      %v239 = vmul.f32 %v219, %v233
      %v240 = vmul.f32 %v220, %v233
      %v241 = vmul.f32 %v221, %v233
      %v242 = vmul.f32 %v222, %v233
      %v243 = vmul.f32 %v223, %v233
      %v244 = vmul.f32 %v224, %v233
      %v245 = vmul.f32 %v225, %v233
      %v246 = vmul.f32 %v226, %v233
      %v247 = vmul.f32 %v227, %v233
      %v248 = vmul.f32 %v228, %v233
      %v249 = vmul.f32 %v229, %v233
      %v250 = vmul.f32 %v230, %v233
      %v251 = vld [vmem:[%s2] sm:$0x1]
      %v253 = vperm.slane %v251, 0
      %v255 = vadd.f32 %v235, %v253
      %v256 = vadd.f32 %v236, %v253
      %v257 = vadd.f32 %v237, %v253
      %v258 = vadd.f32 %v238, %v253
      %v259 = vadd.f32 %v239, %v253
      %v260 = vadd.f32 %v240, %v253
      %v261 = vadd.f32 %v241, %v253
      %v262 = vadd.f32 %v242, %v253
      %v263 = vadd.f32 %v243, %v253
      %v264 = vadd.f32 %v244, %v253
      %v265 = vadd.f32 %v245, %v253
      %v266 = vadd.f32 %v246, %v253
      %v267 = vadd.f32 %v247, %v253
      %v268 = vadd.f32 %v248, %v253
      %v269 = vadd.f32 %v249, %v253
      %v270 = vadd.f32 %v250, %v253
      %v271 = vmul.f32 %v255, 0.5
      %v272 = vmul.f32 %v256, 0.5
      %v273 = vmul.f32 %v257, 0.5
      %v274 = vmul.f32 %v258, 0.5
      %v275 = vmul.f32 %v259, 0.5
      %v276 = vmul.f32 %v260, 0.5
      %v277 = vmul.f32 %v261, 0.5
      %v278 = vmul.f32 %v262, 0.5
      %v279 = vmul.f32 %v263, 0.5
      %v280 = vmul.f32 %v264, 0.5
      %v281 = vmul.f32 %v265, 0.5
      %v282 = vmul.f32 %v266, 0.5
      %v283 = vmul.f32 %v267, 0.5
      %v284 = vmul.f32 %v268, 0.5
      %v285 = vmul.f32 %v269, 0.5
      %v286 = vmul.f32 %v270, 0.5
      %v287 = vmul.f32 %v255, 0.70710677
      %v288 = vmul.f32 %v256, 0.70710677
      %v289 = vmul.f32 %v257, 0.70710677
      %v290 = vmul.f32 %v258, 0.70710677
      %v291 = vmul.f32 %v259, 0.70710677
      %v292 = vmul.f32 %v260, 0.70710677
      %v293 = vmul.f32 %v261, 0.70710677
      %v294 = vmul.f32 %v262, 0.70710677
      %v295 = vmul.f32 %v263, 0.70710677
      %v296 = vmul.f32 %v264, 0.70710677
      %v297 = vmul.f32 %v265, 0.70710677
      %v298 = vmul.f32 %v266, 0.70710677
      %v299 = vmul.f32 %v267, 0.70710677
      %v300 = vmul.f32 %v268, 0.70710677
      %v301 = vmul.f32 %v269, 0.70710677
      %v302 = vmul.f32 %v270, 0.70710677
      %vm303 = vcmp.ge.f32.partialorder %v287, 0.0
      %vm304 = vcmp.ge.f32.partialorder %v288, 0.0
      %vm305 = vcmp.ge.f32.partialorder %v289, 0.0
      %vm306 = vcmp.ge.f32.partialorder %v290, 0.0
      %vm307 = vcmp.ge.f32.partialorder %v291, 0.0
      %vm308 = vcmp.ge.f32.partialorder %v292, 0.0
      %vm309 = vcmp.ge.f32.partialorder %v293, 0.0
      %vm310 = vcmp.ge.f32.partialorder %v294, 0.0
      %vm311 = vcmp.ge.f32.partialorder %v295, 0.0
      %vm312 = vcmp.ge.f32.partialorder %v296, 0.0
      %vm313 = vcmp.ge.f32.partialorder %v297, 0.0
      %vm314 = vcmp.ge.f32.partialorder %v298, 0.0
      %vm315 = vcmp.ge.f32.partialorder %v299, 0.0
      %vm316 = vcmp.ge.f32.partialorder %v300, 0.0
      %vm317 = vcmp.ge.f32.partialorder %v301, 0.0
      %vm318 = vcmp.ge.f32.partialorder %v302, 0.0
      %v319 = vsel %vm303, 1.0, -1.0
      %v320 = vsel %vm304, 1.0, -1.0
      %v321 = vsel %vm305, 1.0, -1.0
      %v322 = vsel %vm306, 1.0, -1.0
      %v323 = vsel %vm307, 1.0, -1.0
      %v324 = vsel %vm308, 1.0, -1.0
      %v325 = vsel %vm309, 1.0, -1.0
      %v326 = vsel %vm310, 1.0, -1.0
      %v327 = vsel %vm311, 1.0, -1.0
      %v328 = vsel %vm312, 1.0, -1.0
      %v329 = vsel %vm313, 1.0, -1.0
      %v330 = vsel %vm314, 1.0, -1.0
      %v331 = vsel %vm315, 1.0, -1.0
      %v332 = vsel %vm316, 1.0, -1.0
      %v333 = vsel %vm317, 1.0, -1.0
      %v334 = vsel %vm318, 1.0, -1.0
      %v335 = vand.u32 2147483647, %v287
      %v336 = vand.u32 2147483647, %v288
      %v337 = vand.u32 2147483647, %v289
      %v338 = vand.u32 2147483647, %v290
      %v339 = vand.u32 2147483647, %v291
      %v340 = vand.u32 2147483647, %v292
      %v341 = vand.u32 2147483647, %v293
      %v342 = vand.u32 2147483647, %v294
      %v343 = vand.u32 2147483647, %v295
      %v344 = vand.u32 2147483647, %v296
      %v345 = vand.u32 2147483647, %v297
      %v346 = vand.u32 2147483647, %v298
      %v347 = vand.u32 2147483647, %v299
      %v348 = vand.u32 2147483647, %v300
      %v349 = vand.u32 2147483647, %v301
      %v350 = vand.u32 2147483647, %v302
      %v351 = vmul.f32 %v335, 0.3275911
      %v352 = vmul.f32 %v336, 0.3275911
      %v353 = vmul.f32 %v337, 0.3275911
      %v354 = vmul.f32 %v338, 0.3275911
      %v355 = vmul.f32 %v339, 0.3275911
      %v356 = vmul.f32 %v340, 0.3275911
      %v357 = vmul.f32 %v341, 0.3275911
      %v358 = vmul.f32 %v342, 0.3275911
      %v359 = vmul.f32 %v343, 0.3275911
      %v360 = vmul.f32 %v344, 0.3275911
      %v361 = vmul.f32 %v345, 0.3275911
      %v362 = vmul.f32 %v346, 0.3275911
      %v363 = vmul.f32 %v347, 0.3275911
      %v364 = vmul.f32 %v348, 0.3275911
      %v365 = vmul.f32 %v349, 0.3275911
      %v366 = vmul.f32 %v350, 0.3275911
      %v367 = vadd.f32 %v351, 1.0
      %v368 = vadd.f32 %v352, 1.0
      %v369 = vadd.f32 %v353, 1.0
      %v370 = vadd.f32 %v354, 1.0
      %v371 = vadd.f32 %v355, 1.0
      %v372 = vadd.f32 %v356, 1.0
      %v373 = vadd.f32 %v357, 1.0
      %v374 = vadd.f32 %v358, 1.0
      %v375 = vadd.f32 %v359, 1.0
      %v376 = vadd.f32 %v360, 1.0
      %v377 = vadd.f32 %v361, 1.0
      %v378 = vadd.f32 %v362, 1.0
      %v379 = vadd.f32 %v363, 1.0
      %v380 = vadd.f32 %v364, 1.0
      %v381 = vadd.f32 %v365, 1.0
      %v382 = vadd.f32 %v366, 1.0
      %v383 = vrcp.pop %v367
      %v384 = vmul.f32 %v367, %v383
      %v385 = vsub.f32 1.0, %v384
      %v386 = vmul.f32 %v383, %v385
      %v387 = vadd.f32 %v383, %v386
      %vm388 = vweird.f32 %v367
      %vm389 = vweird.f32 %v383
      %vm390 = vmor %vm388, %vm389
      %v391 = vsel %vm390, %v383, %v387
      %v392 = vand.u32 2147483647, %v367
      %vm393 = vcmp.eq.f32.partialorder %v392, 8.507059e+37
      %v394 = vand.u32 %v367, 2147483648
      %v395 = vor.u32 1.1754944e-38, %v394
      %v396 = vsel %vm393, %v395, %v391
      %v397 = vmul.f32 1.0, %v396
      %v398 = vrcp.pop %v368
      %v399 = vmul.f32 %v368, %v398
      %v400 = vsub.f32 1.0, %v399
      %v401 = vmul.f32 %v398, %v400
      %v402 = vadd.f32 %v398, %v401
      %vm403 = vweird.f32 %v368
      %vm404 = vweird.f32 %v398
      %vm405 = vmor %vm403, %vm404
      %v406 = vsel %vm405, %v398, %v402
      %v407 = vand.u32 2147483647, %v368
      %vm408 = vcmp.eq.f32.partialorder %v407, 8.507059e+37
      %v409 = vand.u32 %v368, 2147483648
      %v410 = vor.u32 1.1754944e-38, %v409
      %v411 = vsel %vm408, %v410, %v406
      %v412 = vmul.f32 1.0, %v411
      %v413 = vrcp.pop %v369
      %v414 = vmul.f32 %v369, %v413
      %v415 = vsub.f32 1.0, %v414
      %v416 = vmul.f32 %v413, %v415
      %v417 = vadd.f32 %v413, %v416
      %vm418 = vweird.f32 %v369
      %vm419 = vweird.f32 %v413
      %vm420 = vmor %vm418, %vm419
      %v421 = vsel %vm420, %v413, %v417
      %v422 = vand.u32 2147483647, %v369
      %vm423 = vcmp.eq.f32.partialorder %v422, 8.507059e+37
      %v424 = vand.u32 %v369, 2147483648
      %v425 = vor.u32 1.1754944e-38, %v424
      %v426 = vsel %vm423, %v425, %v421
      %v427 = vmul.f32 1.0, %v426
      %v428 = vrcp.pop %v370
      %v429 = vmul.f32 %v370, %v428
      %v430 = vsub.f32 1.0, %v429
      %v431 = vmul.f32 %v428, %v430
      %v432 = vadd.f32 %v428, %v431
      %vm433 = vweird.f32 %v370
      %vm434 = vweird.f32 %v428
      %vm435 = vmor %vm433, %vm434
      %v436 = vsel %vm435, %v428, %v432
      %v437 = vand.u32 2147483647, %v370
      %vm438 = vcmp.eq.f32.partialorder %v437, 8.507059e+37
      %v439 = vand.u32 %v370, 2147483648
      %v440 = vor.u32 1.1754944e-38, %v439
      %v441 = vsel %vm438, %v440, %v436
      %v442 = vmul.f32 1.0, %v441
      %v443 = vrcp.pop %v371
      %v444 = vmul.f32 %v371, %v443
      %v445 = vsub.f32 1.0, %v444
      %v446 = vmul.f32 %v443, %v445
      %v447 = vadd.f32 %v443, %v446
      %vm448 = vweird.f32 %v371
      %vm449 = vweird.f32 %v443
      %vm450 = vmor %vm448, %vm449
      %v451 = vsel %vm450, %v443, %v447
      %v452 = vand.u32 2147483647, %v371
      %vm453 = vcmp.eq.f32.partialorder %v452, 8.507059e+37
      %v454 = vand.u32 %v371, 2147483648
      %v455 = vor.u32 1.1754944e-38, %v454
      %v456 = vsel %vm453, %v455, %v451
      %v457 = vmul.f32 1.0, %v456
      %v458 = vrcp.pop %v372
      %v459 = vmul.f32 %v372, %v458
      %v460 = vsub.f32 1.0, %v459
      %v461 = vmul.f32 %v458, %v460
      %v462 = vadd.f32 %v458, %v461
      %vm463 = vweird.f32 %v372
      %vm464 = vweird.f32 %v458
      %vm465 = vmor %vm463, %vm464
      %v466 = vsel %vm465, %v458, %v462
      %v467 = vand.u32 2147483647, %v372
      %vm468 = vcmp.eq.f32.partialorder %v467, 8.507059e+37
      %v469 = vand.u32 %v372, 2147483648
      %v470 = vor.u32 1.1754944e-38, %v469
      %v471 = vsel %vm468, %v470, %v466
      %v472 = vmul.f32 1.0, %v471
      %v473 = vrcp.pop %v373
      %v474 = vmul.f32 %v373, %v473
      %v475 = vsub.f32 1.0, %v474
      %v476 = vmul.f32 %v473, %v475
      %v477 = vadd.f32 %v473, %v476
      %vm478 = vweird.f32 %v373
      %vm479 = vweird.f32 %v473
      %vm480 = vmor %vm478, %vm479
      %v481 = vsel %vm480, %v473, %v477
      %v482 = vand.u32 2147483647, %v373
      %vm483 = vcmp.eq.f32.partialorder %v482, 8.507059e+37
      %v484 = vand.u32 %v373, 2147483648
      %v485 = vor.u32 1.1754944e-38, %v484
      %v486 = vsel %vm483, %v485, %v481
      %v487 = vmul.f32 1.0, %v486
      %v488 = vrcp.pop %v374
      %v489 = vmul.f32 %v374, %v488
      %v490 = vsub.f32 1.0, %v489
      %v491 = vmul.f32 %v488, %v490
      %v492 = vadd.f32 %v488, %v491
      %vm493 = vweird.f32 %v374
      %vm494 = vweird.f32 %v488
      %vm495 = vmor %vm493, %vm494
      %v496 = vsel %vm495, %v488, %v492
      %v497 = vand.u32 2147483647, %v374
      %vm498 = vcmp.eq.f32.partialorder %v497, 8.507059e+37
      %v499 = vand.u32 %v374, 2147483648
      %v500 = vor.u32 1.1754944e-38, %v499
      %v501 = vsel %vm498, %v500, %v496
      %v502 = vmul.f32 1.0, %v501
      %v503 = vrcp.pop %v375
      %v504 = vmul.f32 %v375, %v503
      %v505 = vsub.f32 1.0, %v504
      %v506 = vmul.f32 %v503, %v505
      %v507 = vadd.f32 %v503, %v506
      %vm508 = vweird.f32 %v375
      %vm509 = vweird.f32 %v503
      %vm510 = vmor %vm508, %vm509
      %v511 = vsel %vm510, %v503, %v507
      %v512 = vand.u32 2147483647, %v375
      %vm513 = vcmp.eq.f32.partialorder %v512, 8.507059e+37
      %v514 = vand.u32 %v375, 2147483648
      %v515 = vor.u32 1.1754944e-38, %v514
      %v516 = vsel %vm513, %v515, %v511
      %v517 = vmul.f32 1.0, %v516
      %v518 = vrcp.pop %v376
      %v519 = vmul.f32 %v376, %v518
      %v520 = vsub.f32 1.0, %v519
      %v521 = vmul.f32 %v518, %v520
      %v522 = vadd.f32 %v518, %v521
      %vm523 = vweird.f32 %v376
      %vm524 = vweird.f32 %v518
      %vm525 = vmor %vm523, %vm524
      %v526 = vsel %vm525, %v518, %v522
      %v527 = vand.u32 2147483647, %v376
      %vm528 = vcmp.eq.f32.partialorder %v527, 8.507059e+37
      %v529 = vand.u32 %v376, 2147483648
      %v530 = vor.u32 1.1754944e-38, %v529
      %v531 = vsel %vm528, %v530, %v526
      %v532 = vmul.f32 1.0, %v531
      %v533 = vrcp.pop %v377
      %v534 = vmul.f32 %v377, %v533
      %v535 = vsub.f32 1.0, %v534
      %v536 = vmul.f32 %v533, %v535
      %v537 = vadd.f32 %v533, %v536
      %vm538 = vweird.f32 %v377
      %vm539 = vweird.f32 %v533
      %vm540 = vmor %vm538, %vm539
      %v541 = vsel %vm540, %v533, %v537
      %v542 = vand.u32 2147483647, %v377
      %vm543 = vcmp.eq.f32.partialorder %v542, 8.507059e+37
      %v544 = vand.u32 %v377, 2147483648
      %v545 = vor.u32 1.1754944e-38, %v544
      %v546 = vsel %vm543, %v545, %v541
      %v547 = vmul.f32 1.0, %v546
      %v548 = vrcp.pop %v378
      %v549 = vmul.f32 %v378, %v548
      %v550 = vsub.f32 1.0, %v549
      %v551 = vmul.f32 %v548, %v550
      %v552 = vadd.f32 %v548, %v551
      %vm553 = vweird.f32 %v378
      %vm554 = vweird.f32 %v548
      %vm555 = vmor %vm553, %vm554
      %v556 = vsel %vm555, %v548, %v552
      %v557 = vand.u32 2147483647, %v378
      %vm558 = vcmp.eq.f32.partialorder %v557, 8.507059e+37
      %v559 = vand.u32 %v378, 2147483648
      %v560 = vor.u32 1.1754944e-38, %v559
      %v561 = vsel %vm558, %v560, %v556
      %v562 = vmul.f32 1.0, %v561
      %v563 = vrcp.pop %v379
      %v564 = vmul.f32 %v379, %v563
      %v565 = vsub.f32 1.0, %v564
      %v566 = vmul.f32 %v563, %v565
      %v567 = vadd.f32 %v563, %v566
      %vm568 = vweird.f32 %v379
      %vm569 = vweird.f32 %v563
      %vm570 = vmor %vm568, %vm569
      %v571 = vsel %vm570, %v563, %v567
      %v572 = vand.u32 2147483647, %v379
      %vm573 = vcmp.eq.f32.partialorder %v572, 8.507059e+37
      %v574 = vand.u32 %v379, 2147483648
      %v575 = vor.u32 1.1754944e-38, %v574
      %v576 = vsel %vm573, %v575, %v571
      %v577 = vmul.f32 1.0, %v576
      %v578 = vrcp.pop %v380
      %v579 = vmul.f32 %v380, %v578
      %v580 = vsub.f32 1.0, %v579
      %v581 = vmul.f32 %v578, %v580
      %v582 = vadd.f32 %v578, %v581
      %vm583 = vweird.f32 %v380
      %vm584 = vweird.f32 %v578
      %vm585 = vmor %vm583, %vm584
      %v586 = vsel %vm585, %v578, %v582
      %v587 = vand.u32 2147483647, %v380
      %vm588 = vcmp.eq.f32.partialorder %v587, 8.507059e+37
      %v589 = vand.u32 %v380, 2147483648
      %v590 = vor.u32 1.1754944e-38, %v589
      %v591 = vsel %vm588, %v590, %v586
      %v592 = vmul.f32 1.0, %v591
      %v593 = vrcp.pop %v381
      %v594 = vmul.f32 %v381, %v593
      %v595 = vsub.f32 1.0, %v594
      %v596 = vmul.f32 %v593, %v595
      %v597 = vadd.f32 %v593, %v596
      %vm598 = vweird.f32 %v381
      %vm599 = vweird.f32 %v593
      %vm600 = vmor %vm598, %vm599
      %v601 = vsel %vm600, %v593, %v597
      %v602 = vand.u32 2147483647, %v381
      %vm603 = vcmp.eq.f32.partialorder %v602, 8.507059e+37
      %v604 = vand.u32 %v381, 2147483648
      %v605 = vor.u32 1.1754944e-38, %v604
      %v606 = vsel %vm603, %v605, %v601
      %v607 = vmul.f32 1.0, %v606
      %v608 = vrcp.pop %v382
      %v609 = vmul.f32 %v382, %v608
      %v610 = vsub.f32 1.0, %v609
      %v611 = vmul.f32 %v608, %v610
      %v612 = vadd.f32 %v608, %v611
      %vm613 = vweird.f32 %v382
      %vm614 = vweird.f32 %v608
      %vm615 = vmor %vm613, %vm614
      %v616 = vsel %vm615, %v608, %v612
      %v617 = vand.u32 2147483647, %v382
      %vm618 = vcmp.eq.f32.partialorder %v617, 8.507059e+37
      %v619 = vand.u32 %v382, 2147483648
      %v620 = vor.u32 1.1754944e-38, %v619
      %v621 = vsel %vm618, %v620, %v616
      %v622 = vmul.f32 1.0, %v621
      %v623 = vmul.f32 %v397, 1.0614054
      %v624 = vmul.f32 %v412, 1.0614054
      %v625 = vmul.f32 %v427, 1.0614054
      %v626 = vmul.f32 %v442, 1.0614054
      %v627 = vmul.f32 %v457, 1.0614054
      %v628 = vmul.f32 %v472, 1.0614054
      %v629 = vmul.f32 %v487, 1.0614054
      %v630 = vmul.f32 %v502, 1.0614054
      %v631 = vmul.f32 %v517, 1.0614054
      %v632 = vmul.f32 %v532, 1.0614054
      %v633 = vmul.f32 %v547, 1.0614054
      %v634 = vmul.f32 %v562, 1.0614054
      %v635 = vmul.f32 %v577, 1.0614054
      %v636 = vmul.f32 %v592, 1.0614054
      %v637 = vmul.f32 %v607, 1.0614054
      %v638 = vmul.f32 %v622, 1.0614054
      %v639 = vadd.f32 %v623, -1.4531521
      %v640 = vadd.f32 %v624, -1.4531521
      %v641 = vadd.f32 %v625, -1.4531521
      %v642 = vadd.f32 %v626, -1.4531521
      %v643 = vadd.f32 %v627, -1.4531521
      %v644 = vadd.f32 %v628, -1.4531521
      %v645 = vadd.f32 %v629, -1.4531521
      %v646 = vadd.f32 %v630, -1.4531521
      %v647 = vadd.f32 %v631, -1.4531521
      %v648 = vadd.f32 %v632, -1.4531521
      %v649 = vadd.f32 %v633, -1.4531521
      %v650 = vadd.f32 %v634, -1.4531521
      %v651 = vadd.f32 %v635, -1.4531521
      %v652 = vadd.f32 %v636, -1.4531521
      %v653 = vadd.f32 %v637, -1.4531521
      %v654 = vadd.f32 %v638, -1.4531521
      %v655 = vmul.f32 %v639, %v397
      %v656 = vmul.f32 %v640, %v412
      %v657 = vmul.f32 %v641, %v427
      %v658 = vmul.f32 %v642, %v442
      %v659 = vmul.f32 %v643, %v457
      %v660 = vmul.f32 %v644, %v472
      %v661 = vmul.f32 %v645, %v487
      %v662 = vmul.f32 %v646, %v502
      %v663 = vmul.f32 %v647, %v517
      %v664 = vmul.f32 %v648, %v532
      %v665 = vmul.f32 %v649, %v547
      %v666 = vmul.f32 %v650, %v562
      %v667 = vmul.f32 %v651, %v577
      %v668 = vmul.f32 %v652, %v592
      %v669 = vmul.f32 %v653, %v607
      %v670 = vmul.f32 %v654, %v622
      %v671 = vadd.f32 %v655, 1.4214138
      %v672 = vadd.f32 %v656, 1.4214138
      %v673 = vadd.f32 %v657, 1.4214138
      %v674 = vadd.f32 %v658, 1.4214138
      %v675 = vadd.f32 %v659, 1.4214138
      %v676 = vadd.f32 %v660, 1.4214138
      %v677 = vadd.f32 %v661, 1.4214138
      %v678 = vadd.f32 %v662, 1.4214138
      %v679 = vadd.f32 %v663, 1.4214138
      %v680 = vadd.f32 %v664, 1.4214138
      %v681 = vadd.f32 %v665, 1.4214138
      %v682 = vadd.f32 %v666, 1.4214138
      %v683 = vadd.f32 %v667, 1.4214138
      %v684 = vadd.f32 %v668, 1.4214138
      %v685 = vadd.f32 %v669, 1.4214138
      %v686 = vadd.f32 %v670, 1.4214138
      %v687 = vmul.f32 %v671, %v397
      %v688 = vmul.f32 %v672, %v412
      %v689 = vmul.f32 %v673, %v427
      %v690 = vmul.f32 %v674, %v442
      %v691 = vmul.f32 %v675, %v457
      %v692 = vmul.f32 %v676, %v472
      %v693 = vmul.f32 %v677, %v487
      %v694 = vmul.f32 %v678, %v502
      %v695 = vmul.f32 %v679, %v517
      %v696 = vmul.f32 %v680, %v532
      %v697 = vmul.f32 %v681, %v547
      %v698 = vmul.f32 %v682, %v562
      %v699 = vmul.f32 %v683, %v577
      %v700 = vmul.f32 %v684, %v592
      %v701 = vmul.f32 %v685, %v607
      %v702 = vmul.f32 %v686, %v622
      %v703 = vadd.f32 %v687, -0.28449672
      %v704 = vadd.f32 %v688, -0.28449672
      %v705 = vadd.f32 %v689, -0.28449672
      %v706 = vadd.f32 %v690, -0.28449672
      %v707 = vadd.f32 %v691, -0.28449672
      %v708 = vadd.f32 %v692, -0.28449672
      %v709 = vadd.f32 %v693, -0.28449672
      %v710 = vadd.f32 %v694, -0.28449672
      %v711 = vadd.f32 %v695, -0.28449672
      %v712 = vadd.f32 %v696, -0.28449672
      %v713 = vadd.f32 %v697, -0.28449672
      %v714 = vadd.f32 %v698, -0.28449672
      %v715 = vadd.f32 %v699, -0.28449672
      %v716 = vadd.f32 %v700, -0.28449672
      %v717 = vadd.f32 %v701, -0.28449672
      %v718 = vadd.f32 %v702, -0.28449672
      %v719 = vmul.f32 %v703, %v397
      %v720 = vmul.f32 %v704, %v412
      %v721 = vmul.f32 %v705, %v427
      %v722 = vmul.f32 %v706, %v442
      %v723 = vmul.f32 %v707, %v457
      %v724 = vmul.f32 %v708, %v472
      %v725 = vmul.f32 %v709, %v487
      %v726 = vmul.f32 %v710, %v502
      %v727 = vmul.f32 %v711, %v517
      %v728 = vmul.f32 %v712, %v532
      %v729 = vmul.f32 %v713, %v547
      %v730 = vmul.f32 %v714, %v562
      %v731 = vmul.f32 %v715, %v577
      %v732 = vmul.f32 %v716, %v592
      %v733 = vmul.f32 %v717, %v607
      %v734 = vmul.f32 %v718, %v622
      %v735 = vadd.f32 %v719, 0.2548296
      %v736 = vadd.f32 %v720, 0.2548296
      %v737 = vadd.f32 %v721, 0.2548296
      %v738 = vadd.f32 %v722, 0.2548296
      %v739 = vadd.f32 %v723, 0.2548296
      %v740 = vadd.f32 %v724, 0.2548296
      %v741 = vadd.f32 %v725, 0.2548296
      %v742 = vadd.f32 %v726, 0.2548296
      %v743 = vadd.f32 %v727, 0.2548296
      %v744 = vadd.f32 %v728, 0.2548296
      %v745 = vadd.f32 %v729, 0.2548296
      %v746 = vadd.f32 %v730, 0.2548296
      %v747 = vadd.f32 %v731, 0.2548296
      %v748 = vadd.f32 %v732, 0.2548296
      %v749 = vadd.f32 %v733, 0.2548296
      %v750 = vadd.f32 %v734, 0.2548296
      %v751 = vmul.f32 %v735, %v397
      %v752 = vmul.f32 %v736, %v412
      %v753 = vmul.f32 %v737, %v427
      %v754 = vmul.f32 %v738, %v442
      %v755 = vmul.f32 %v739, %v457
      %v756 = vmul.f32 %v740, %v472
      %v757 = vmul.f32 %v741, %v487
      %v758 = vmul.f32 %v742, %v502
      %v759 = vmul.f32 %v743, %v517
      %v760 = vmul.f32 %v744, %v532
      %v761 = vmul.f32 %v745, %v547
      %v762 = vmul.f32 %v746, %v562
      %v763 = vmul.f32 %v747, %v577
      %v764 = vmul.f32 %v748, %v592
      %v765 = vmul.f32 %v749, %v607
      %v766 = vmul.f32 %v750, %v622
      %v767 = vsub.f32 0.0, %v335
      %v768 = vsub.f32 0.0, %v336
      %v769 = vsub.f32 0.0, %v337
      %v770 = vsub.f32 0.0, %v338
      %v771 = vsub.f32 0.0, %v339
      %v772 = vsub.f32 0.0, %v340
      %v773 = vsub.f32 0.0, %v341
      %v774 = vsub.f32 0.0, %v342
      %v775 = vsub.f32 0.0, %v343
      %v776 = vsub.f32 0.0, %v344
      %v777 = vsub.f32 0.0, %v345
      %v778 = vsub.f32 0.0, %v346
      %v779 = vsub.f32 0.0, %v347
      %v780 = vsub.f32 0.0, %v348
      %v781 = vsub.f32 0.0, %v349
      %v782 = vsub.f32 0.0, %v350
      %v783 = vmul.f32 %v767, %v335
      %v784 = vmul.f32 %v768, %v336
      %v785 = vmul.f32 %v769, %v337
      %v786 = vmul.f32 %v770, %v338
      %v787 = vmul.f32 %v771, %v339
      %v788 = vmul.f32 %v772, %v340
      %v789 = vmul.f32 %v773, %v341
      %v790 = vmul.f32 %v774, %v342
      %v791 = vmul.f32 %v775, %v343
      %v792 = vmul.f32 %v776, %v344
      %v793 = vmul.f32 %v777, %v345
      %v794 = vmul.f32 %v778, %v346
      %v795 = vmul.f32 %v779, %v347
      %v796 = vmul.f32 %v780, %v348
      %v797 = vmul.f32 %v781, %v349
      %v798 = vmul.f32 %v782, %v350
      %v799 = vmul.f32 %v783, 1.442695
      %v800 = vpow.pop %v799
      %v801 = vmul.f32 %v784, 1.442695
      %v802 = vpow.pop %v801
      %v803 = vmul.f32 %v785, 1.442695
      %v804 = vpow.pop %v803
      %v805 = vmul.f32 %v786, 1.442695
      %v806 = vpow.pop %v805
      %v807 = vmul.f32 %v787, 1.442695
      %v808 = vpow.pop %v807
      %v809 = vmul.f32 %v788, 1.442695
      %v810 = vpow.pop %v809
      %v811 = vmul.f32 %v789, 1.442695
      %v812 = vpow.pop %v811
      %v813 = vmul.f32 %v790, 1.442695
      %v814 = vpow.pop %v813
      %v815 = vmul.f32 %v791, 1.442695
      %v816 = vpow.pop %v815
      %v817 = vmul.f32 %v792, 1.442695
      %v818 = vpow.pop %v817
      %v819 = vmul.f32 %v793, 1.442695
      %v820 = vpow.pop %v819
      %v821 = vmul.f32 %v794, 1.442695
      %v822 = vpow.pop %v821
      %v823 = vmul.f32 %v795, 1.442695
      %v824 = vpow.pop %v823
      %v825 = vmul.f32 %v796, 1.442695
      %v826 = vpow.pop %v825
      %v827 = vmul.f32 %v797, 1.442695
      %v828 = vpow.pop %v827
      %v829 = vmul.f32 %v798, 1.442695
      %v830 = vpow.pop %v829
      %v831 = vmul.f32 %v751, %v800
      %v832 = vmul.f32 %v752, %v802
      %v833 = vmul.f32 %v753, %v804
      %v834 = vmul.f32 %v754, %v806
      %v835 = vmul.f32 %v755, %v808
      %v836 = vmul.f32 %v756, %v810
      %v837 = vmul.f32 %v757, %v812
      %v838 = vmul.f32 %v758, %v814
      %v839 = vmul.f32 %v759, %v816
      %v840 = vmul.f32 %v760, %v818
      %v841 = vmul.f32 %v761, %v820
      %v842 = vmul.f32 %v762, %v822
      %v843 = vmul.f32 %v763, %v824
      %v844 = vmul.f32 %v764, %v826
      %v845 = vmul.f32 %v765, %v828
      %v846 = vmul.f32 %v766, %v830
      %v847 = vsub.f32 1.0, %v831
      %v848 = vsub.f32 1.0, %v832
      %v849 = vsub.f32 1.0, %v833
      %v850 = vsub.f32 1.0, %v834
      %v851 = vsub.f32 1.0, %v835
      %v852 = vsub.f32 1.0, %v836
      %v853 = vsub.f32 1.0, %v837
      %v854 = vsub.f32 1.0, %v838
      %v855 = vsub.f32 1.0, %v839
      %v856 = vsub.f32 1.0, %v840
      %v857 = vsub.f32 1.0, %v841
      %v858 = vsub.f32 1.0, %v842
      %v859 = vsub.f32 1.0, %v843
      %v860 = vsub.f32 1.0, %v844
      %v861 = vsub.f32 1.0, %v845
      %v862 = vsub.f32 1.0, %v846
      %v863 = vmul.f32 %v319, %v847
      %v864 = vmul.f32 %v320, %v848
      %v865 = vmul.f32 %v321, %v849
      %v866 = vmul.f32 %v322, %v850
      %v867 = vmul.f32 %v323, %v851
      %v868 = vmul.f32 %v324, %v852
      %v869 = vmul.f32 %v325, %v853
      %v870 = vmul.f32 %v326, %v854
      %v871 = vmul.f32 %v327, %v855
      %v872 = vmul.f32 %v328, %v856
      %v873 = vmul.f32 %v329, %v857
      %v874 = vmul.f32 %v330, %v858
      %v875 = vmul.f32 %v331, %v859
      %v876 = vmul.f32 %v332, %v860
      %v877 = vmul.f32 %v333, %v861
      %v878 = vmul.f32 %v334, %v862
      %v879 = vadd.f32 %v863, 1.0
      %v880 = vadd.f32 %v864, 1.0
      %v881 = vadd.f32 %v865, 1.0
      %v882 = vadd.f32 %v866, 1.0
      %v883 = vadd.f32 %v867, 1.0
      %v884 = vadd.f32 %v868, 1.0
      %v885 = vadd.f32 %v869, 1.0
      %v886 = vadd.f32 %v870, 1.0
      %v887 = vadd.f32 %v871, 1.0
      %v888 = vadd.f32 %v872, 1.0
      %v889 = vadd.f32 %v873, 1.0
      %v890 = vadd.f32 %v874, 1.0
      %v891 = vadd.f32 %v875, 1.0
      %v892 = vadd.f32 %v876, 1.0
      %v893 = vadd.f32 %v877, 1.0
      %v894 = vadd.f32 %v878, 1.0
      %v895 = vmul.f32 %v271, %v879
      %v896 = vmul.f32 %v272, %v880
      %v897 = vmul.f32 %v273, %v881
      %v898 = vmul.f32 %v274, %v882
      %v899 = vmul.f32 %v275, %v883
      %v900 = vmul.f32 %v276, %v884
      %v901 = vmul.f32 %v277, %v885
      %v902 = vmul.f32 %v278, %v886
      %v903 = vmul.f32 %v279, %v887
      %v904 = vmul.f32 %v280, %v888
      %v905 = vmul.f32 %v281, %v889
      %v906 = vmul.f32 %v282, %v890
      %v907 = vmul.f32 %v283, %v891
      %v908 = vmul.f32 %v284, %v892
      %v909 = vmul.f32 %v285, %v893
      %v910 = vmul.f32 %v286, %v894
      %911 = vst [vmem:[%s213] sm:$0xff] %v895
      %912 = vst [vmem:[%s213 + $0x8] sm:$0xff] %v896
      %913 = vst [vmem:[%s213 + $0x10] sm:$0xff] %v897
      %914 = vst [vmem:[%s213 + $0x18] sm:$0xff] %v898
      %915 = vst [vmem:[%s213 + $0x20] sm:$0xff] %v899
      %916 = vst [vmem:[%s213 + $0x28] sm:$0xff] %v900
      %917 = vst [vmem:[%s213 + $0x30] sm:$0xff] %v901
      %918 = vst [vmem:[%s213 + $0x38] sm:$0xff] %v902
      %919 = vst [vmem:[%s213 + $0x40] sm:$0xff] %v903
      %920 = vst [vmem:[%s213 + $0x48] sm:$0xff] %v904
      %921 = vst [vmem:[%s213 + $0x50] sm:$0xff] %v905
      %922 = vst [vmem:[%s213 + $0x58] sm:$0xff] %v906
      %923 = vst [vmem:[%s213 + $0x60] sm:$0xff] %v907
      %924 = vst [vmem:[%s213 + $0x68] sm:$0xff] %v908
      %925 = vst [vmem:[%s213 + $0x70] sm:$0xff] %v909
      %926 = vst [vmem:[%s213 + $0x78] sm:$0xff] %v910
      %s927 = smul.u32 8, %s19
      %p928 = scmp.lt.s32.totalorder %s18, 1
      %s929 = scalar_select %p928, %s18, 1
      %p930 = scmp.lt.s32.totalorder %s927, 15
      %s931 = scalar_select %p930, %s927, 15
      %s932 = smul.addr %s931, 2
      %s933 = smul.addr %s929, 32
      %s934 = sadd.s32 %s932, %s933
      %s935 = smul.addr %s934, 8
      %s936 = scalar_lea.vmem %s3, %s935
      // Predicated region
      $region33: #{unet_double_up.9} parent=31 // pred_check
        %p937 = pneg %p116
      $region34: #{unet_double_up.9} parent=31 // pred_check_branch
        %939 = sbr.rel (%p937) target = $region36
      $region35: #{unet_double_up.9} parent=31 // pred_region
        %s940 = smul.u32 8, %s19
      $region36: #{unet_double_up.9} parent=31 // pred_fallthru
        _
    $region32: #{unet_double_up.9} parent=5 // pred_fallthru
      _
    %p941 = scmp.le.s32.totalorder 2, %s9
    // Predicated region
    $region37: #{unet_double_up.9} parent=5 // pred_check
      %p942 = pneg %p941
    $region38: #{unet_double_up.9} parent=5 // pred_check_branch
      %944 = sbr.rel (%p942) target = $region40
    $region39: #{unet_double_up.9} parent=5 // pred_region
      %s945 = ssub.s32 %s9, 2
      // Predicated region
      $region41: #{unet_double_up.9} parent=39 // pred_check
        %p946 = pneg %p122
      $region42: #{unet_double_up.9} parent=39 // pred_check_branch
        %948 = sbr.rel (%p946) target = $region44
      $region43: #{unet_double_up.9} parent=39 // pred_region
        %s949 = smul.u32 8, %s21
        %p950 = scmp.lt.s32.totalorder %s20, 1
        %s951 = scalar_select %p950, %s20, 1
        %p952 = scmp.lt.s32.totalorder %s949, 15
        %s953 = scalar_select %p952, %s949, 15
        %s954 = smul.addr %s953, 2
        %s955 = smul.addr %s951, 32
        %s956 = sadd.s32 %s954, %s955
        %s957 = smul.addr %s956, 8
        %s958 = scalar_lea.vmem %s3, %s957
      $region44: #{unet_double_up.9} parent=39 // pred_fallthru
        _
    $region40: #{unet_double_up.9} parent=5 // pred_fallthru
      _
  $region6: #{unet_double_up.9} parent=0 // loop_footer
    %s13 = sadd.s32 1, %s9
  $region7: #{unet_double_up.9} parent=0 // loop_footer_branch
    %8 = sbr.rel target = $region3
  $region8: #{unet_double_up.9} parent=0 // loop_exit
    _

// kernel: unet_double_up.11
$region0: #{unet_double_up.11}
  #allocation0 [shape = 'u32[]', space=smem, size = 0x4, offset = 0x4, fixed_abs, tag = 'smem constant byte address 0x4 - core index']
  #allocation1 [shape = 'u32[72,128]{1,0:T(1,128)}', space=vmem, size = 0x9000, scoped, tag = 'internal scratch']
  %s0 = inlined_call_operand.vmem [shape: f32[2,16,16,128], index: 0, kind: input, shape index: {}]
  %s1 = inlined_call_operand.vmem [shape: f32[1,128], index: 1, kind: input, shape index: {}]
  %s2 = inlined_call_operand.vmem [shape: f32[1,128], index: 2, kind: input, shape index: {}]
  %s3 = inlined_call_operand.vmem [shape: f32[2,16,16,128], index: 3, kind: input, shape index: {}]
  %s4 = inlined_call_operand.vmem [shape: f32[2,16,16,128], index: 4, kind: output, shape index: {}]
  %s5 = sld [smem:[#allocation0]]
  $region49: #{unet_double_up.11} parent=0
    _
  %s7 = ssub.s32 1, %s5
  %s8 = scalar_select 0, %s7, %s5
  loop: start=0, step=1, limit=6
  $region2: #{unet_double_up.11} parent=0 // loop_pre_header
    _
  $region3: #{unet_double_up.11} parent=0 // loop_header
    %s10 = sphi 0, %s14
    %p11 = scmp.ge.s32.totalorder %s10, 6
    %s17 = sphi 0, %s29
    %s18 = sphi 0, %s25
    %s19 = sphi 0, %s17
    %s20 = sphi 0, %s18
    %s21 = sphi 0, %s19
    %s22 = sphi 0, %s20
    %s34 = sphi 0, %s36
    %s37 = sphi 0, %s34
    %s38 = sphi 0, %s37
    %s54 = sphi 0, %s38
    %s58 = sphi 0, %s58
    %s60 = sphi 0, %s58
    %s61 = sphi 0, %s60
    %s75 = sphi 0, %s61
    %s79 = sphi 0, %s79
    %s81 = sphi 0, %s79
    %s82 = sphi 0, %s81
    %s96 = sphi 0, %s82
    %s104 = sphi 0, %s106
    %s107 = sphi 0, %s104
    %s108 = sphi 0, %s107
    %s124 = sphi 0, %s108
    %s132 = sphi 0, %s134
    %s135 = sphi 0, %s132
    %s136 = sphi 0, %s135
    %s152 = sphi 0, %s136
  $region4: #{unet_double_up.11} parent=0 // loop_header_branch
    %13 = sbr.rel (%p11) target = $region8
  $region5: #{unet_double_up.11} parent=0 // loop_body
    %s15 = ssub.s32 %s10, 1
    %s16 = ssub.s32 %s10, 2
    %s23 = sadd.s32 1, %s18
    %p24 = scmp.ge.s32.totalorder %s23, 2
    %s25 = scalar_select %p24, 0, %s23
    %s26 = sadd.s32 1, %s17
    %s27 = scalar_select %p24, %s26, %s17
    %p28 = scmp.ge.s32.totalorder %s27, 2
    %s29 = scalar_select %p28, 0, %s27
    %s30 = ssub.s32 %s17, %s29
    %s31 = ssub.s32 %s18, %s25
    %s32 = sor.u32 %s30, %s31
    %p33 = scmp.eq.s32.totalorder %s32, 0
    %s35 = sadd.s32 %s34, 1
    %s36 = scalar_select %p33, %s34, %s35
    %p39 = pneg %p33
    %p40 = scmp.eq.s32.totalorder %s10, 3
    %p41 = por %p39, %p40
    %p42 = scmp.ne.s32.totalorder %s34, %s37
    %p43 = scmp.eq.s32.totalorder %s10, 0
    %p44 = por %p42, %p43
    %p45 = scmp.ne.s32.totalorder %s34, %s37
    %p46 = scmp.eq.s32.totalorder %s15, 3
    %p47 = por %p45, %p46
    %p48 = scmp.ne.s32.totalorder %s37, %s38
    %p49 = scmp.eq.s32.totalorder %s15, 0
    %p50 = por %p48, %p49
    %p51 = scmp.ne.s32.totalorder %s37, %s38
    %p52 = scmp.eq.s32.totalorder %s16, 3
    %p53 = por %p51, %p52
    %p55 = scmp.ne.s32.totalorder %s38, %s54
    %p56 = scmp.eq.s32.totalorder %s16, 0
    %p57 = por %p55, %p56
    %s59 = sadd.s32 %s58, 1
    %p62 = scmp.eq.s32.totalorder %s10, 3
    %p63 = scmp.ne.s32.totalorder %s58, %s60
    %p64 = scmp.eq.s32.totalorder %s10, 0
    %p65 = por %p63, %p64
    %p66 = scmp.ne.s32.totalorder %s58, %s60
    %p67 = scmp.eq.s32.totalorder %s15, 3
    %p68 = por %p66, %p67
    %p69 = scmp.ne.s32.totalorder %s60, %s61
    %p70 = scmp.eq.s32.totalorder %s15, 0
    %p71 = por %p69, %p70
    %p72 = scmp.ne.s32.totalorder %s60, %s61
    %p73 = scmp.eq.s32.totalorder %s16, 3
    %p74 = por %p72, %p73
    %p76 = scmp.ne.s32.totalorder %s61, %s75
    %p77 = scmp.eq.s32.totalorder %s16, 0
    %p78 = por %p76, %p77
    %s80 = sadd.s32 %s79, 1
    %p83 = scmp.eq.s32.totalorder %s10, 3
    %p84 = scmp.ne.s32.totalorder %s79, %s81
    %p85 = scmp.eq.s32.totalorder %s10, 0
    %p86 = por %p84, %p85
    %p87 = scmp.ne.s32.totalorder %s79, %s81
    %p88 = scmp.eq.s32.totalorder %s15, 3
    %p89 = por %p87, %p88
    %p90 = scmp.ne.s32.totalorder %s81, %s82
    %p91 = scmp.eq.s32.totalorder %s15, 0
    %p92 = por %p90, %p91
    %p93 = scmp.ne.s32.totalorder %s81, %s82
    %p94 = scmp.eq.s32.totalorder %s16, 3
    %p95 = por %p93, %p94
    %p97 = scmp.ne.s32.totalorder %s82, %s96
    %p98 = scmp.eq.s32.totalorder %s16, 0
    %p99 = por %p97, %p98
    %s100 = ssub.s32 %s17, %s29
    %s101 = ssub.s32 %s18, %s25
    %s102 = sor.u32 %s100, %s101
    %p103 = scmp.eq.s32.totalorder %s102, 0
    %s105 = sadd.s32 %s104, 1
    %s106 = scalar_select %p103, %s104, %s105
    %p109 = pneg %p103
    %p110 = scmp.eq.s32.totalorder %s10, 3
    %p111 = por %p109, %p110
    %p112 = scmp.ne.s32.totalorder %s104, %s107
    %p113 = scmp.eq.s32.totalorder %s10, 0
    %p114 = por %p112, %p113
    %p115 = scmp.ne.s32.totalorder %s104, %s107
    %p116 = scmp.eq.s32.totalorder %s15, 3
    %p117 = por %p115, %p116
    %p118 = scmp.ne.s32.totalorder %s107, %s108
    %p119 = scmp.eq.s32.totalorder %s15, 0
    %p120 = por %p118, %p119
    %p121 = scmp.ne.s32.totalorder %s107, %s108
    %p122 = scmp.eq.s32.totalorder %s16, 3
    %p123 = por %p121, %p122
    %p125 = scmp.ne.s32.totalorder %s108, %s124
    %p126 = scmp.eq.s32.totalorder %s16, 0
    %p127 = por %p125, %p126
    %s128 = ssub.s32 %s17, %s29
    %s129 = ssub.s32 %s18, %s25
    %s130 = sor.u32 %s128, %s129
    %p131 = scmp.eq.s32.totalorder %s130, 0
    %s133 = sadd.s32 %s132, 1
    %s134 = scalar_select %p131, %s132, %s133
    %p137 = pneg %p131
    %p138 = scmp.eq.s32.totalorder %s10, 3
    %p139 = por %p137, %p138
    %p140 = scmp.ne.s32.totalorder %s132, %s135
    %p141 = scmp.eq.s32.totalorder %s10, 0
    %p142 = por %p140, %p141
    %p143 = scmp.ne.s32.totalorder %s132, %s135
    %p144 = scmp.eq.s32.totalorder %s15, 3
    %p145 = por %p143, %p144
    %p146 = scmp.ne.s32.totalorder %s135, %s136
    %p147 = scmp.eq.s32.totalorder %s15, 0
    %p148 = por %p146, %p147
    %p149 = scmp.ne.s32.totalorder %s135, %s136
    %p150 = scmp.eq.s32.totalorder %s16, 3
    %p151 = por %p149, %p150
    %p153 = scmp.ne.s32.totalorder %s136, %s152
    %p154 = scmp.eq.s32.totalorder %s16, 0
    %p155 = por %p153, %p154
    %p156 = scmp.le.s32.totalorder 1, %s10
    %p157 = scmp.lt.s32.totalorder %s10, 5
    %p158 = pnand %p156, %p157
    %p159 = pneg %p158
    // Predicated region
    $region9: #{unet_double_up.11} parent=5 // pred_check
      _
    $region10: #{unet_double_up.11} parent=5 // pred_check_branch
      %161 = sbr.rel (%p158) target = $region12
    $region11: #{unet_double_up.11} parent=5 // pred_region
      %s162 = ssub.s32 %s10, 1
      // Predicated region
      $region13: #{unet_double_up.11} parent=11 // pred_check
        %p163 = pneg %p71
      $region14: #{unet_double_up.11} parent=11 // pred_check_branch
        %165 = sbr.rel (%p163) target = $region16
      $region15: #{unet_double_up.11} parent=11 // pred_region
        _
      $region16: #{unet_double_up.11} parent=11 // pred_fallthru
        _
      // Predicated region
      $region17: #{unet_double_up.11} parent=11 // pred_check
        %p166 = pneg %p92
      $region18: #{unet_double_up.11} parent=11 // pred_check_branch
        %168 = sbr.rel (%p166) target = $region20
      $region19: #{unet_double_up.11} parent=11 // pred_region
        _
      $region20: #{unet_double_up.11} parent=11 // pred_fallthru
        _
    $region12: #{unet_double_up.11} parent=5 // pred_fallthru
      _
    %p169 = scmp.lt.s32.totalorder %s10, 4
    // Predicated region
    $region21: #{unet_double_up.11} parent=5 // pred_check
      %p170 = pneg %p169
    $region22: #{unet_double_up.11} parent=5 // pred_check_branch
      %172 = sbr.rel (%p170) target = $region24
    $region23: #{unet_double_up.11} parent=5 // pred_region
      // Predicated region
      $region25: #{unet_double_up.11} parent=23 // pred_check
        %p173 = pneg %p44
      $region26: #{unet_double_up.11} parent=23 // pred_check_branch
        %175 = sbr.rel (%p173) target = $region28
      $region27: #{unet_double_up.11} parent=23 // pred_region
        %s176 = smul.u32 8, %s18
        %p177 = scmp.lt.s32.totalorder %s17, 1
        %s178 = scalar_select %p177, %s17, 1
        %p179 = scmp.lt.s32.totalorder %s176, 15
        %s180 = scalar_select %p179, %s176, 15
        %s181 = smul.addr %s180, 2
        %s182 = smul.addr %s178, 32
        %s183 = sadd.s32 %s181, %s182
        %s184 = smul.addr %s183, 8
        %s185 = scalar_lea.vmem %s0, %s184
        %s186 = smul.u32 8, %s18
      $region28: #{unet_double_up.11} parent=23 // pred_fallthru
        _
      // Predicated region
      $region29: #{unet_double_up.11} parent=23 // pred_check
        %p187 = pneg %p114
      $region30: #{unet_double_up.11} parent=23 // pred_check_branch
        %189 = sbr.rel (%p187) target = $region32
      $region31: #{unet_double_up.11} parent=23 // pred_region
        %s190 = smul.u32 8, %s18
        %p191 = scmp.lt.s32.totalorder %s17, 1
        %s192 = scalar_select %p191, %s17, 1
        %p193 = scmp.lt.s32.totalorder %s190, 15
        %s194 = scalar_select %p193, %s190, 15
        %s195 = smul.addr %s194, 2
        %s196 = smul.addr %s192, 32
        %s197 = sadd.s32 %s195, %s196
        %s198 = smul.addr %s197, 8
        %s199 = scalar_lea.vmem %s3, %s198
        %s200 = smul.u32 8, %s18
      $region32: #{unet_double_up.11} parent=23 // pred_fallthru
        _
    $region24: #{unet_double_up.11} parent=5 // pred_fallthru
      _
    %p201 = scmp.le.s32.totalorder 1, %s10
    %p202 = scmp.lt.s32.totalorder %s10, 5
    %p203 = pnand %p201, %p202
    %p204 = pneg %p203
    // Predicated region
    $region33: #{unet_double_up.11} parent=5 // pred_check
      _
    $region34: #{unet_double_up.11} parent=5 // pred_check_branch
      %206 = sbr.rel (%p203) target = $region36
    $region35: #{unet_double_up.11} parent=5 // pred_region
      %s207 = ssub.s32 %s10, 1
      %s208 = smul.u32 8, %s20
      %p209 = scmp.lt.s32.totalorder %s19, 1
      %s210 = scalar_select %p209, %s19, 1
      %p211 = scmp.lt.s32.totalorder %s208, 15
      %s212 = scalar_select %p211, %s208, 15
      %s213 = smul.addr %s212, 2
      %s214 = smul.addr %s210, 32
      %s215 = sadd.s32 %s213, %s214
      %s216 = smul.addr %s215, 8
      %s217 = scalar_lea.vmem %s0, %s216
      %p218 = pneg %p50
      %p219 = pneg %p47
      %p220 = pneg %p71
      %p221 = pneg %p68
      %p222 = pneg %p92
      %p223 = pneg %p89
      %s224 = smul.u32 8, %s20
      %p225 = scmp.lt.s32.totalorder %s19, 1
      %s226 = scalar_select %p225, %s19, 1
      %p227 = scmp.lt.s32.totalorder %s224, 15
      %s228 = scalar_select %p227, %s224, 15
      %s229 = smul.addr %s228, 2
      %s230 = smul.addr %s226, 32
      %s231 = sadd.s32 %s229, %s230
      %s232 = smul.addr %s231, 8
      %s233 = scalar_lea.vmem %s3, %s232
      %p234 = pneg %p120
      %p235 = pneg %p117
      %p236 = pneg %p148
      %p237 = pneg %p145
      %s238 = smul.u32 8, %s20
      %p239 = scmp.lt.s32.totalorder %s19, 1
      %s240 = scalar_select %p239, %s19, 1
      %p241 = scmp.lt.s32.totalorder %s238, 15
      %s242 = scalar_select %p241, %s238, 15
      %s243 = smul.addr %s242, 2
      %s244 = smul.addr %s240, 32
      %s245 = sadd.s32 %s243, %s244
      %s246 = smul.addr %s245, 8
      %s247 = scalar_lea.vmem %s4, %s246
      %s248 = smul.u32 8, %s20
      %p249 = scmp.lt.s32.totalorder %s19, 1
      %s250 = scalar_select %p249, %s19, 1
      %p251 = scmp.lt.s32.totalorder %s248, 15
      %s252 = scalar_select %p251, %s248, 15
      %s253 = smul.addr %s252, 2
      %s254 = smul.addr %s250, 32
      %s255 = sadd.s32 %s253, %s254
      %s256 = smul.addr %s255, 8
      %s257 = scalar_lea.vmem %s0, %s256
      %s258 = smul.u32 8, %s20
      %s259 = smul.u32 8, %s20
      %p260 = scmp.lt.s32.totalorder %s19, 1
      %s261 = scalar_select %p260, %s19, 1
      %p262 = scmp.lt.s32.totalorder %s259, 15
      %s263 = scalar_select %p262, %s259, 15
      %s264 = smul.addr %s263, 2
      %s265 = smul.addr %s261, 32
      %s266 = sadd.s32 %s264, %s265
      %s267 = smul.addr %s266, 8
      %s268 = scalar_lea.vmem %s3, %s267
      %s269 = smul.u32 8, %s20
      %s270 = smul.u32 8, %s20
      %p271 = scmp.lt.s32.totalorder %s19, 1
      %s272 = scalar_select %p271, %s19, 1
      %p273 = scmp.lt.s32.totalorder %s270, 15
      %s274 = scalar_select %p273, %s270, 15
      %s275 = smul.addr %s274, 2
      %s276 = smul.addr %s272, 32
      %s277 = sadd.s32 %s275, %s276
      %s278 = smul.addr %s277, 8
      %s279 = scalar_lea.vmem %s4, %s278
      %s280 = smul.u32 8, %s20
      %v281 = vld [vmem:[%s257] sm:$0xff]
      %v282 = vld [vmem:[%s257 + $0x8] sm:$0xff]
      %v283 = vld [vmem:[%s257 + $0x10] sm:$0xff]
      %v284 = vld [vmem:[%s257 + $0x18] sm:$0xff]
      %v285 = vld [vmem:[%s257 + $0x20] sm:$0xff]
      %v286 = vld [vmem:[%s257 + $0x28] sm:$0xff]
      %v287 = vld [vmem:[%s257 + $0x30] sm:$0xff]
      %v288 = vld [vmem:[%s257 + $0x38] sm:$0xff]
      %v289 = vld [vmem:[%s257 + $0x40] sm:$0xff]
      %v290 = vld [vmem:[%s257 + $0x48] sm:$0xff]
      %v291 = vld [vmem:[%s257 + $0x50] sm:$0xff]
      %v292 = vld [vmem:[%s257 + $0x58] sm:$0xff]
      %v293 = vld [vmem:[%s257 + $0x60] sm:$0xff]
      %v294 = vld [vmem:[%s257 + $0x68] sm:$0xff]
      %v295 = vld [vmem:[%s257 + $0x70] sm:$0xff]
      %v296 = vld [vmem:[%s257 + $0x78] sm:$0xff]
      %v297 = vld [vmem:[%s1] sm:$0x1]
      %v299 = vperm.slane %v297, 0
      %v301 = vmul.f32 %v281, %v299
      %v302 = vmul.f32 %v282, %v299
      %v303 = vmul.f32 %v283, %v299
      %v304 = vmul.f32 %v284, %v299
      %v305 = vmul.f32 %v285, %v299
      %v306 = vmul.f32 %v286, %v299
      %v307 = vmul.f32 %v287, %v299
      %v308 = vmul.f32 %v288, %v299
      %v309 = vmul.f32 %v289, %v299
      %v310 = vmul.f32 %v290, %v299
      %v311 = vmul.f32 %v291, %v299
      %v312 = vmul.f32 %v292, %v299
      %v313 = vmul.f32 %v293, %v299
      %v314 = vmul.f32 %v294, %v299
      %v315 = vmul.f32 %v295, %v299
      %v316 = vmul.f32 %v296, %v299
      %v317 = vld [vmem:[%s2] sm:$0x1]
      %v319 = vperm.slane %v317, 0
      %v321 = vadd.f32 %v301, %v319
      %v322 = vadd.f32 %v302, %v319
      %v323 = vadd.f32 %v303, %v319
      %v324 = vadd.f32 %v304, %v319
      %v325 = vadd.f32 %v305, %v319
      %v326 = vadd.f32 %v306, %v319
      %v327 = vadd.f32 %v307, %v319
      %v328 = vadd.f32 %v308, %v319
      %v329 = vadd.f32 %v309, %v319
      %v330 = vadd.f32 %v310, %v319
      %v331 = vadd.f32 %v311, %v319
      %v332 = vadd.f32 %v312, %v319
      %v333 = vadd.f32 %v313, %v319
      %v334 = vadd.f32 %v314, %v319
      %v335 = vadd.f32 %v315, %v319
      %v336 = vadd.f32 %v316, %v319
      %v337 = vmul.f32 %v321, 0.5
      %v338 = vmul.f32 %v322, 0.5
      %v339 = vmul.f32 %v323, 0.5
      %v340 = vmul.f32 %v324, 0.5
      %v341 = vmul.f32 %v325, 0.5
      %v342 = vmul.f32 %v326, 0.5
      %v343 = vmul.f32 %v327, 0.5
      %v344 = vmul.f32 %v328, 0.5
      %v345 = vmul.f32 %v329, 0.5
      %v346 = vmul.f32 %v330, 0.5
      %v347 = vmul.f32 %v331, 0.5
      %v348 = vmul.f32 %v332, 0.5
      %v349 = vmul.f32 %v333, 0.5
      %v350 = vmul.f32 %v334, 0.5
      %v351 = vmul.f32 %v335, 0.5
      %v352 = vmul.f32 %v336, 0.5
      %v353 = vmul.f32 %v321, 0.70710677
      %v354 = vmul.f32 %v322, 0.70710677
      %v355 = vmul.f32 %v323, 0.70710677
      %v356 = vmul.f32 %v324, 0.70710677
      %v357 = vmul.f32 %v325, 0.70710677
      %v358 = vmul.f32 %v326, 0.70710677
      %v359 = vmul.f32 %v327, 0.70710677
      %v360 = vmul.f32 %v328, 0.70710677
      %v361 = vmul.f32 %v329, 0.70710677
      %v362 = vmul.f32 %v330, 0.70710677
      %v363 = vmul.f32 %v331, 0.70710677
      %v364 = vmul.f32 %v332, 0.70710677
      %v365 = vmul.f32 %v333, 0.70710677
      %v366 = vmul.f32 %v334, 0.70710677
      %v367 = vmul.f32 %v335, 0.70710677
      %v368 = vmul.f32 %v336, 0.70710677
      %vm369 = vcmp.ge.f32.partialorder %v353, 0.0
      %vm370 = vcmp.ge.f32.partialorder %v354, 0.0
      %vm371 = vcmp.ge.f32.partialorder %v355, 0.0
      %vm372 = vcmp.ge.f32.partialorder %v356, 0.0
      %vm373 = vcmp.ge.f32.partialorder %v357, 0.0
      %vm374 = vcmp.ge.f32.partialorder %v358, 0.0
      %vm375 = vcmp.ge.f32.partialorder %v359, 0.0
      %vm376 = vcmp.ge.f32.partialorder %v360, 0.0
      %vm377 = vcmp.ge.f32.partialorder %v361, 0.0
      %vm378 = vcmp.ge.f32.partialorder %v362, 0.0
      %vm379 = vcmp.ge.f32.partialorder %v363, 0.0
      %vm380 = vcmp.ge.f32.partialorder %v364, 0.0
      %vm381 = vcmp.ge.f32.partialorder %v365, 0.0
      %vm382 = vcmp.ge.f32.partialorder %v366, 0.0
      %vm383 = vcmp.ge.f32.partialorder %v367, 0.0
      %vm384 = vcmp.ge.f32.partialorder %v368, 0.0
      %v385 = vsel %vm369, 1.0, -1.0
      %v386 = vsel %vm370, 1.0, -1.0
      %v387 = vsel %vm371, 1.0, -1.0
      %v388 = vsel %vm372, 1.0, -1.0
      %v389 = vsel %vm373, 1.0, -1.0
      %v390 = vsel %vm374, 1.0, -1.0
      %v391 = vsel %vm375, 1.0, -1.0
      %v392 = vsel %vm376, 1.0, -1.0
      %v393 = vsel %vm377, 1.0, -1.0
      %v394 = vsel %vm378, 1.0, -1.0
      %v395 = vsel %vm379, 1.0, -1.0
      %v396 = vsel %vm380, 1.0, -1.0
      %v397 = vsel %vm381, 1.0, -1.0
      %v398 = vsel %vm382, 1.0, -1.0
      %v399 = vsel %vm383, 1.0, -1.0
      %v400 = vsel %vm384, 1.0, -1.0
      %v401 = vand.u32 2147483647, %v353
      %v402 = vand.u32 2147483647, %v354
      %v403 = vand.u32 2147483647, %v355
      %v404 = vand.u32 2147483647, %v356
      %v405 = vand.u32 2147483647, %v357
      %v406 = vand.u32 2147483647, %v358
      %v407 = vand.u32 2147483647, %v359
      %v408 = vand.u32 2147483647, %v360
      %v409 = vand.u32 2147483647, %v361
      %v410 = vand.u32 2147483647, %v362
      %v411 = vand.u32 2147483647, %v363
      %v412 = vand.u32 2147483647, %v364
      %v413 = vand.u32 2147483647, %v365
      %v414 = vand.u32 2147483647, %v366
      %v415 = vand.u32 2147483647, %v367
      %v416 = vand.u32 2147483647, %v368
      %v417 = vmul.f32 %v401, 0.3275911
      %v418 = vmul.f32 %v402, 0.3275911
      %v419 = vmul.f32 %v403, 0.3275911
      %v420 = vmul.f32 %v404, 0.3275911
      %v421 = vmul.f32 %v405, 0.3275911
      %v422 = vmul.f32 %v406, 0.3275911
      %v423 = vmul.f32 %v407, 0.3275911
      %v424 = vmul.f32 %v408, 0.3275911
      %v425 = vmul.f32 %v409, 0.3275911
      %v426 = vmul.f32 %v410, 0.3275911
      %v427 = vmul.f32 %v411, 0.3275911
      %v428 = vmul.f32 %v412, 0.3275911
      %v429 = vmul.f32 %v413, 0.3275911
      %v430 = vmul.f32 %v414, 0.3275911
      %v431 = vmul.f32 %v415, 0.3275911
      %v432 = vmul.f32 %v416, 0.3275911
      %v433 = vadd.f32 %v417, 1.0
      %v434 = vadd.f32 %v418, 1.0
      %v435 = vadd.f32 %v419, 1.0
      %v436 = vadd.f32 %v420, 1.0
      %v437 = vadd.f32 %v421, 1.0
      %v438 = vadd.f32 %v422, 1.0
      %v439 = vadd.f32 %v423, 1.0
      %v440 = vadd.f32 %v424, 1.0
      %v441 = vadd.f32 %v425, 1.0
      %v442 = vadd.f32 %v426, 1.0
      %v443 = vadd.f32 %v427, 1.0
      %v444 = vadd.f32 %v428, 1.0
      %v445 = vadd.f32 %v429, 1.0
      %v446 = vadd.f32 %v430, 1.0
      %v447 = vadd.f32 %v431, 1.0
      %v448 = vadd.f32 %v432, 1.0
      %v449 = vrcp.pop %v433
      %v450 = vmul.f32 %v433, %v449
      %v451 = vsub.f32 1.0, %v450
      %v452 = vmul.f32 %v449, %v451
      %v453 = vadd.f32 %v449, %v452
      %vm454 = vweird.f32 %v433
      %vm455 = vweird.f32 %v449
      %vm456 = vmor %vm454, %vm455
      %v457 = vsel %vm456, %v449, %v453
      %v458 = vand.u32 2147483647, %v433
      %vm459 = vcmp.eq.f32.partialorder %v458, 8.507059e+37
      %v460 = vand.u32 %v433, 2147483648
      %v461 = vor.u32 1.1754944e-38, %v460
      %v462 = vsel %vm459, %v461, %v457
      %v463 = vmul.f32 1.0, %v462
      %v464 = vrcp.pop %v434
      %v465 = vmul.f32 %v434, %v464
      %v466 = vsub.f32 1.0, %v465
      %v467 = vmul.f32 %v464, %v466
      %v468 = vadd.f32 %v464, %v467
      %vm469 = vweird.f32 %v434
      %vm470 = vweird.f32 %v464
      %vm471 = vmor %vm469, %vm470
      %v472 = vsel %vm471, %v464, %v468
      %v473 = vand.u32 2147483647, %v434
      %vm474 = vcmp.eq.f32.partialorder %v473, 8.507059e+37
      %v475 = vand.u32 %v434, 2147483648
      %v476 = vor.u32 1.1754944e-38, %v475
      %v477 = vsel %vm474, %v476, %v472
      %v478 = vmul.f32 1.0, %v477
      %v479 = vrcp.pop %v435
      %v480 = vmul.f32 %v435, %v479
      %v481 = vsub.f32 1.0, %v480
      %v482 = vmul.f32 %v479, %v481
      %v483 = vadd.f32 %v479, %v482
      %vm484 = vweird.f32 %v435
      %vm485 = vweird.f32 %v479
      %vm486 = vmor %vm484, %vm485
      %v487 = vsel %vm486, %v479, %v483
      %v488 = vand.u32 2147483647, %v435
      %vm489 = vcmp.eq.f32.partialorder %v488, 8.507059e+37
      %v490 = vand.u32 %v435, 2147483648
      %v491 = vor.u32 1.1754944e-38, %v490
      %v492 = vsel %vm489, %v491, %v487
      %v493 = vmul.f32 1.0, %v492
      %v494 = vrcp.pop %v436
      %v495 = vmul.f32 %v436, %v494
      %v496 = vsub.f32 1.0, %v495
      %v497 = vmul.f32 %v494, %v496
      %v498 = vadd.f32 %v494, %v497
      %vm499 = vweird.f32 %v436
      %vm500 = vweird.f32 %v494
      %vm501 = vmor %vm499, %vm500
      %v502 = vsel %vm501, %v494, %v498
      %v503 = vand.u32 2147483647, %v436
      %vm504 = vcmp.eq.f32.partialorder %v503, 8.507059e+37
      %v505 = vand.u32 %v436, 2147483648
      %v506 = vor.u32 1.1754944e-38, %v505
      %v507 = vsel %vm504, %v506, %v502
      %v508 = vmul.f32 1.0, %v507
      %v509 = vrcp.pop %v437
      %v510 = vmul.f32 %v437, %v509
      %v511 = vsub.f32 1.0, %v510
      %v512 = vmul.f32 %v509, %v511
      %v513 = vadd.f32 %v509, %v512
      %vm514 = vweird.f32 %v437
      %vm515 = vweird.f32 %v509
      %vm516 = vmor %vm514, %vm515
      %v517 = vsel %vm516, %v509, %v513
      %v518 = vand.u32 2147483647, %v437
      %vm519 = vcmp.eq.f32.partialorder %v518, 8.507059e+37
      %v520 = vand.u32 %v437, 2147483648
      %v521 = vor.u32 1.1754944e-38, %v520
      %v522 = vsel %vm519, %v521, %v517
      %v523 = vmul.f32 1.0, %v522
      %v524 = vrcp.pop %v438
      %v525 = vmul.f32 %v438, %v524
      %v526 = vsub.f32 1.0, %v525
      %v527 = vmul.f32 %v524, %v526
      %v528 = vadd.f32 %v524, %v527
      %vm529 = vweird.f32 %v438
      %vm530 = vweird.f32 %v524
      %vm531 = vmor %vm529, %vm530
      %v532 = vsel %vm531, %v524, %v528
      %v533 = vand.u32 2147483647, %v438
      %vm534 = vcmp.eq.f32.partialorder %v533, 8.507059e+37
      %v535 = vand.u32 %v438, 2147483648
      %v536 = vor.u32 1.1754944e-38, %v535
      %v537 = vsel %vm534, %v536, %v532
      %v538 = vmul.f32 1.0, %v537
      %v539 = vrcp.pop %v439
      %v540 = vmul.f32 %v439, %v539
      %v541 = vsub.f32 1.0, %v540
      %v542 = vmul.f32 %v539, %v541
      %v543 = vadd.f32 %v539, %v542
      %vm544 = vweird.f32 %v439
      %vm545 = vweird.f32 %v539
      %vm546 = vmor %vm544, %vm545
      %v547 = vsel %vm546, %v539, %v543
      %v548 = vand.u32 2147483647, %v439
      %vm549 = vcmp.eq.f32.partialorder %v548, 8.507059e+37
      %v550 = vand.u32 %v439, 2147483648
      %v551 = vor.u32 1.1754944e-38, %v550
      %v552 = vsel %vm549, %v551, %v547
      %v553 = vmul.f32 1.0, %v552
      %v554 = vrcp.pop %v440
      %v555 = vmul.f32 %v440, %v554
      %v556 = vsub.f32 1.0, %v555
      %v557 = vmul.f32 %v554, %v556
      %v558 = vadd.f32 %v554, %v557
      %vm559 = vweird.f32 %v440
      %vm560 = vweird.f32 %v554
      %vm561 = vmor %vm559, %vm560
      %v562 = vsel %vm561, %v554, %v558
      %v563 = vand.u32 2147483647, %v440
      %vm564 = vcmp.eq.f32.partialorder %v563, 8.507059e+37
      %v565 = vand.u32 %v440, 2147483648
      %v566 = vor.u32 1.1754944e-38, %v565
      %v567 = vsel %vm564, %v566, %v562
      %v568 = vmul.f32 1.0, %v567
      %v569 = vrcp.pop %v441
      %v570 = vmul.f32 %v441, %v569
      %v571 = vsub.f32 1.0, %v570
      %v572 = vmul.f32 %v569, %v571
      %v573 = vadd.f32 %v569, %v572
      %vm574 = vweird.f32 %v441
      %vm575 = vweird.f32 %v569
      %vm576 = vmor %vm574, %vm575
      %v577 = vsel %vm576, %v569, %v573
      %v578 = vand.u32 2147483647, %v441
      %vm579 = vcmp.eq.f32.partialorder %v578, 8.507059e+37
      %v580 = vand.u32 %v441, 2147483648
      %v581 = vor.u32 1.1754944e-38, %v580
      %v582 = vsel %vm579, %v581, %v577
      %v583 = vmul.f32 1.0, %v582
      %v584 = vrcp.pop %v442
      %v585 = vmul.f32 %v442, %v584
      %v586 = vsub.f32 1.0, %v585
      %v587 = vmul.f32 %v584, %v586
      %v588 = vadd.f32 %v584, %v587
      %vm589 = vweird.f32 %v442
      %vm590 = vweird.f32 %v584
      %vm591 = vmor %vm589, %vm590
      %v592 = vsel %vm591, %v584, %v588
      %v593 = vand.u32 2147483647, %v442
      %vm594 = vcmp.eq.f32.partialorder %v593, 8.507059e+37
      %v595 = vand.u32 %v442, 2147483648
      %v596 = vor.u32 1.1754944e-38, %v595
      %v597 = vsel %vm594, %v596, %v592
      %v598 = vmul.f32 1.0, %v597
      %v599 = vrcp.pop %v443
      %v600 = vmul.f32 %v443, %v599
      %v601 = vsub.f32 1.0, %v600
      %v602 = vmul.f32 %v599, %v601
      %v603 = vadd.f32 %v599, %v602
      %vm604 = vweird.f32 %v443
      %vm605 = vweird.f32 %v599
      %vm606 = vmor %vm604, %vm605
      %v607 = vsel %vm606, %v599, %v603
      %v608 = vand.u32 2147483647, %v443
      %vm609 = vcmp.eq.f32.partialorder %v608, 8.507059e+37
      %v610 = vand.u32 %v443, 2147483648
      %v611 = vor.u32 1.1754944e-38, %v610
      %v612 = vsel %vm609, %v611, %v607
      %v613 = vmul.f32 1.0, %v612
      %v614 = vrcp.pop %v444
      %v615 = vmul.f32 %v444, %v614
      %v616 = vsub.f32 1.0, %v615
      %v617 = vmul.f32 %v614, %v616
      %v618 = vadd.f32 %v614, %v617
      %vm619 = vweird.f32 %v444
      %vm620 = vweird.f32 %v614
      %vm621 = vmor %vm619, %vm620
      %v622 = vsel %vm621, %v614, %v618
      %v623 = vand.u32 2147483647, %v444
      %vm624 = vcmp.eq.f32.partialorder %v623, 8.507059e+37
      %v625 = vand.u32 %v444, 2147483648
      %v626 = vor.u32 1.1754944e-38, %v625
      %v627 = vsel %vm624, %v626, %v622
      %v628 = vmul.f32 1.0, %v627
      %v629 = vrcp.pop %v445
      %v630 = vmul.f32 %v445, %v629
      %v631 = vsub.f32 1.0, %v630
      %v632 = vmul.f32 %v629, %v631
      %v633 = vadd.f32 %v629, %v632
      %vm634 = vweird.f32 %v445
      %vm635 = vweird.f32 %v629
      %vm636 = vmor %vm634, %vm635
      %v637 = vsel %vm636, %v629, %v633
      %v638 = vand.u32 2147483647, %v445
      %vm639 = vcmp.eq.f32.partialorder %v638, 8.507059e+37
      %v640 = vand.u32 %v445, 2147483648
      %v641 = vor.u32 1.1754944e-38, %v640
      %v642 = vsel %vm639, %v641, %v637
      %v643 = vmul.f32 1.0, %v642
      %v644 = vrcp.pop %v446
      %v645 = vmul.f32 %v446, %v644
      %v646 = vsub.f32 1.0, %v645
      %v647 = vmul.f32 %v644, %v646
      %v648 = vadd.f32 %v644, %v647
      %vm649 = vweird.f32 %v446
      %vm650 = vweird.f32 %v644
      %vm651 = vmor %vm649, %vm650
      %v652 = vsel %vm651, %v644, %v648
      %v653 = vand.u32 2147483647, %v446
      %vm654 = vcmp.eq.f32.partialorder %v653, 8.507059e+37
      %v655 = vand.u32 %v446, 2147483648
      %v656 = vor.u32 1.1754944e-38, %v655
      %v657 = vsel %vm654, %v656, %v652
      %v658 = vmul.f32 1.0, %v657
      %v659 = vrcp.pop %v447
      %v660 = vmul.f32 %v447, %v659
      %v661 = vsub.f32 1.0, %v660
      %v662 = vmul.f32 %v659, %v661
      %v663 = vadd.f32 %v659, %v662
      %vm664 = vweird.f32 %v447
      %vm665 = vweird.f32 %v659
      %vm666 = vmor %vm664, %vm665
      %v667 = vsel %vm666, %v659, %v663
      %v668 = vand.u32 2147483647, %v447
      %vm669 = vcmp.eq.f32.partialorder %v668, 8.507059e+37
      %v670 = vand.u32 %v447, 2147483648
      %v671 = vor.u32 1.1754944e-38, %v670
      %v672 = vsel %vm669, %v671, %v667
      %v673 = vmul.f32 1.0, %v672
      %v674 = vrcp.pop %v448
      %v675 = vmul.f32 %v448, %v674
      %v676 = vsub.f32 1.0, %v675
      %v677 = vmul.f32 %v674, %v676
      %v678 = vadd.f32 %v674, %v677
      %vm679 = vweird.f32 %v448
      %vm680 = vweird.f32 %v674
      %vm681 = vmor %vm679, %vm680
      %v682 = vsel %vm681, %v674, %v678
      %v683 = vand.u32 2147483647, %v448
      %vm684 = vcmp.eq.f32.partialorder %v683, 8.507059e+37
      %v685 = vand.u32 %v448, 2147483648
      %v686 = vor.u32 1.1754944e-38, %v685
      %v687 = vsel %vm684, %v686, %v682
      %v688 = vmul.f32 1.0, %v687
      %v689 = vmul.f32 %v463, 1.0614054
      %v690 = vmul.f32 %v478, 1.0614054
      %v691 = vmul.f32 %v493, 1.0614054
      %v692 = vmul.f32 %v508, 1.0614054
      %v693 = vmul.f32 %v523, 1.0614054
      %v694 = vmul.f32 %v538, 1.0614054
      %v695 = vmul.f32 %v553, 1.0614054
      %v696 = vmul.f32 %v568, 1.0614054
      %v697 = vmul.f32 %v583, 1.0614054
      %v698 = vmul.f32 %v598, 1.0614054
      %v699 = vmul.f32 %v613, 1.0614054
      %v700 = vmul.f32 %v628, 1.0614054
      %v701 = vmul.f32 %v643, 1.0614054
      %v702 = vmul.f32 %v658, 1.0614054
      %v703 = vmul.f32 %v673, 1.0614054
      %v704 = vmul.f32 %v688, 1.0614054
      %v705 = vadd.f32 %v689, -1.4531521
      %v706 = vadd.f32 %v690, -1.4531521
      %v707 = vadd.f32 %v691, -1.4531521
      %v708 = vadd.f32 %v692, -1.4531521
      %v709 = vadd.f32 %v693, -1.4531521
      %v710 = vadd.f32 %v694, -1.4531521
      %v711 = vadd.f32 %v695, -1.4531521
      %v712 = vadd.f32 %v696, -1.4531521
      %v713 = vadd.f32 %v697, -1.4531521
      %v714 = vadd.f32 %v698, -1.4531521
      %v715 = vadd.f32 %v699, -1.4531521
      %v716 = vadd.f32 %v700, -1.4531521
      %v717 = vadd.f32 %v701, -1.4531521
      %v718 = vadd.f32 %v702, -1.4531521
      %v719 = vadd.f32 %v703, -1.4531521
      %v720 = vadd.f32 %v704, -1.4531521
      %v721 = vmul.f32 %v705, %v463
      %v722 = vmul.f32 %v706, %v478
      %v723 = vmul.f32 %v707, %v493
      %v724 = vmul.f32 %v708, %v508
      %v725 = vmul.f32 %v709, %v523
      %v726 = vmul.f32 %v710, %v538
      %v727 = vmul.f32 %v711, %v553
      %v728 = vmul.f32 %v712, %v568
      %v729 = vmul.f32 %v713, %v583
      %v730 = vmul.f32 %v714, %v598
      %v731 = vmul.f32 %v715, %v613
      %v732 = vmul.f32 %v716, %v628
      %v733 = vmul.f32 %v717, %v643
      %v734 = vmul.f32 %v718, %v658
      %v735 = vmul.f32 %v719, %v673
      %v736 = vmul.f32 %v720, %v688
      %v737 = vadd.f32 %v721, 1.4214138
      %v738 = vadd.f32 %v722, 1.4214138
      %v739 = vadd.f32 %v723, 1.4214138
      %v740 = vadd.f32 %v724, 1.4214138
      %v741 = vadd.f32 %v725, 1.4214138
      %v742 = vadd.f32 %v726, 1.4214138
      %v743 = vadd.f32 %v727, 1.4214138
      %v744 = vadd.f32 %v728, 1.4214138
      %v745 = vadd.f32 %v729, 1.4214138
      %v746 = vadd.f32 %v730, 1.4214138
      %v747 = vadd.f32 %v731, 1.4214138
      %v748 = vadd.f32 %v732, 1.4214138
      %v749 = vadd.f32 %v733, 1.4214138
      %v750 = vadd.f32 %v734, 1.4214138
      %v751 = vadd.f32 %v735, 1.4214138
      %v752 = vadd.f32 %v736, 1.4214138
      %v753 = vmul.f32 %v737, %v463
      %v754 = vmul.f32 %v738, %v478
      %v755 = vmul.f32 %v739, %v493
      %v756 = vmul.f32 %v740, %v508
      %v757 = vmul.f32 %v741, %v523
      %v758 = vmul.f32 %v742, %v538
      %v759 = vmul.f32 %v743, %v553
      %v760 = vmul.f32 %v744, %v568
      %v761 = vmul.f32 %v745, %v583
      %v762 = vmul.f32 %v746, %v598
      %v763 = vmul.f32 %v747, %v613
      %v764 = vmul.f32 %v748, %v628
      %v765 = vmul.f32 %v749, %v643
      %v766 = vmul.f32 %v750, %v658
      %v767 = vmul.f32 %v751, %v673
      %v768 = vmul.f32 %v752, %v688
      %v769 = vadd.f32 %v753, -0.28449672
      %v770 = vadd.f32 %v754, -0.28449672
      %v771 = vadd.f32 %v755, -0.28449672
      %v772 = vadd.f32 %v756, -0.28449672
      %v773 = vadd.f32 %v757, -0.28449672
      %v774 = vadd.f32 %v758, -0.28449672
      %v775 = vadd.f32 %v759, -0.28449672
      %v776 = vadd.f32 %v760, -0.28449672
      %v777 = vadd.f32 %v761, -0.28449672
      %v778 = vadd.f32 %v762, -0.28449672
      %v779 = vadd.f32 %v763, -0.28449672
      %v780 = vadd.f32 %v764, -0.28449672
      %v781 = vadd.f32 %v765, -0.28449672
      %v782 = vadd.f32 %v766, -0.28449672
      %v783 = vadd.f32 %v767, -0.28449672
      %v784 = vadd.f32 %v768, -0.28449672
      %v785 = vmul.f32 %v769, %v463
      %v786 = vmul.f32 %v770, %v478
      %v787 = vmul.f32 %v771, %v493
      %v788 = vmul.f32 %v772, %v508
      %v789 = vmul.f32 %v773, %v523
      %v790 = vmul.f32 %v774, %v538
      %v791 = vmul.f32 %v775, %v553
      %v792 = vmul.f32 %v776, %v568
      %v793 = vmul.f32 %v777, %v583
      %v794 = vmul.f32 %v778, %v598
      %v795 = vmul.f32 %v779, %v613
      %v796 = vmul.f32 %v780, %v628
      %v797 = vmul.f32 %v781, %v643
      %v798 = vmul.f32 %v782, %v658
      %v799 = vmul.f32 %v783, %v673
      %v800 = vmul.f32 %v784, %v688
      %v801 = vadd.f32 %v785, 0.2548296
      %v802 = vadd.f32 %v786, 0.2548296
      %v803 = vadd.f32 %v787, 0.2548296
      %v804 = vadd.f32 %v788, 0.2548296
      %v805 = vadd.f32 %v789, 0.2548296
      %v806 = vadd.f32 %v790, 0.2548296
      %v807 = vadd.f32 %v791, 0.2548296
      %v808 = vadd.f32 %v792, 0.2548296
      %v809 = vadd.f32 %v793, 0.2548296
      %v810 = vadd.f32 %v794, 0.2548296
      %v811 = vadd.f32 %v795, 0.2548296
      %v812 = vadd.f32 %v796, 0.2548296
      %v813 = vadd.f32 %v797, 0.2548296
      %v814 = vadd.f32 %v798, 0.2548296
      %v815 = vadd.f32 %v799, 0.2548296
      %v816 = vadd.f32 %v800, 0.2548296
      %v817 = vmul.f32 %v801, %v463
      %v818 = vmul.f32 %v802, %v478
      %v819 = vmul.f32 %v803, %v493
      %v820 = vmul.f32 %v804, %v508
      %v821 = vmul.f32 %v805, %v523
      %v822 = vmul.f32 %v806, %v538
      %v823 = vmul.f32 %v807, %v553
      %v824 = vmul.f32 %v808, %v568
      %v825 = vmul.f32 %v809, %v583
      %v826 = vmul.f32 %v810, %v598
      %v827 = vmul.f32 %v811, %v613
      %v828 = vmul.f32 %v812, %v628
      %v829 = vmul.f32 %v813, %v643
      %v830 = vmul.f32 %v814, %v658
      %v831 = vmul.f32 %v815, %v673
      %v832 = vmul.f32 %v816, %v688
      %v833 = vsub.f32 0.0, %v401
      %v834 = vsub.f32 0.0, %v402
      %v835 = vsub.f32 0.0, %v403
      %v836 = vsub.f32 0.0, %v404
      %v837 = vsub.f32 0.0, %v405
      %v838 = vsub.f32 0.0, %v406
      %v839 = vsub.f32 0.0, %v407
      %v840 = vsub.f32 0.0, %v408
      %v841 = vsub.f32 0.0, %v409
      %v842 = vsub.f32 0.0, %v410
      %v843 = vsub.f32 0.0, %v411
      %v844 = vsub.f32 0.0, %v412
      %v845 = vsub.f32 0.0, %v413
      %v846 = vsub.f32 0.0, %v414
      %v847 = vsub.f32 0.0, %v415
      %v848 = vsub.f32 0.0, %v416
      %v849 = vmul.f32 %v833, %v401
      %v850 = vmul.f32 %v834, %v402
      %v851 = vmul.f32 %v835, %v403
      %v852 = vmul.f32 %v836, %v404
      %v853 = vmul.f32 %v837, %v405
      %v854 = vmul.f32 %v838, %v406
      %v855 = vmul.f32 %v839, %v407
      %v856 = vmul.f32 %v840, %v408
      %v857 = vmul.f32 %v841, %v409
      %v858 = vmul.f32 %v842, %v410
      %v859 = vmul.f32 %v843, %v411
      %v860 = vmul.f32 %v844, %v412
      %v861 = vmul.f32 %v845, %v413
      %v862 = vmul.f32 %v846, %v414
      %v863 = vmul.f32 %v847, %v415
      %v864 = vmul.f32 %v848, %v416
      %v865 = vmul.f32 %v849, 1.442695
      %v866 = vpow.pop %v865
      %v867 = vmul.f32 %v850, 1.442695
      %v868 = vpow.pop %v867
      %v869 = vmul.f32 %v851, 1.442695
      %v870 = vpow.pop %v869
      %v871 = vmul.f32 %v852, 1.442695
      %v872 = vpow.pop %v871
      %v873 = vmul.f32 %v853, 1.442695
      %v874 = vpow.pop %v873
      %v875 = vmul.f32 %v854, 1.442695
      %v876 = vpow.pop %v875
      %v877 = vmul.f32 %v855, 1.442695
      %v878 = vpow.pop %v877
      %v879 = vmul.f32 %v856, 1.442695
      %v880 = vpow.pop %v879
      %v881 = vmul.f32 %v857, 1.442695
      %v882 = vpow.pop %v881
      %v883 = vmul.f32 %v858, 1.442695
      %v884 = vpow.pop %v883
      %v885 = vmul.f32 %v859, 1.442695
      %v886 = vpow.pop %v885
      %v887 = vmul.f32 %v860, 1.442695
      %v888 = vpow.pop %v887
      %v889 = vmul.f32 %v861, 1.442695
      %v890 = vpow.pop %v889
      %v891 = vmul.f32 %v862, 1.442695
      %v892 = vpow.pop %v891
      %v893 = vmul.f32 %v863, 1.442695
      %v894 = vpow.pop %v893
      %v895 = vmul.f32 %v864, 1.442695
      %v896 = vpow.pop %v895
      %v897 = vmul.f32 %v817, %v866
      %v898 = vmul.f32 %v818, %v868
      %v899 = vmul.f32 %v819, %v870
      %v900 = vmul.f32 %v820, %v872
      %v901 = vmul.f32 %v821, %v874
      %v902 = vmul.f32 %v822, %v876
      %v903 = vmul.f32 %v823, %v878
      %v904 = vmul.f32 %v824, %v880
      %v905 = vmul.f32 %v825, %v882
      %v906 = vmul.f32 %v826, %v884
      %v907 = vmul.f32 %v827, %v886
      %v908 = vmul.f32 %v828, %v888
      %v909 = vmul.f32 %v829, %v890
      %v910 = vmul.f32 %v830, %v892
      %v911 = vmul.f32 %v831, %v894
      %v912 = vmul.f32 %v832, %v896
      %v913 = vsub.f32 1.0, %v897
      %v914 = vsub.f32 1.0, %v898
      %v915 = vsub.f32 1.0, %v899
      %v916 = vsub.f32 1.0, %v900
      %v917 = vsub.f32 1.0, %v901
      %v918 = vsub.f32 1.0, %v902
      %v919 = vsub.f32 1.0, %v903
      %v920 = vsub.f32 1.0, %v904
      %v921 = vsub.f32 1.0, %v905
      %v922 = vsub.f32 1.0, %v906
      %v923 = vsub.f32 1.0, %v907
      %v924 = vsub.f32 1.0, %v908
      %v925 = vsub.f32 1.0, %v909
      %v926 = vsub.f32 1.0, %v910
      %v927 = vsub.f32 1.0, %v911
      %v928 = vsub.f32 1.0, %v912
      %v929 = vmul.f32 %v385, %v913
      %v930 = vmul.f32 %v386, %v914
      %v931 = vmul.f32 %v387, %v915
      %v932 = vmul.f32 %v388, %v916
      %v933 = vmul.f32 %v389, %v917
      %v934 = vmul.f32 %v390, %v918
      %v935 = vmul.f32 %v391, %v919
      %v936 = vmul.f32 %v392, %v920
      %v937 = vmul.f32 %v393, %v921
      %v938 = vmul.f32 %v394, %v922
      %v939 = vmul.f32 %v395, %v923
      %v940 = vmul.f32 %v396, %v924
      %v941 = vmul.f32 %v397, %v925
      %v942 = vmul.f32 %v398, %v926
      %v943 = vmul.f32 %v399, %v927
      %v944 = vmul.f32 %v400, %v928
      %v945 = vadd.f32 %v929, 1.0
      %v946 = vadd.f32 %v930, 1.0
      %v947 = vadd.f32 %v931, 1.0
      %v948 = vadd.f32 %v932, 1.0
      %v949 = vadd.f32 %v933, 1.0
      %v950 = vadd.f32 %v934, 1.0
      %v951 = vadd.f32 %v935, 1.0
      %v952 = vadd.f32 %v936, 1.0
      %v953 = vadd.f32 %v937, 1.0
      %v954 = vadd.f32 %v938, 1.0
      %v955 = vadd.f32 %v939, 1.0
      %v956 = vadd.f32 %v940, 1.0
      %v957 = vadd.f32 %v941, 1.0
      %v958 = vadd.f32 %v942, 1.0
      %v959 = vadd.f32 %v943, 1.0
      %v960 = vadd.f32 %v944, 1.0
      %v961 = vmul.f32 %v337, %v945
      %v962 = vmul.f32 %v338, %v946
      %v963 = vmul.f32 %v339, %v947
      %v964 = vmul.f32 %v340, %v948
      %v965 = vmul.f32 %v341, %v949
      %v966 = vmul.f32 %v342, %v950
      %v967 = vmul.f32 %v343, %v951
      %v968 = vmul.f32 %v344, %v952
      %v969 = vmul.f32 %v345, %v953
      %v970 = vmul.f32 %v346, %v954
      %v971 = vmul.f32 %v347, %v955
      %v972 = vmul.f32 %v348, %v956
      %v973 = vmul.f32 %v349, %v957
      %v974 = vmul.f32 %v350, %v958
      %v975 = vmul.f32 %v351, %v959
      %v976 = vmul.f32 %v352, %v960
      %v977 = vld [vmem:[%s268] sm:$0xff]
      %v978 = vld [vmem:[%s268 + $0x8] sm:$0xff]
      %v979 = vld [vmem:[%s268 + $0x10] sm:$0xff]
      %v980 = vld [vmem:[%s268 + $0x18] sm:$0xff]
      %v981 = vld [vmem:[%s268 + $0x20] sm:$0xff]
      %v982 = vld [vmem:[%s268 + $0x28] sm:$0xff]
      %v983 = vld [vmem:[%s268 + $0x30] sm:$0xff]
      %v984 = vld [vmem:[%s268 + $0x38] sm:$0xff]
      %v985 = vld [vmem:[%s268 + $0x40] sm:$0xff]
      %v986 = vld [vmem:[%s268 + $0x48] sm:$0xff]
      %v987 = vld [vmem:[%s268 + $0x50] sm:$0xff]
      %v988 = vld [vmem:[%s268 + $0x58] sm:$0xff]
      %v989 = vld [vmem:[%s268 + $0x60] sm:$0xff]
      %v990 = vld [vmem:[%s268 + $0x68] sm:$0xff]
      %v991 = vld [vmem:[%s268 + $0x70] sm:$0xff]
      %v992 = vld [vmem:[%s268 + $0x78] sm:$0xff]
      %v993 = vadd.f32 %v961, %v977
      %v994 = vadd.f32 %v962, %v978
      %v995 = vadd.f32 %v963, %v979
      %v996 = vadd.f32 %v964, %v980
      %v997 = vadd.f32 %v965, %v981
      %v998 = vadd.f32 %v966, %v982
      %v999 = vadd.f32 %v967, %v983
      %v1000 = vadd.f32 %v968, %v984
      %v1001 = vadd.f32 %v969, %v985
      %v1002 = vadd.f32 %v970, %v986
      %v1003 = vadd.f32 %v971, %v987
      %v1004 = vadd.f32 %v972, %v988
      %v1005 = vadd.f32 %v973, %v989
      %v1006 = vadd.f32 %v974, %v990
      %v1007 = vadd.f32 %v975, %v991
      %v1008 = vadd.f32 %v976, %v992
      %1009 = vst [vmem:[%s279] sm:$0xff] %v993
      %1010 = vst [vmem:[%s279 + $0x8] sm:$0xff] %v994
      %1011 = vst [vmem:[%s279 + $0x10] sm:$0xff] %v995
      %1012 = vst [vmem:[%s279 + $0x18] sm:$0xff] %v996
      %1013 = vst [vmem:[%s279 + $0x20] sm:$0xff] %v997
      %1014 = vst [vmem:[%s279 + $0x28] sm:$0xff] %v998
      %1015 = vst [vmem:[%s279 + $0x30] sm:$0xff] %v999
      %1016 = vst [vmem:[%s279 + $0x38] sm:$0xff] %v1000
      %1017 = vst [vmem:[%s279 + $0x40] sm:$0xff] %v1001
      %1018 = vst [vmem:[%s279 + $0x48] sm:$0xff] %v1002
      %1019 = vst [vmem:[%s279 + $0x50] sm:$0xff] %v1003
      %1020 = vst [vmem:[%s279 + $0x58] sm:$0xff] %v1004
      %1021 = vst [vmem:[%s279 + $0x60] sm:$0xff] %v1005
      %1022 = vst [vmem:[%s279 + $0x68] sm:$0xff] %v1006
      %1023 = vst [vmem:[%s279 + $0x70] sm:$0xff] %v1007
      %1024 = vst [vmem:[%s279 + $0x78] sm:$0xff] %v1008
      %s1025 = smul.u32 8, %s20
      %p1026 = scmp.lt.s32.totalorder %s19, 1
      %s1027 = scalar_select %p1026, %s19, 1
      %p1028 = scmp.lt.s32.totalorder %s1025, 15
      %s1029 = scalar_select %p1028, %s1025, 15
      %s1030 = smul.addr %s1029, 2
      %s1031 = smul.addr %s1027, 32
      %s1032 = sadd.s32 %s1030, %s1031
      %s1033 = smul.addr %s1032, 8
      %s1034 = scalar_lea.vmem %s4, %s1033
      // Predicated region
      $region37: #{unet_double_up.11} parent=35 // pred_check
        %p1035 = pneg %p145
      $region38: #{unet_double_up.11} parent=35 // pred_check_branch
        %1037 = sbr.rel (%p1035) target = $region40
      $region39: #{unet_double_up.11} parent=35 // pred_region
        %s1038 = smul.u32 8, %s20
      $region40: #{unet_double_up.11} parent=35 // pred_fallthru
        _
    $region36: #{unet_double_up.11} parent=5 // pred_fallthru
      _
    %p1039 = scmp.le.s32.totalorder 2, %s10
    // Predicated region
    $region41: #{unet_double_up.11} parent=5 // pred_check
      %p1040 = pneg %p1039
    $region42: #{unet_double_up.11} parent=5 // pred_check_branch
      %1042 = sbr.rel (%p1040) target = $region44
    $region43: #{unet_double_up.11} parent=5 // pred_region
      %s1043 = ssub.s32 %s10, 2
      // Predicated region
      $region45: #{unet_double_up.11} parent=43 // pred_check
        %p1044 = pneg %p151
      $region46: #{unet_double_up.11} parent=43 // pred_check_branch
        %1046 = sbr.rel (%p1044) target = $region48
      $region47: #{unet_double_up.11} parent=43 // pred_region
        %s1047 = smul.u32 8, %s22
        %p1048 = scmp.lt.s32.totalorder %s21, 1
        %s1049 = scalar_select %p1048, %s21, 1
        %p1050 = scmp.lt.s32.totalorder %s1047, 15
        %s1051 = scalar_select %p1050, %s1047, 15
        %s1052 = smul.addr %s1051, 2
        %s1053 = smul.addr %s1049, 32
        %s1054 = sadd.s32 %s1052, %s1053
        %s1055 = smul.addr %s1054, 8
        %s1056 = scalar_lea.vmem %s4, %s1055
      $region48: #{unet_double_up.11} parent=43 // pred_fallthru
        _
    $region44: #{unet_double_up.11} parent=5 // pred_fallthru
      _
  $region6: #{unet_double_up.11} parent=0 // loop_footer
    %s14 = sadd.s32 1, %s10
  $region7: #{unet_double_up.11} parent=0 // loop_footer_branch
    %9 = sbr.rel target = $region3
  $region8: #{unet_double_up.11} parent=0 // loop_exit
    _

// kernel: unet_double_up.8
$region0: #{unet_double_up.8}
  #allocation0 [shape = 'u32[]', space=smem, size = 0x4, offset = 0x4, fixed_abs, tag = 'smem constant byte address 0x4 - core index']
  #allocation1 [shape = 'u32[72,128]{1,0:T(1,128)}', space=vmem, size = 0x9000, scoped, tag = 'internal scratch']
  #allocation2 [shape = 'bf16[10,18,128]{2,1,0:T(8,128)(2,1)}', space=vmem, size = 0xf000, scoped, tag = 'scratch operand']
  #allocation3 [shape = 'bf16[8,16,1152]{2,1,0:T(8,128)(2,1)}', space=vmem, size = 0x48000, scoped, tag = 'scratch operand']
  %s0 = inlined_call_operand.vmem [shape: f32[2,24,18,128], index: 0, kind: input, shape index: {}, may-alias: {0,1}]
  %s1 = inlined_call_operand.vmem [shape: f32[2,24,18,128], index: 1, kind: input, shape index: {}, may-alias: {0,1}]
  %s2 = inlined_call_operand.vmem [shape: bf16[1152,128], index: 2, kind: input, shape index: {}]
  %s3 = inlined_call_operand.vmem [shape: f32[2,16,16,128], index: 3, kind: output, shape index: {0}]
  %s4 = inlined_call_operand.vmem [shape: f32[2,2,8,128], index: 4, kind: output, shape index: {1}]
  %5 = xla_tuple %s3, %s4
  %s6 = sld [smem:[#allocation0]]
  $region53: #{unet_double_up.8} parent=0
    _
  %s8 = ssub.s32 1, %s6
  %s9 = scalar_select 0, %s8, %s6
  loop: start=0, step=1, limit=6
  $region2: #{unet_double_up.8} parent=0 // loop_pre_header
    _
  $region3: #{unet_double_up.8} parent=0 // loop_header
    %s11 = sphi 0, %s15
    %p12 = scmp.ge.s32.totalorder %s11, 6
    %s18 = sphi 0, %s30
    %s19 = sphi 0, %s26
    %s20 = sphi 0, %s18
    %s21 = sphi 0, %s19
    %s22 = sphi 0, %s20
    %s23 = sphi 0, %s21
    %s35 = sphi 0, %s37
    %s38 = sphi 0, %s35
    %s39 = sphi 0, %s38
    %s55 = sphi 0, %s39
    %s67 = sphi 0, %s69
    %s70 = sphi 0, %s67
    %s71 = sphi 0, %s70
    %s87 = sphi 0, %s71
    %s91 = sphi 0, %s91
    %s93 = sphi 0, %s91
    %s94 = sphi 0, %s93
    %s108 = sphi 0, %s94
    %s116 = sphi 0, %s118
    %s119 = sphi 0, %s116
    %s120 = sphi 0, %s119
    %s136 = sphi 0, %s120
    %s144 = sphi 0, %s146
    %s147 = sphi 0, %s144
    %s148 = sphi 0, %s147
    %s164 = sphi 0, %s148
  $region4: #{unet_double_up.8} parent=0 // loop_header_branch
    %14 = sbr.rel (%p12) target = $region8
  $region5: #{unet_double_up.8} parent=0 // loop_body
    %s16 = ssub.s32 %s11, 1
    %s17 = ssub.s32 %s11, 2
    %s24 = sadd.s32 1, %s19
    %p25 = scmp.ge.s32.totalorder %s24, 2
    %s26 = scalar_select %p25, 0, %s24
    %s27 = sadd.s32 1, %s18
    %s28 = scalar_select %p25, %s27, %s18
    %p29 = scmp.ge.s32.totalorder %s28, 2
    %s30 = scalar_select %p29, 0, %s28
    %s31 = ssub.s32 %s18, %s30
    %s32 = ssub.s32 %s19, %s26
    %s33 = sor.u32 %s31, %s32
    %p34 = scmp.eq.s32.totalorder %s33, 0
    %s36 = sadd.s32 %s35, 1
    %s37 = scalar_select %p34, %s35, %s36
    %p40 = pneg %p34
    %p41 = scmp.eq.s32.totalorder %s11, 3
    %p42 = por %p40, %p41
    %p43 = scmp.ne.s32.totalorder %s35, %s38
    %p44 = scmp.eq.s32.totalorder %s11, 0
    %p45 = por %p43, %p44
    %p46 = scmp.ne.s32.totalorder %s35, %s38
    %p47 = scmp.eq.s32.totalorder %s16, 3
    %p48 = por %p46, %p47
    %p49 = scmp.ne.s32.totalorder %s38, %s39
    %p50 = scmp.eq.s32.totalorder %s16, 0
    %p51 = por %p49, %p50
    %p52 = scmp.ne.s32.totalorder %s38, %s39
    %p53 = scmp.eq.s32.totalorder %s17, 3
    %p54 = por %p52, %p53
    %p56 = scmp.ne.s32.totalorder %s39, %s55
    %p57 = scmp.eq.s32.totalorder %s17, 0
    %p58 = por %p56, %p57
    %s59 = sadd.s32 %s19, 1
    %s60 = smul.u32 %s59, 4
    %s61 = sadd.s32 %s26, 1
    %s62 = smul.u32 %s61, 4
    %s63 = ssub.s32 %s18, %s30
    %s64 = ssub.s32 %s60, %s62
    %s65 = sor.u32 %s63, %s64
    %p66 = scmp.eq.s32.totalorder %s65, 0
    %s68 = sadd.s32 %s67, 1
    %s69 = scalar_select %p66, %s67, %s68
    %p72 = pneg %p66
    %p73 = scmp.eq.s32.totalorder %s11, 3
    %p74 = por %p72, %p73
    %p75 = scmp.ne.s32.totalorder %s67, %s70
    %p76 = scmp.eq.s32.totalorder %s11, 0
    %p77 = por %p75, %p76
    %p78 = scmp.ne.s32.totalorder %s67, %s70
    %p79 = scmp.eq.s32.totalorder %s16, 3
    %p80 = por %p78, %p79
    %p81 = scmp.ne.s32.totalorder %s70, %s71
    %p82 = scmp.eq.s32.totalorder %s16, 0
    %p83 = por %p81, %p82
    %p84 = scmp.ne.s32.totalorder %s70, %s71
    %p85 = scmp.eq.s32.totalorder %s17, 3
    %p86 = por %p84, %p85
    %p88 = scmp.ne.s32.totalorder %s71, %s87
    %p89 = scmp.eq.s32.totalorder %s17, 0
    %p90 = por %p88, %p89
    %s92 = sadd.s32 %s91, 1
    %p95 = scmp.eq.s32.totalorder %s11, 3
    %p96 = scmp.ne.s32.totalorder %s91, %s93
    %p97 = scmp.eq.s32.totalorder %s11, 0
    %p98 = por %p96, %p97
    %p99 = scmp.ne.s32.totalorder %s91, %s93
    %p100 = scmp.eq.s32.totalorder %s16, 3
    %p101 = por %p99, %p100
    %p102 = scmp.ne.s32.totalorder %s93, %s94
    %p103 = scmp.eq.s32.totalorder %s16, 0
    %p104 = por %p102, %p103
    %p105 = scmp.ne.s32.totalorder %s93, %s94
    %p106 = scmp.eq.s32.totalorder %s17, 3
    %p107 = por %p105, %p106
    %p109 = scmp.ne.s32.totalorder %s94, %s108
    %p110 = scmp.eq.s32.totalorder %s17, 0
    %p111 = por %p109, %p110
    %s112 = ssub.s32 %s18, %s30
    %s113 = ssub.s32 %s19, %s26
    %s114 = sor.u32 %s112, %s113
    %p115 = scmp.eq.s32.totalorder %s114, 0
    %s117 = sadd.s32 %s116, 1
    %s118 = scalar_select %p115, %s116, %s117
    %p121 = pneg %p115
    %p122 = scmp.eq.s32.totalorder %s11, 3
    %p123 = por %p121, %p122
    %p124 = scmp.ne.s32.totalorder %s116, %s119
    %p125 = scmp.eq.s32.totalorder %s11, 0
    %p126 = por %p124, %p125
    %p127 = scmp.ne.s32.totalorder %s116, %s119
    %p128 = scmp.eq.s32.totalorder %s16, 3
    %p129 = por %p127, %p128
    %p130 = scmp.ne.s32.totalorder %s119, %s120
    %p131 = scmp.eq.s32.totalorder %s16, 0
    %p132 = por %p130, %p131
    %p133 = scmp.ne.s32.totalorder %s119, %s120
    %p134 = scmp.eq.s32.totalorder %s17, 3
    %p135 = por %p133, %p134
    %p137 = scmp.ne.s32.totalorder %s120, %s136
    %p138 = scmp.eq.s32.totalorder %s17, 0
    %p139 = por %p137, %p138
    %s140 = ssub.s32 %s18, %s30
    %s141 = ssub.s32 %s19, %s26
    %s142 = sor.u32 %s140, %s141
    %p143 = scmp.eq.s32.totalorder %s142, 0
    %s145 = sadd.s32 %s144, 1
    %s146 = scalar_select %p143, %s144, %s145
    %p149 = pneg %p143
    %p150 = scmp.eq.s32.totalorder %s11, 3
    %p151 = por %p149, %p150
    %p152 = scmp.ne.s32.totalorder %s144, %s147
    %p153 = scmp.eq.s32.totalorder %s11, 0
    %p154 = por %p152, %p153
    %p155 = scmp.ne.s32.totalorder %s144, %s147
    %p156 = scmp.eq.s32.totalorder %s16, 3
    %p157 = por %p155, %p156
    %p158 = scmp.ne.s32.totalorder %s147, %s148
    %p159 = scmp.eq.s32.totalorder %s16, 0
    %p160 = por %p158, %p159
    %p161 = scmp.ne.s32.totalorder %s147, %s148
    %p162 = scmp.eq.s32.totalorder %s17, 3
    %p163 = por %p161, %p162
    %p165 = scmp.ne.s32.totalorder %s148, %s164
    %p166 = scmp.eq.s32.totalorder %s17, 0
    %p167 = por %p165, %p166
    %p168 = scmp.le.s32.totalorder 1, %s11
    %p169 = scmp.lt.s32.totalorder %s11, 5
    %p170 = pnand %p168, %p169
    %p171 = pneg %p170
    // Predicated region
    $region9: #{unet_double_up.8} parent=5 // pred_check
      _
    $region10: #{unet_double_up.8} parent=5 // pred_check_branch
      %173 = sbr.rel (%p170) target = $region12
    $region11: #{unet_double_up.8} parent=5 // pred_region
      %s174 = ssub.s32 %s11, 1
      // Predicated region
      $region13: #{unet_double_up.8} parent=11 // pred_check
        %p175 = pneg %p104
      $region14: #{unet_double_up.8} parent=11 // pred_check_branch
        %177 = sbr.rel (%p175) target = $region16
      $region15: #{unet_double_up.8} parent=11 // pred_region
        _
      $region16: #{unet_double_up.8} parent=11 // pred_fallthru
        _
    $region12: #{unet_double_up.8} parent=5 // pred_fallthru
      _
    %p178 = scmp.lt.s32.totalorder %s11, 4
    // Predicated region
    $region17: #{unet_double_up.8} parent=5 // pred_check
      %p179 = pneg %p178
    $region18: #{unet_double_up.8} parent=5 // pred_check_branch
      %181 = sbr.rel (%p179) target = $region20
    $region19: #{unet_double_up.8} parent=5 // pred_region
      // Predicated region
      $region21: #{unet_double_up.8} parent=19 // pred_check
        %p182 = pneg %p45
      $region22: #{unet_double_up.8} parent=19 // pred_check_branch
        %184 = sbr.rel (%p182) target = $region24
      $region23: #{unet_double_up.8} parent=19 // pred_region
        %s185 = smul.u32 8, %s19
        %p186 = scmp.lt.s32.totalorder %s18, 1
        %s187 = scalar_select %p186, %s18, 1
        %p188 = scmp.lt.s32.totalorder %s185, 23
        %s189 = scalar_select %p188, %s185, 23
        %s190 = smul.addr %s189, 3
        %s191 = smul.addr %s187, 72
        %s192 = sadd.s32 %s190, %s191
        %s193 = smul.addr %s192, 8
        %s194 = scalar_lea.vmem %s0, %s193
        %s195 = smul.u32 8, %s19
      $region24: #{unet_double_up.8} parent=19 // pred_fallthru
        _
      // Predicated region
      $region25: #{unet_double_up.8} parent=19 // pred_check
        %p196 = pneg %p77
      $region26: #{unet_double_up.8} parent=19 // pred_check_branch
        %198 = sbr.rel (%p196) target = $region28
      $region27: #{unet_double_up.8} parent=19 // pred_region
        %s199 = sadd.s32 %s19, 1
        %s200 = smul.u32 %s199, 4
        %s201 = smul.u32 2, %s200
        %p202 = scmp.lt.s32.totalorder %s18, 1
        %s203 = scalar_select %p202, %s18, 1
        %p204 = scmp.lt.s32.totalorder %s201, 23
        %s205 = scalar_select %p204, %s201, 23
        %s206 = smul.addr %s205, 3
        %s207 = smul.addr %s203, 72
        %s208 = sadd.s32 %s206, %s207
        %s209 = smul.addr %s208, 8
        %s210 = scalar_lea.vmem %s1, %s209
        %s211 = sadd.s32 %s19, 1
        %s212 = smul.u32 %s211, 4
        %s213 = smul.u32 2, %s212
      $region28: #{unet_double_up.8} parent=19 // pred_fallthru
        _
    $region20: #{unet_double_up.8} parent=5 // pred_fallthru
      _
    %p214 = scmp.le.s32.totalorder 1, %s11
    %p215 = scmp.lt.s32.totalorder %s11, 5
    %p216 = pnand %p214, %p215
    %p217 = pneg %p216
    // Predicated region
    $region29: #{unet_double_up.8} parent=5 // pred_check
      _
    $region30: #{unet_double_up.8} parent=5 // pred_check_branch
      %219 = sbr.rel (%p216) target = $region32
    $region31: #{unet_double_up.8} parent=5 // pred_region
      %s220 = ssub.s32 %s11, 1
      %s221 = smul.u32 8, %s21
      %p222 = scmp.lt.s32.totalorder %s20, 1
      %s223 = scalar_select %p222, %s20, 1
      %p224 = scmp.lt.s32.totalorder %s221, 23
      %s225 = scalar_select %p224, %s221, 23
      %s226 = smul.addr %s225, 3
      %s227 = smul.addr %s223, 72
      %s228 = sadd.s32 %s226, %s227
      %s229 = smul.addr %s228, 8
      %s230 = scalar_lea.vmem %s0, %s229
      %p231 = pneg %p51
      %p232 = pneg %p48
      %s233 = sadd.s32 %s21, 1
      %s234 = smul.u32 %s233, 4
      %s235 = smul.u32 2, %s234
      %p236 = scmp.lt.s32.totalorder %s20, 1
      %s237 = scalar_select %p236, %s20, 1
      %p238 = scmp.lt.s32.totalorder %s235, 23
      %s239 = scalar_select %p238, %s235, 23
      %s240 = smul.addr %s239, 3
      %s241 = smul.addr %s237, 72
      %s242 = sadd.s32 %s240, %s241
      %s243 = smul.addr %s242, 8
      %s244 = scalar_lea.vmem %s1, %s243
      %p245 = pneg %p83
      %p246 = pneg %p80
      %p247 = pneg %p104
      %p248 = pneg %p101
      %p249 = pneg %p132
      %p250 = pneg %p129
      %s251 = smul.u32 8, %s21
      %p252 = scmp.lt.s32.totalorder %s20, 1
      %s253 = scalar_select %p252, %s20, 1
      %p254 = scmp.lt.s32.totalorder %s251, 15
      %s255 = scalar_select %p254, %s251, 15
      %s256 = smul.addr %s255, 2
      %s257 = smul.addr %s253, 32
      %s258 = sadd.s32 %s256, %s257
      %s259 = smul.addr %s258, 8
      %s260 = scalar_lea.vmem %s3, %s259
      %p261 = pneg %p160
      %p262 = pneg %p157
      %p263 = scmp.lt.s32.totalorder %s20, 1
      %s264 = scalar_select %p263, %s20, 1
      %p265 = scmp.lt.s32.totalorder %s21, 1
      %s266 = scalar_select %p265, %s21, 1
      %s267 = smul.addr %s264, 2
      %s268 = sadd.s32 %s266, %s267
      %s269 = smul.addr %s268, 8
      %s270 = scalar_lea.vmem %s4, %s269
      %s271 = smul.u32 8, %s21
      %p272 = scmp.lt.s32.totalorder %s20, 1
      %s273 = scalar_select %p272, %s20, 1
      %p274 = scmp.lt.s32.totalorder %s271, 23
      %s275 = scalar_select %p274, %s271, 23
      %s276 = smul.addr %s275, 3
      %s277 = smul.addr %s273, 72
      %s278 = sadd.s32 %s276, %s277
      %s279 = smul.addr %s278, 8
      %s280 = scalar_lea.vmem %s0, %s279
      %s281 = smul.u32 8, %s21
      %s282 = sadd.s32 %s21, 1
      %s283 = smul.u32 %s282, 4
      %s284 = smul.u32 2, %s283
      %p285 = scmp.lt.s32.totalorder %s20, 1
      %s286 = scalar_select %p285, %s20, 1
      %p287 = scmp.lt.s32.totalorder %s284, 23
      %s288 = scalar_select %p287, %s284, 23
      %s289 = smul.addr %s288, 3
      %s290 = smul.addr %s286, 72
      %s291 = sadd.s32 %s289, %s290
      %s292 = smul.addr %s291, 8
      %s293 = scalar_lea.vmem %s1, %s292
      %s294 = sadd.s32 %s21, 1
      %s295 = smul.u32 %s294, 4
      %s296 = smul.u32 2, %s295
      %s297 = smul.u32 8, %s21
      %p298 = scmp.lt.s32.totalorder %s20, 1
      %s299 = scalar_select %p298, %s20, 1
      %p300 = scmp.lt.s32.totalorder %s297, 15
      %s301 = scalar_select %p300, %s297, 15
      %s302 = smul.addr %s301, 2
      %s303 = smul.addr %s299, 32
      %s304 = sadd.s32 %s302, %s303
      %s305 = smul.addr %s304, 8
      %s306 = scalar_lea.vmem %s3, %s305
      %s307 = smul.u32 8, %s21
      %p308 = scmp.lt.s32.totalorder %s20, 1
      %s309 = scalar_select %p308, %s20, 1
      %p310 = scmp.lt.s32.totalorder %s21, 1
      %s311 = scalar_select %p310, %s21, 1
      %s312 = smul.addr %s309, 2
      %s313 = sadd.s32 %s311, %s312
      %s314 = smul.addr %s313, 8
      %s315 = scalar_lea.vmem %s4, %s314
      %v316 = vld [vmem:[%s280] sm:$0xff]
      %v317 = vld [vmem:[%s280 + $0x8] sm:$0xff]
      %v318 = vld [vmem:[%s280 + $0x10] sm:$0x3]
      %v319 = vld [vmem:[%s280 + $0x18] sm:$0xff]
      %v320 = vld [vmem:[%s280 + $0x20] sm:$0xff]
      %v321 = vld [vmem:[%s280 + $0x28] sm:$0x3]
      %v322 = vld [vmem:[%s280 + $0x30] sm:$0xff]
      %v323 = vld [vmem:[%s280 + $0x38] sm:$0xff]
      %v324 = vld [vmem:[%s280 + $0x40] sm:$0x3]
      %v325 = vld [vmem:[%s280 + $0x48] sm:$0xff]
      %v326 = vld [vmem:[%s280 + $0x50] sm:$0xff]
      %v327 = vld [vmem:[%s280 + $0x58] sm:$0x3]
      %v328 = vld [vmem:[%s280 + $0x60] sm:$0xff]
      %v329 = vld [vmem:[%s280 + $0x68] sm:$0xff]
      %v330 = vld [vmem:[%s280 + $0x70] sm:$0x3]
      %v331 = vld [vmem:[%s280 + $0x78] sm:$0xff]
      %v332 = vld [vmem:[%s280 + $0x80] sm:$0xff]
      %v333 = vld [vmem:[%s280 + $0x88] sm:$0x3]
      %v334 = vld [vmem:[%s280 + $0x90] sm:$0xff]
      %v335 = vld [vmem:[%s280 + $0x98] sm:$0xff]
      %v336 = vld [vmem:[%s280 + $0xa0] sm:$0x3]
      %v337 = vld [vmem:[%s280 + $0xa8] sm:$0xff]
      %v338 = vld [vmem:[%s280 + $0xb0] sm:$0xff]
      %v339 = vld [vmem:[%s280 + $0xb8] sm:$0x3]
      %v340 = vpack.c.bf16 %v316, %v316
      %v341 = vpack.c.bf16 %v317, %v317
      %v342 = vpack.c.bf16 %v318, %v318
      %v343 = vpack.c.bf16 %v319, %v319
      %v344 = vpack.c.bf16 %v320, %v320
      %v345 = vpack.c.bf16 %v321, %v321
      %v346 = vpack.c.bf16 %v322, %v322
      %v347 = vpack.c.bf16 %v323, %v323
      %v348 = vpack.c.bf16 %v324, %v324
      %v349 = vpack.c.bf16 %v325, %v325
      %v350 = vpack.c.bf16 %v326, %v326
      %v351 = vpack.c.bf16 %v327, %v327
      %v352 = vpack.c.bf16 %v328, %v328
      %v353 = vpack.c.bf16 %v329, %v329
      %v354 = vpack.c.bf16 %v330, %v330
      %v355 = vpack.c.bf16 %v331, %v331
      %v356 = vpack.c.bf16 %v332, %v332
      %v357 = vpack.c.bf16 %v333, %v333
      %v358 = vpack.c.bf16 %v334, %v334
      %v359 = vpack.c.bf16 %v335, %v335
      %v360 = vpack.c.bf16 %v336, %v336
      %v361 = vpack.c.bf16 %v337, %v337
      %v362 = vpack.c.bf16 %v338, %v338
      %v363 = vpack.c.bf16 %v339, %v339
      %364 = vst [vmem:[#allocation2] sm:$0xf] %v340
      %365 = vst [vmem:[#allocation2 + $0x4] sm:$0xf] %v341
      %366 = vst [vmem:[#allocation2 + $0x8] sm:$0x1] %v342
      %367 = vst [vmem:[#allocation2 + $0xc] sm:$0xf] %v343
      %368 = vst [vmem:[#allocation2 + $0x10] sm:$0xf] %v344
      %369 = vst [vmem:[#allocation2 + $0x14] sm:$0x1] %v345
      %370 = vst [vmem:[#allocation2 + $0x18] sm:$0xf] %v346
      %371 = vst [vmem:[#allocation2 + $0x1c] sm:$0xf] %v347
      %372 = vst [vmem:[#allocation2 + $0x20] sm:$0x1] %v348
      %373 = vst [vmem:[#allocation2 + $0x24] sm:$0xf] %v349
      %374 = vst [vmem:[#allocation2 + $0x28] sm:$0xf] %v350
      %375 = vst [vmem:[#allocation2 + $0x2c] sm:$0x1] %v351
      %376 = vst [vmem:[#allocation2 + $0x30] sm:$0xf] %v352
      %377 = vst [vmem:[#allocation2 + $0x34] sm:$0xf] %v353
      %378 = vst [vmem:[#allocation2 + $0x38] sm:$0x1] %v354
      %379 = vst [vmem:[#allocation2 + $0x3c] sm:$0xf] %v355
      %380 = vst [vmem:[#allocation2 + $0x40] sm:$0xf] %v356
      %381 = vst [vmem:[#allocation2 + $0x44] sm:$0x1] %v357
      %382 = vst [vmem:[#allocation2 + $0x48] sm:$0xf] %v358
      %383 = vst [vmem:[#allocation2 + $0x4c] sm:$0xf] %v359
      %384 = vst [vmem:[#allocation2 + $0x50] sm:$0x1] %v360
      %385 = vst [vmem:[#allocation2 + $0x54] sm:$0xf] %v361
      %386 = vst [vmem:[#allocation2 + $0x58] sm:$0xf] %v362
      %387 = vst [vmem:[#allocation2 + $0x5c] sm:$0x1] %v363
      %v388 = vld [vmem:[%s293] sm:$0xff]
      %v389 = vld [vmem:[%s293 + $0x8] sm:$0xff]
      %v390 = vld [vmem:[%s293 + $0x10] sm:$0x3]
      %v391 = vld [vmem:[%s293 + $0x18] sm:$0xff]
      %v392 = vld [vmem:[%s293 + $0x20] sm:$0xff]
      %v393 = vld [vmem:[%s293 + $0x28] sm:$0x3]
      %v394 = vpack.c.bf16 %v388, %v388
      %v395 = vpack.c.bf16 %v389, %v389
      %v396 = vpack.c.bf16 %v390, %v390
      %v397 = vpack.c.bf16 %v391, %v391
      %v398 = vpack.c.bf16 %v392, %v392
      %v399 = vpack.c.bf16 %v393, %v393
      %s400 = scalar_lea.vmem [#allocation2], 96
      %401 = vst [vmem:[%s400] sm:$0xf] %v394
      %402 = vst [vmem:[%s400 + $0x4] sm:$0xf] %v395
      %403 = vst [vmem:[%s400 + $0x8] sm:$0x1] %v396
      %404 = vst [vmem:[%s400 + $0xc] sm:$0xf] %v397
      %405 = vst [vmem:[%s400 + $0x10] sm:$0xf] %v398
      %406 = vst [vmem:[%s400 + $0x14] sm:$0x1] %v399
      %v407 = vld [vmem:[#allocation2] sm:$0xf]
      %v408 = vld [vmem:[#allocation2 + $0x4] sm:$0xf]
      %v409 = vld [vmem:[#allocation2 + $0xc] sm:$0xf]
      %v410 = vld [vmem:[#allocation2 + $0x10] sm:$0xf]
      %v411 = vld [vmem:[#allocation2 + $0x18] sm:$0xf]
      %v412 = vld [vmem:[#allocation2 + $0x1c] sm:$0xf]
      %v413 = vld [vmem:[#allocation2 + $0x24] sm:$0xf]
      %v414 = vld [vmem:[#allocation2 + $0x28] sm:$0xf]
      %v415 = vld [vmem:[#allocation2 + $0x30] sm:$0xf]
      %v416 = vld [vmem:[#allocation2 + $0x34] sm:$0xf]
      %v417 = vld [vmem:[#allocation2 + $0x3c] sm:$0xf]
      %v418 = vld [vmem:[#allocation2 + $0x40] sm:$0xf]
      %v419 = vld [vmem:[#allocation2 + $0x48] sm:$0xf]
      %v420 = vld [vmem:[#allocation2 + $0x4c] sm:$0xf]
      %v421 = vld [vmem:[#allocation2 + $0x54] sm:$0xf]
      %v422 = vld [vmem:[#allocation2 + $0x58] sm:$0xf]
      %423 = vst [vmem:[#allocation3] sm:$0xf] %v407
      %424 = vst [vmem:[#allocation3 + $0x24] sm:$0xf] %v408
      %425 = vst [vmem:[#allocation3 + $0x48] sm:$0xf] %v409
      %426 = vst [vmem:[#allocation3 + $0x6c] sm:$0xf] %v410
      %427 = vst [vmem:[#allocation3 + $0x90] sm:$0xf] %v411
      %428 = vst [vmem:[#allocation3 + $0xb4] sm:$0xf] %v412
      %429 = vst [vmem:[#allocation3 + $0xd8] sm:$0xf] %v413
      %430 = vst [vmem:[#allocation3 + $0xfc] sm:$0xf] %v414
      %431 = vst [vmem:[#allocation3 + $0x120] sm:$0xf] %v415
      %432 = vst [vmem:[#allocation3 + $0x144] sm:$0xf] %v416
      %433 = vst [vmem:[#allocation3 + $0x168] sm:$0xf] %v417
      %434 = vst [vmem:[#allocation3 + $0x18c] sm:$0xf] %v418
      %435 = vst [vmem:[#allocation3 + $0x1b0] sm:$0xf] %v419
      %436 = vst [vmem:[#allocation3 + $0x1d4] sm:$0xf] %v420
      %437 = vst [vmem:[#allocation3 + $0x1f8] sm:$0xf] %v421
      %438 = vst [vmem:[#allocation3 + $0x21c] sm:$0xf] %v422
      %v439 = vld [vmem:[#allocation2] sm:$0xf]
      %v440 = vld [vmem:[#allocation2 + $0x4] sm:$0xf]
      %v441 = vld [vmem:[#allocation2 + $0x8] sm:$0x1]
      %v442 = vld [vmem:[#allocation2 + $0xc] sm:$0xf]
      %v443 = vld [vmem:[#allocation2 + $0x10] sm:$0xf]
      %v444 = vld [vmem:[#allocation2 + $0x14] sm:$0x1]
      %v445 = vld [vmem:[#allocation2 + $0x18] sm:$0xf]
      %v446 = vld [vmem:[#allocation2 + $0x1c] sm:$0xf]
      %v447 = vld [vmem:[#allocation2 + $0x20] sm:$0x1]
      %v448 = vld [vmem:[#allocation2 + $0x24] sm:$0xf]
      %v449 = vld [vmem:[#allocation2 + $0x28] sm:$0xf]
      %v450 = vld [vmem:[#allocation2 + $0x2c] sm:$0x1]
      %v451 = vld [vmem:[#allocation2 + $0x30] sm:$0xf]
      %v452 = vld [vmem:[#allocation2 + $0x34] sm:$0xf]
      %v453 = vld [vmem:[#allocation2 + $0x38] sm:$0x1]
      %v454 = vld [vmem:[#allocation2 + $0x3c] sm:$0xf]
      %v455 = vld [vmem:[#allocation2 + $0x40] sm:$0xf]
      %v456 = vld [vmem:[#allocation2 + $0x44] sm:$0x1]
      %v457 = vld [vmem:[#allocation2 + $0x48] sm:$0xf]
      %v458 = vld [vmem:[#allocation2 + $0x4c] sm:$0xf]
      %v459 = vld [vmem:[#allocation2 + $0x50] sm:$0x1]
      %v460 = vld [vmem:[#allocation2 + $0x54] sm:$0xf]
      %v461 = vld [vmem:[#allocation2 + $0x58] sm:$0xf]
      %v462 = vld [vmem:[#allocation2 + $0x5c] sm:$0x1]
      %vm463 = vsmask.f32 3328
      %vm464 = vsmask.f32 7440
      %vm465 = vmor %vm463, %vm464
      %v467 = vshrl.u32 %v439, 16
      %v469 = vrot.slane %v467, 4
      %v470 = vshll.u32 %v439, 16
      %v472 = vrot.slane %v470, 5
      %v473 = vor.u32 %v469, %v472
      %v474 = vrot.slane %v473, 4
      %v476 = vshll.u32 %v440, 16
      %v478 = vrot.slane %v476, 5
      %v479 = vsel %vm465, %v474, %v478
      %v480 = vshrl.u32 %v440, 16
      %v482 = vrot.slane %v480, 4
      %v483 = vor.u32 %v482, %v478
      %v484 = vrot.slane %v483, 4
      %v486 = vshll.u32 %v441, 16
      %v488 = vrot.slane %v486, 5
      %v489 = vsel %vm465, %v484, %v488
      %v491 = vshrl.u32 %v442, 16
      %v493 = vrot.slane %v491, 4
      %v494 = vshll.u32 %v442, 16
      %v496 = vrot.slane %v494, 5
      %v497 = vor.u32 %v493, %v496
      %v498 = vrot.slane %v497, 4
      %v500 = vshll.u32 %v443, 16
      %v502 = vrot.slane %v500, 5
      %v503 = vsel %vm465, %v498, %v502
      %v504 = vshrl.u32 %v443, 16
      %v506 = vrot.slane %v504, 4
      %v507 = vor.u32 %v506, %v502
      %v508 = vrot.slane %v507, 4
      %v510 = vshll.u32 %v444, 16
      %v512 = vrot.slane %v510, 5
      %v513 = vsel %vm465, %v508, %v512
      %v515 = vshrl.u32 %v445, 16
      %v517 = vrot.slane %v515, 4
      %v518 = vshll.u32 %v445, 16
      %v520 = vrot.slane %v518, 5
      %v521 = vor.u32 %v517, %v520
      %v522 = vrot.slane %v521, 4
      %v524 = vshll.u32 %v446, 16
      %v526 = vrot.slane %v524, 5
      %v527 = vsel %vm465, %v522, %v526
      %v528 = vshrl.u32 %v446, 16
      %v530 = vrot.slane %v528, 4
      %v531 = vor.u32 %v530, %v526
      %v532 = vrot.slane %v531, 4
      %v534 = vshll.u32 %v447, 16
      %v536 = vrot.slane %v534, 5
      %v537 = vsel %vm465, %v532, %v536
      %v539 = vshrl.u32 %v448, 16
      %v541 = vrot.slane %v539, 4
      %v542 = vshll.u32 %v448, 16
      %v544 = vrot.slane %v542, 5
      %v545 = vor.u32 %v541, %v544
      %v546 = vrot.slane %v545, 4
      %v548 = vshll.u32 %v449, 16
      %v550 = vrot.slane %v548, 5
      %v551 = vsel %vm465, %v546, %v550
      %v552 = vshrl.u32 %v449, 16
      %v554 = vrot.slane %v552, 4
      %v555 = vor.u32 %v554, %v550
      %v556 = vrot.slane %v555, 4
      %v558 = vshll.u32 %v450, 16
      %v560 = vrot.slane %v558, 5
      %v561 = vsel %vm465, %v556, %v560
      %v563 = vshrl.u32 %v451, 16
      %v565 = vrot.slane %v563, 4
      %v566 = vshll.u32 %v451, 16
      %v568 = vrot.slane %v566, 5
      %v569 = vor.u32 %v565, %v568
      %v570 = vrot.slane %v569, 4
      %v572 = vshll.u32 %v452, 16
      %v574 = vrot.slane %v572, 5
      %v575 = vsel %vm465, %v570, %v574
      %v576 = vshrl.u32 %v452, 16
      %v578 = vrot.slane %v576, 4
      %v579 = vor.u32 %v578, %v574
      %v580 = vrot.slane %v579, 4
      %v582 = vshll.u32 %v453, 16
      %v584 = vrot.slane %v582, 5
      %v585 = vsel %vm465, %v580, %v584
      %v587 = vshrl.u32 %v454, 16
      %v589 = vrot.slane %v587, 4
      %v590 = vshll.u32 %v454, 16
      %v592 = vrot.slane %v590, 5
      %v593 = vor.u32 %v589, %v592
      %v594 = vrot.slane %v593, 4
      %v596 = vshll.u32 %v455, 16
      %v598 = vrot.slane %v596, 5
      %v599 = vsel %vm465, %v594, %v598
      %v600 = vshrl.u32 %v455, 16
      %v602 = vrot.slane %v600, 4
      %v603 = vor.u32 %v602, %v598
      %v604 = vrot.slane %v603, 4
      %v606 = vshll.u32 %v456, 16
      %v608 = vrot.slane %v606, 5
      %v609 = vsel %vm465, %v604, %v608
      %v611 = vshrl.u32 %v457, 16
      %v613 = vrot.slane %v611, 4
      %v614 = vshll.u32 %v457, 16
      %v616 = vrot.slane %v614, 5
      %v617 = vor.u32 %v613, %v616
      %v618 = vrot.slane %v617, 4
      %v620 = vshll.u32 %v458, 16
      %v622 = vrot.slane %v620, 5
      %v623 = vsel %vm465, %v618, %v622
      %v624 = vshrl.u32 %v458, 16
      %v626 = vrot.slane %v624, 4
      %v627 = vor.u32 %v626, %v622
      %v628 = vrot.slane %v627, 4
      %v630 = vshll.u32 %v459, 16
      %v632 = vrot.slane %v630, 5
      %v633 = vsel %vm465, %v628, %v632
      %v635 = vshrl.u32 %v460, 16
      %v637 = vrot.slane %v635, 4
      %v638 = vshll.u32 %v460, 16
      %v640 = vrot.slane %v638, 5
      %v641 = vor.u32 %v637, %v640
      %v642 = vrot.slane %v641, 4
      %v644 = vshll.u32 %v461, 16
      %v646 = vrot.slane %v644, 5
      %v647 = vsel %vm465, %v642, %v646
      %v648 = vshrl.u32 %v461, 16
      %v650 = vrot.slane %v648, 4
      %v651 = vor.u32 %v650, %v646
      %v652 = vrot.slane %v651, 4
      %v654 = vshll.u32 %v462, 16
      %v656 = vrot.slane %v654, 5
      %v657 = vsel %vm465, %v652, %v656
      %674 = vst [vmem:[#allocation3 + $0x4] sm:$0xf] %v479
      %675 = vst [vmem:[#allocation3 + $0x28] sm:$0xf] %v489
      %676 = vst [vmem:[#allocation3 + $0x4c] sm:$0xf] %v503
      %677 = vst [vmem:[#allocation3 + $0x70] sm:$0xf] %v513
      %678 = vst [vmem:[#allocation3 + $0x94] sm:$0xf] %v527
      %679 = vst [vmem:[#allocation3 + $0xb8] sm:$0xf] %v537
      %680 = vst [vmem:[#allocation3 + $0xdc] sm:$0xf] %v551
      %681 = vst [vmem:[#allocation3 + $0x100] sm:$0xf] %v561
      %682 = vst [vmem:[#allocation3 + $0x124] sm:$0xf] %v575
      %683 = vst [vmem:[#allocation3 + $0x148] sm:$0xf] %v585
      %684 = vst [vmem:[#allocation3 + $0x16c] sm:$0xf] %v599
      %685 = vst [vmem:[#allocation3 + $0x190] sm:$0xf] %v609
      %686 = vst [vmem:[#allocation3 + $0x1b4] sm:$0xf] %v623
      %687 = vst [vmem:[#allocation3 + $0x1d8] sm:$0xf] %v633
      %688 = vst [vmem:[#allocation3 + $0x1fc] sm:$0xf] %v647
      %689 = vst [vmem:[#allocation3 + $0x220] sm:$0xf] %v657
      %v690 = vld [vmem:[#allocation2] sm:$0xe]
      %v691 = vld [vmem:[#allocation2 + $0x4] sm:$0xf]
      %v692 = vld [vmem:[#allocation2 + $0x8] sm:$0x1]
      %v693 = vld [vmem:[#allocation2 + $0xc] sm:$0xe]
      %v694 = vld [vmem:[#allocation2 + $0x10] sm:$0xf]
      %v695 = vld [vmem:[#allocation2 + $0x14] sm:$0x1]
      %v696 = vld [vmem:[#allocation2 + $0x18] sm:$0xe]
      %v697 = vld [vmem:[#allocation2 + $0x1c] sm:$0xf]
      %v698 = vld [vmem:[#allocation2 + $0x20] sm:$0x1]
      %v699 = vld [vmem:[#allocation2 + $0x24] sm:$0xe]
      %v700 = vld [vmem:[#allocation2 + $0x28] sm:$0xf]
      %v701 = vld [vmem:[#allocation2 + $0x2c] sm:$0x1]
      %v702 = vld [vmem:[#allocation2 + $0x30] sm:$0xe]
      %v703 = vld [vmem:[#allocation2 + $0x34] sm:$0xf]
      %v704 = vld [vmem:[#allocation2 + $0x38] sm:$0x1]
      %v705 = vld [vmem:[#allocation2 + $0x3c] sm:$0xe]
      %v706 = vld [vmem:[#allocation2 + $0x40] sm:$0xf]
      %v707 = vld [vmem:[#allocation2 + $0x44] sm:$0x1]
      %v708 = vld [vmem:[#allocation2 + $0x48] sm:$0xe]
      %v709 = vld [vmem:[#allocation2 + $0x4c] sm:$0xf]
      %v710 = vld [vmem:[#allocation2 + $0x50] sm:$0x1]
      %v711 = vld [vmem:[#allocation2 + $0x54] sm:$0xe]
      %v712 = vld [vmem:[#allocation2 + $0x58] sm:$0xf]
      %v713 = vld [vmem:[#allocation2 + $0x5c] sm:$0x1]
      %vm738 = vcmask 1042432
      %vm739 = vcmask 1046532
      %vm740 = vmor %vm738, %vm739
      %v741 = vrot.slane %v690, 5
      %v742 = vrot.slane %v741, 4
      %v743 = vrot.slane %v691, 5
      %v744 = vsel %vm740, %v742, %v743
      %v745 = vrot.slane %v743, 4
      %v746 = vrot.slane %v692, 5
      %v747 = vsel %vm740, %v745, %v746
      %v748 = vrot.slane %v693, 5
      %v749 = vrot.slane %v748, 4
      %v750 = vrot.slane %v694, 5
      %v751 = vsel %vm740, %v749, %v750
      %v752 = vrot.slane %v750, 4
      %v753 = vrot.slane %v695, 5
      %v754 = vsel %vm740, %v752, %v753
      %v755 = vrot.slane %v696, 5
      %v756 = vrot.slane %v755, 4
      %v757 = vrot.slane %v697, 5
      %v758 = vsel %vm740, %v756, %v757
      %v759 = vrot.slane %v757, 4
      %v760 = vrot.slane %v698, 5
      %v761 = vsel %vm740, %v759, %v760
      %v762 = vrot.slane %v699, 5
      %v763 = vrot.slane %v762, 4
      %v764 = vrot.slane %v700, 5
      %v765 = vsel %vm740, %v763, %v764
      %v766 = vrot.slane %v764, 4
      %v767 = vrot.slane %v701, 5
      %v768 = vsel %vm740, %v766, %v767
      %v769 = vrot.slane %v702, 5
      %v770 = vrot.slane %v769, 4
      %v771 = vrot.slane %v703, 5
      %v772 = vsel %vm740, %v770, %v771
      %v773 = vrot.slane %v771, 4
      %v774 = vrot.slane %v704, 5
      %v775 = vsel %vm740, %v773, %v774
      %v776 = vrot.slane %v705, 5
      %v777 = vrot.slane %v776, 4
      %v778 = vrot.slane %v706, 5
      %v779 = vsel %vm740, %v777, %v778
      %v780 = vrot.slane %v778, 4
      %v781 = vrot.slane %v707, 5
      %v782 = vsel %vm740, %v780, %v781
      %v783 = vrot.slane %v708, 5
      %v784 = vrot.slane %v783, 4
      %v785 = vrot.slane %v709, 5
      %v786 = vsel %vm740, %v784, %v785
      %v787 = vrot.slane %v785, 4
      %v788 = vrot.slane %v710, 5
      %v789 = vsel %vm740, %v787, %v788
      %v790 = vrot.slane %v711, 5
      %v791 = vrot.slane %v790, 4
      %v792 = vrot.slane %v712, 5
      %v793 = vsel %vm740, %v791, %v792
      %v794 = vrot.slane %v792, 4
      %v795 = vrot.slane %v713, 5
      %v796 = vsel %vm740, %v794, %v795
      %813 = vst [vmem:[#allocation3 + $0x8] sm:$0xf] %v744
      %814 = vst [vmem:[#allocation3 + $0x2c] sm:$0xf] %v747
      %815 = vst [vmem:[#allocation3 + $0x50] sm:$0xf] %v751
      %816 = vst [vmem:[#allocation3 + $0x74] sm:$0xf] %v754
      %817 = vst [vmem:[#allocation3 + $0x98] sm:$0xf] %v758
      %818 = vst [vmem:[#allocation3 + $0xbc] sm:$0xf] %v761
      %819 = vst [vmem:[#allocation3 + $0xe0] sm:$0xf] %v765
      %820 = vst [vmem:[#allocation3 + $0x104] sm:$0xf] %v768
      %821 = vst [vmem:[#allocation3 + $0x128] sm:$0xf] %v772
      %822 = vst [vmem:[#allocation3 + $0x14c] sm:$0xf] %v775
      %823 = vst [vmem:[#allocation3 + $0x170] sm:$0xf] %v779
      %824 = vst [vmem:[#allocation3 + $0x194] sm:$0xf] %v782
      %825 = vst [vmem:[#allocation3 + $0x1b8] sm:$0xf] %v786
      %826 = vst [vmem:[#allocation3 + $0x1dc] sm:$0xf] %v789
      %827 = vst [vmem:[#allocation3 + $0x200] sm:$0xf] %v793
      %828 = vst [vmem:[#allocation3 + $0x224] sm:$0xf] %v796
      %s829 = scalar_lea.vmem [#allocation2], 12
      %v830 = vld [vmem:[%s829] sm:$0xf]
      %v831 = vld [vmem:[%s829 + $0x4] sm:$0xf]
      %v832 = vld [vmem:[%s829 + $0xc] sm:$0xf]
      %v833 = vld [vmem:[%s829 + $0x10] sm:$0xf]
      %v834 = vld [vmem:[%s829 + $0x18] sm:$0xf]
      %v835 = vld [vmem:[%s829 + $0x1c] sm:$0xf]
      %v836 = vld [vmem:[%s829 + $0x24] sm:$0xf]
      %v837 = vld [vmem:[%s829 + $0x28] sm:$0xf]
      %v838 = vld [vmem:[%s829 + $0x30] sm:$0xf]
      %v839 = vld [vmem:[%s829 + $0x34] sm:$0xf]
      %v840 = vld [vmem:[%s829 + $0x3c] sm:$0xf]
      %v841 = vld [vmem:[%s829 + $0x40] sm:$0xf]
      %v842 = vld [vmem:[%s829 + $0x48] sm:$0xf]
      %v843 = vld [vmem:[%s829 + $0x4c] sm:$0xf]
      %v844 = vld [vmem:[%s829 + $0x54] sm:$0xf]
      %v845 = vld [vmem:[%s829 + $0x58] sm:$0xf]
      %846 = vst [vmem:[#allocation3 + $0xc] sm:$0xf] %v830
      %847 = vst [vmem:[#allocation3 + $0x30] sm:$0xf] %v831
      %848 = vst [vmem:[#allocation3 + $0x54] sm:$0xf] %v832
      %849 = vst [vmem:[#allocation3 + $0x78] sm:$0xf] %v833
      %850 = vst [vmem:[#allocation3 + $0x9c] sm:$0xf] %v834
      %851 = vst [vmem:[#allocation3 + $0xc0] sm:$0xf] %v835
      %852 = vst [vmem:[#allocation3 + $0xe4] sm:$0xf] %v836
      %853 = vst [vmem:[#allocation3 + $0x108] sm:$0xf] %v837
      %854 = vst [vmem:[#allocation3 + $0x12c] sm:$0xf] %v838
      %855 = vst [vmem:[#allocation3 + $0x150] sm:$0xf] %v839
      %856 = vst [vmem:[#allocation3 + $0x174] sm:$0xf] %v840
      %857 = vst [vmem:[#allocation3 + $0x198] sm:$0xf] %v841
      %858 = vst [vmem:[#allocation3 + $0x1bc] sm:$0xf] %v842
      %859 = vst [vmem:[#allocation3 + $0x1e0] sm:$0xf] %v843
      %860 = vst [vmem:[#allocation3 + $0x204] sm:$0xf] %v844
      %861 = vst [vmem:[#allocation3 + $0x228] sm:$0xf] %v845
      %v862 = vld [vmem:[%s829] sm:$0xf]
      %v863 = vld [vmem:[%s829 + $0x4] sm:$0xf]
      %v864 = vld [vmem:[%s829 + $0x8] sm:$0x1]
      %v865 = vld [vmem:[%s829 + $0xc] sm:$0xf]
      %v866 = vld [vmem:[%s829 + $0x10] sm:$0xf]
      %v867 = vld [vmem:[%s829 + $0x14] sm:$0x1]
      %v868 = vld [vmem:[%s829 + $0x18] sm:$0xf]
      %v869 = vld [vmem:[%s829 + $0x1c] sm:$0xf]
      %v870 = vld [vmem:[%s829 + $0x20] sm:$0x1]
      %v871 = vld [vmem:[%s829 + $0x24] sm:$0xf]
      %v872 = vld [vmem:[%s829 + $0x28] sm:$0xf]
      %v873 = vld [vmem:[%s829 + $0x2c] sm:$0x1]
      %v874 = vld [vmem:[%s829 + $0x30] sm:$0xf]
      %v875 = vld [vmem:[%s829 + $0x34] sm:$0xf]
      %v876 = vld [vmem:[%s829 + $0x38] sm:$0x1]
      %v877 = vld [vmem:[%s829 + $0x3c] sm:$0xf]
      %v878 = vld [vmem:[%s829 + $0x40] sm:$0xf]
      %v879 = vld [vmem:[%s829 + $0x44] sm:$0x1]
      %v880 = vld [vmem:[%s829 + $0x48] sm:$0xf]
      %v881 = vld [vmem:[%s829 + $0x4c] sm:$0xf]
      %v882 = vld [vmem:[%s829 + $0x50] sm:$0x1]
      %v883 = vld [vmem:[%s829 + $0x54] sm:$0xf]
      %v884 = vld [vmem:[%s829 + $0x58] sm:$0xf]
      %v885 = vld [vmem:[%s829 + $0x5c] sm:$0x1]
      %v887 = vshrl.u32 %v862, 16
      %v889 = vrot.slane %v887, 4
      %v890 = vshll.u32 %v862, 16
      %v892 = vrot.slane %v890, 5
      %v893 = vor.u32 %v889, %v892
      %v894 = vrot.slane %v893, 4
      %v896 = vshll.u32 %v863, 16
      %v898 = vrot.slane %v896, 5
      %v899 = vsel %vm465, %v894, %v898
      %v900 = vshrl.u32 %v863, 16
      %v902 = vrot.slane %v900, 4
      %v903 = vor.u32 %v902, %v898
      %v904 = vrot.slane %v903, 4
      %v906 = vshll.u32 %v864, 16
      %v908 = vrot.slane %v906, 5
      %v909 = vsel %vm465, %v904, %v908
      %v911 = vshrl.u32 %v865, 16
      %v913 = vrot.slane %v911, 4
      %v914 = vshll.u32 %v865, 16
      %v916 = vrot.slane %v914, 5
      %v917 = vor.u32 %v913, %v916
      %v918 = vrot.slane %v917, 4
      %v920 = vshll.u32 %v866, 16
      %v922 = vrot.slane %v920, 5
      %v923 = vsel %vm465, %v918, %v922
      %v924 = vshrl.u32 %v866, 16
      %v926 = vrot.slane %v924, 4
      %v927 = vor.u32 %v926, %v922
      %v928 = vrot.slane %v927, 4
      %v930 = vshll.u32 %v867, 16
      %v932 = vrot.slane %v930, 5
      %v933 = vsel %vm465, %v928, %v932
      %v935 = vshrl.u32 %v868, 16
      %v937 = vrot.slane %v935, 4
      %v938 = vshll.u32 %v868, 16
      %v940 = vrot.slane %v938, 5
      %v941 = vor.u32 %v937, %v940
      %v942 = vrot.slane %v941, 4
      %v944 = vshll.u32 %v869, 16
      %v946 = vrot.slane %v944, 5
      %v947 = vsel %vm465, %v942, %v946
      %v948 = vshrl.u32 %v869, 16
      %v950 = vrot.slane %v948, 4
      %v951 = vor.u32 %v950, %v946
      %v952 = vrot.slane %v951, 4
      %v954 = vshll.u32 %v870, 16
      %v956 = vrot.slane %v954, 5
      %v957 = vsel %vm465, %v952, %v956
      %v959 = vshrl.u32 %v871, 16
      %v961 = vrot.slane %v959, 4
      %v962 = vshll.u32 %v871, 16
      %v964 = vrot.slane %v962, 5
      %v965 = vor.u32 %v961, %v964
      %v966 = vrot.slane %v965, 4
      %v968 = vshll.u32 %v872, 16
      %v970 = vrot.slane %v968, 5
      %v971 = vsel %vm465, %v966, %v970
      %v972 = vshrl.u32 %v872, 16
      %v974 = vrot.slane %v972, 4
      %v975 = vor.u32 %v974, %v970
      %v976 = vrot.slane %v975, 4
      %v978 = vshll.u32 %v873, 16
      %v980 = vrot.slane %v978, 5
      %v981 = vsel %vm465, %v976, %v980
      %v983 = vshrl.u32 %v874, 16
      %v985 = vrot.slane %v983, 4
      %v986 = vshll.u32 %v874, 16
      %v988 = vrot.slane %v986, 5
      %v989 = vor.u32 %v985, %v988
      %v990 = vrot.slane %v989, 4
      %v992 = vshll.u32 %v875, 16
      %v994 = vrot.slane %v992, 5
      %v995 = vsel %vm465, %v990, %v994
      %v996 = vshrl.u32 %v875, 16
      %v998 = vrot.slane %v996, 4
      %v999 = vor.u32 %v998, %v994
      %v1000 = vrot.slane %v999, 4
      %v1002 = vshll.u32 %v876, 16
      %v1004 = vrot.slane %v1002, 5
      %v1005 = vsel %vm465, %v1000, %v1004
      %v1007 = vshrl.u32 %v877, 16
      %v1009 = vrot.slane %v1007, 4
      %v1010 = vshll.u32 %v877, 16
      %v1012 = vrot.slane %v1010, 5
      %v1013 = vor.u32 %v1009, %v1012
      %v1014 = vrot.slane %v1013, 4
      %v1016 = vshll.u32 %v878, 16
      %v1018 = vrot.slane %v1016, 5
      %v1019 = vsel %vm465, %v1014, %v1018
      %v1020 = vshrl.u32 %v878, 16
      %v1022 = vrot.slane %v1020, 4
      %v1023 = vor.u32 %v1022, %v1018
      %v1024 = vrot.slane %v1023, 4
      %v1026 = vshll.u32 %v879, 16
      %v1028 = vrot.slane %v1026, 5
      %v1029 = vsel %vm465, %v1024, %v1028
      %v1031 = vshrl.u32 %v880, 16
      %v1033 = vrot.slane %v1031, 4
      %v1034 = vshll.u32 %v880, 16
      %v1036 = vrot.slane %v1034, 5
      %v1037 = vor.u32 %v1033, %v1036
      %v1038 = vrot.slane %v1037, 4
      %v1040 = vshll.u32 %v881, 16
      %v1042 = vrot.slane %v1040, 5
      %v1043 = vsel %vm465, %v1038, %v1042
      %v1044 = vshrl.u32 %v881, 16
      %v1046 = vrot.slane %v1044, 4
      %v1047 = vor.u32 %v1046, %v1042
      %v1048 = vrot.slane %v1047, 4
      %v1050 = vshll.u32 %v882, 16
      %v1052 = vrot.slane %v1050, 5
      %v1053 = vsel %vm465, %v1048, %v1052
      %v1055 = vshrl.u32 %v883, 16
      %v1057 = vrot.slane %v1055, 4
      %v1058 = vshll.u32 %v883, 16
      %v1060 = vrot.slane %v1058, 5
      %v1061 = vor.u32 %v1057, %v1060
      %v1062 = vrot.slane %v1061, 4
      %v1064 = vshll.u32 %v884, 16
      %v1066 = vrot.slane %v1064, 5
      %v1067 = vsel %vm465, %v1062, %v1066
      %v1068 = vshrl.u32 %v884, 16
      %v1070 = vrot.slane %v1068, 4
      %v1071 = vor.u32 %v1070, %v1066
      %v1072 = vrot.slane %v1071, 4
      %v1074 = vshll.u32 %v885, 16
      %v1076 = vrot.slane %v1074, 5
      %v1077 = vsel %vm465, %v1072, %v1076
      %1094 = vst [vmem:[#allocation3 + $0x10] sm:$0xf] %v899
      %1095 = vst [vmem:[#allocation3 + $0x34] sm:$0xf] %v909
      %1096 = vst [vmem:[#allocation3 + $0x58] sm:$0xf] %v923
      %1097 = vst [vmem:[#allocation3 + $0x7c] sm:$0xf] %v933
      %1098 = vst [vmem:[#allocation3 + $0xa0] sm:$0xf] %v947
      %1099 = vst [vmem:[#allocation3 + $0xc4] sm:$0xf] %v957
      %1100 = vst [vmem:[#allocation3 + $0xe8] sm:$0xf] %v971
      %1101 = vst [vmem:[#allocation3 + $0x10c] sm:$0xf] %v981
      %1102 = vst [vmem:[#allocation3 + $0x130] sm:$0xf] %v995
      %1103 = vst [vmem:[#allocation3 + $0x154] sm:$0xf] %v1005
      %1104 = vst [vmem:[#allocation3 + $0x178] sm:$0xf] %v1019
      %1105 = vst [vmem:[#allocation3 + $0x19c] sm:$0xf] %v1029
      %1106 = vst [vmem:[#allocation3 + $0x1c0] sm:$0xf] %v1043
      %1107 = vst [vmem:[#allocation3 + $0x1e4] sm:$0xf] %v1053
      %1108 = vst [vmem:[#allocation3 + $0x208] sm:$0xf] %v1067
      %1109 = vst [vmem:[#allocation3 + $0x22c] sm:$0xf] %v1077
      %v1110 = vld [vmem:[%s829] sm:$0xe]
      %v1111 = vld [vmem:[%s829 + $0x4] sm:$0xf]
      %v1112 = vld [vmem:[%s829 + $0x8] sm:$0x1]
      %v1113 = vld [vmem:[%s829 + $0xc] sm:$0xe]
      %v1114 = vld [vmem:[%s829 + $0x10] sm:$0xf]
      %v1115 = vld [vmem:[%s829 + $0x14] sm:$0x1]
      %v1116 = vld [vmem:[%s829 + $0x18] sm:$0xe]
      %v1117 = vld [vmem:[%s829 + $0x1c] sm:$0xf]
      %v1118 = vld [vmem:[%s829 + $0x20] sm:$0x1]
      %v1119 = vld [vmem:[%s829 + $0x24] sm:$0xe]
      %v1120 = vld [vmem:[%s829 + $0x28] sm:$0xf]
      %v1121 = vld [vmem:[%s829 + $0x2c] sm:$0x1]
      %v1122 = vld [vmem:[%s829 + $0x30] sm:$0xe]
      %v1123 = vld [vmem:[%s829 + $0x34] sm:$0xf]
      %v1124 = vld [vmem:[%s829 + $0x38] sm:$0x1]
      %v1125 = vld [vmem:[%s829 + $0x3c] sm:$0xe]
      %v1126 = vld [vmem:[%s829 + $0x40] sm:$0xf]
      %v1127 = vld [vmem:[%s829 + $0x44] sm:$0x1]
      %v1128 = vld [vmem:[%s829 + $0x48] sm:$0xe]
      %v1129 = vld [vmem:[%s829 + $0x4c] sm:$0xf]
      %v1130 = vld [vmem:[%s829 + $0x50] sm:$0x1]
      %v1131 = vld [vmem:[%s829 + $0x54] sm:$0xe]
      %v1132 = vld [vmem:[%s829 + $0x58] sm:$0xf]
      %v1133 = vld [vmem:[%s829 + $0x5c] sm:$0x1]
      %v1158 = vrot.slane %v1110, 5
      %v1159 = vrot.slane %v1158, 4
      %v1160 = vrot.slane %v1111, 5
      %v1161 = vsel %vm740, %v1159, %v1160
      %v1162 = vrot.slane %v1160, 4
      %v1163 = vrot.slane %v1112, 5
      %v1164 = vsel %vm740, %v1162, %v1163
      %v1165 = vrot.slane %v1113, 5
      %v1166 = vrot.slane %v1165, 4
      %v1167 = vrot.slane %v1114, 5
      %v1168 = vsel %vm740, %v1166, %v1167
      %v1169 = vrot.slane %v1167, 4
      %v1170 = vrot.slane %v1115, 5
      %v1171 = vsel %vm740, %v1169, %v1170
      %v1172 = vrot.slane %v1116, 5
      %v1173 = vrot.slane %v1172, 4
      %v1174 = vrot.slane %v1117, 5
      %v1175 = vsel %vm740, %v1173, %v1174
      %v1176 = vrot.slane %v1174, 4
      %v1177 = vrot.slane %v1118, 5
      %v1178 = vsel %vm740, %v1176, %v1177
      %v1179 = vrot.slane %v1119, 5
      %v1180 = vrot.slane %v1179, 4
      %v1181 = vrot.slane %v1120, 5
      %v1182 = vsel %vm740, %v1180, %v1181
      %v1183 = vrot.slane %v1181, 4
      %v1184 = vrot.slane %v1121, 5
      %v1185 = vsel %vm740, %v1183, %v1184
      %v1186 = vrot.slane %v1122, 5
      %v1187 = vrot.slane %v1186, 4
      %v1188 = vrot.slane %v1123, 5
      %v1189 = vsel %vm740, %v1187, %v1188
      %v1190 = vrot.slane %v1188, 4
      %v1191 = vrot.slane %v1124, 5
      %v1192 = vsel %vm740, %v1190, %v1191
      %v1193 = vrot.slane %v1125, 5
      %v1194 = vrot.slane %v1193, 4
      %v1195 = vrot.slane %v1126, 5
      %v1196 = vsel %vm740, %v1194, %v1195
      %v1197 = vrot.slane %v1195, 4
      %v1198 = vrot.slane %v1127, 5
      %v1199 = vsel %vm740, %v1197, %v1198
      %v1200 = vrot.slane %v1128, 5
      %v1201 = vrot.slane %v1200, 4
      %v1202 = vrot.slane %v1129, 5
      %v1203 = vsel %vm740, %v1201, %v1202
      %v1204 = vrot.slane %v1202, 4
      %v1205 = vrot.slane %v1130, 5
      %v1206 = vsel %vm740, %v1204, %v1205
      %v1207 = vrot.slane %v1131, 5
      %v1208 = vrot.slane %v1207, 4
      %v1209 = vrot.slane %v1132, 5
      %v1210 = vsel %vm740, %v1208, %v1209
      %v1211 = vrot.slane %v1209, 4
      %v1212 = vrot.slane %v1133, 5
      %v1213 = vsel %vm740, %v1211, %v1212
      %1230 = vst [vmem:[#allocation3 + $0x14] sm:$0xf] %v1161
      %1231 = vst [vmem:[#allocation3 + $0x38] sm:$0xf] %v1164
      %1232 = vst [vmem:[#allocation3 + $0x5c] sm:$0xf] %v1168
      %1233 = vst [vmem:[#allocation3 + $0x80] sm:$0xf] %v1171
      %1234 = vst [vmem:[#allocation3 + $0xa4] sm:$0xf] %v1175
      %1235 = vst [vmem:[#allocation3 + $0xc8] sm:$0xf] %v1178
      %1236 = vst [vmem:[#allocation3 + $0xec] sm:$0xf] %v1182
      %1237 = vst [vmem:[#allocation3 + $0x110] sm:$0xf] %v1185
      %1238 = vst [vmem:[#allocation3 + $0x134] sm:$0xf] %v1189
      %1239 = vst [vmem:[#allocation3 + $0x158] sm:$0xf] %v1192
      %1240 = vst [vmem:[#allocation3 + $0x17c] sm:$0xf] %v1196
      %1241 = vst [vmem:[#allocation3 + $0x1a0] sm:$0xf] %v1199
      %1242 = vst [vmem:[#allocation3 + $0x1c4] sm:$0xf] %v1203
      %1243 = vst [vmem:[#allocation3 + $0x1e8] sm:$0xf] %v1206
      %1244 = vst [vmem:[#allocation3 + $0x20c] sm:$0xf] %v1210
      %1245 = vst [vmem:[#allocation3 + $0x230] sm:$0xf] %v1213
      %s1246 = scalar_lea.vmem [#allocation2], 24
      %v1247 = vld [vmem:[%s1246] sm:$0xf]
      %v1248 = vld [vmem:[%s1246 + $0x4] sm:$0xf]
      %v1249 = vld [vmem:[%s1246 + $0xc] sm:$0xf]
      %v1250 = vld [vmem:[%s1246 + $0x10] sm:$0xf]
      %v1251 = vld [vmem:[%s1246 + $0x18] sm:$0xf]
      %v1252 = vld [vmem:[%s1246 + $0x1c] sm:$0xf]
      %v1253 = vld [vmem:[%s1246 + $0x24] sm:$0xf]
      %v1254 = vld [vmem:[%s1246 + $0x28] sm:$0xf]
      %v1255 = vld [vmem:[%s1246 + $0x30] sm:$0xf]
      %v1256 = vld [vmem:[%s1246 + $0x34] sm:$0xf]
      %v1257 = vld [vmem:[%s1246 + $0x3c] sm:$0xf]
      %v1258 = vld [vmem:[%s1246 + $0x40] sm:$0xf]
      %v1259 = vld [vmem:[%s1246 + $0x48] sm:$0xf]
      %v1260 = vld [vmem:[%s1246 + $0x4c] sm:$0xf]
      %v1261 = vld [vmem:[%s1246 + $0x54] sm:$0xf]
      %v1262 = vld [vmem:[%s1246 + $0x58] sm:$0xf]
      %1263 = vst [vmem:[#allocation3 + $0x18] sm:$0xf] %v1247
      %1264 = vst [vmem:[#allocation3 + $0x3c] sm:$0xf] %v1248
      %1265 = vst [vmem:[#allocation3 + $0x60] sm:$0xf] %v1249
      %1266 = vst [vmem:[#allocation3 + $0x84] sm:$0xf] %v1250
      %1267 = vst [vmem:[#allocation3 + $0xa8] sm:$0xf] %v1251
      %1268 = vst [vmem:[#allocation3 + $0xcc] sm:$0xf] %v1252
      %1269 = vst [vmem:[#allocation3 + $0xf0] sm:$0xf] %v1253
      %1270 = vst [vmem:[#allocation3 + $0x114] sm:$0xf] %v1254
      %1271 = vst [vmem:[#allocation3 + $0x138] sm:$0xf] %v1255
      %1272 = vst [vmem:[#allocation3 + $0x15c] sm:$0xf] %v1256
      %1273 = vst [vmem:[#allocation3 + $0x180] sm:$0xf] %v1257
      %1274 = vst [vmem:[#allocation3 + $0x1a4] sm:$0xf] %v1258
      %1275 = vst [vmem:[#allocation3 + $0x1c8] sm:$0xf] %v1259
      %1276 = vst [vmem:[#allocation3 + $0x1ec] sm:$0xf] %v1260
      %1277 = vst [vmem:[#allocation3 + $0x210] sm:$0xf] %v1261
      %1278 = vst [vmem:[#allocation3 + $0x234] sm:$0xf] %v1262
      %v1279 = vld [vmem:[%s1246] sm:$0xf]
      %v1280 = vld [vmem:[%s1246 + $0x4] sm:$0xf]
      %v1281 = vld [vmem:[%s1246 + $0x8] sm:$0x1]
      %v1282 = vld [vmem:[%s1246 + $0xc] sm:$0xf]
      %v1283 = vld [vmem:[%s1246 + $0x10] sm:$0xf]
      %v1284 = vld [vmem:[%s1246 + $0x14] sm:$0x1]
      %v1285 = vld [vmem:[%s1246 + $0x18] sm:$0xf]
      %v1286 = vld [vmem:[%s1246 + $0x1c] sm:$0xf]
      %v1287 = vld [vmem:[%s1246 + $0x20] sm:$0x1]
      %v1288 = vld [vmem:[%s1246 + $0x24] sm:$0xf]
      %v1289 = vld [vmem:[%s1246 + $0x28] sm:$0xf]
      %v1290 = vld [vmem:[%s1246 + $0x2c] sm:$0x1]
      %v1291 = vld [vmem:[%s1246 + $0x30] sm:$0xf]
      %v1292 = vld [vmem:[%s1246 + $0x34] sm:$0xf]
      %v1293 = vld [vmem:[%s1246 + $0x38] sm:$0x1]
      %v1294 = vld [vmem:[%s1246 + $0x3c] sm:$0xf]
      %v1295 = vld [vmem:[%s1246 + $0x40] sm:$0xf]
      %v1296 = vld [vmem:[%s1246 + $0x44] sm:$0x1]
      %v1297 = vld [vmem:[%s1246 + $0x48] sm:$0xf]
      %v1298 = vld [vmem:[%s1246 + $0x4c] sm:$0xf]
      %v1299 = vld [vmem:[%s1246 + $0x50] sm:$0x1]
      %v1300 = vld [vmem:[%s1246 + $0x54] sm:$0xf]
      %v1301 = vld [vmem:[%s1246 + $0x58] sm:$0xf]
      %v1302 = vld [vmem:[%s1246 + $0x5c] sm:$0x1]
      %v1304 = vshrl.u32 %v1279, 16
      %v1306 = vrot.slane %v1304, 4
      %v1307 = vshll.u32 %v1279, 16
      %v1309 = vrot.slane %v1307, 5
      %v1310 = vor.u32 %v1306, %v1309
      %v1311 = vrot.slane %v1310, 4
      %v1313 = vshll.u32 %v1280, 16
      %v1315 = vrot.slane %v1313, 5
      %v1316 = vsel %vm465, %v1311, %v1315
      %v1317 = vshrl.u32 %v1280, 16
      %v1319 = vrot.slane %v1317, 4
      %v1320 = vor.u32 %v1319, %v1315
      %v1321 = vrot.slane %v1320, 4
      %v1323 = vshll.u32 %v1281, 16
      %v1325 = vrot.slane %v1323, 5
      %v1326 = vsel %vm465, %v1321, %v1325
      %v1328 = vshrl.u32 %v1282, 16
      %v1330 = vrot.slane %v1328, 4
      %v1331 = vshll.u32 %v1282, 16
      %v1333 = vrot.slane %v1331, 5
      %v1334 = vor.u32 %v1330, %v1333
      %v1335 = vrot.slane %v1334, 4
      %v1337 = vshll.u32 %v1283, 16
      %v1339 = vrot.slane %v1337, 5
      %v1340 = vsel %vm465, %v1335, %v1339
      %v1341 = vshrl.u32 %v1283, 16
      %v1343 = vrot.slane %v1341, 4
      %v1344 = vor.u32 %v1343, %v1339
      %v1345 = vrot.slane %v1344, 4
      %v1347 = vshll.u32 %v1284, 16
      %v1349 = vrot.slane %v1347, 5
      %v1350 = vsel %vm465, %v1345, %v1349
      %v1352 = vshrl.u32 %v1285, 16
      %v1354 = vrot.slane %v1352, 4
      %v1355 = vshll.u32 %v1285, 16
      %v1357 = vrot.slane %v1355, 5
      %v1358 = vor.u32 %v1354, %v1357
      %v1359 = vrot.slane %v1358, 4
      %v1361 = vshll.u32 %v1286, 16
      %v1363 = vrot.slane %v1361, 5
      %v1364 = vsel %vm465, %v1359, %v1363
      %v1365 = vshrl.u32 %v1286, 16
      %v1367 = vrot.slane %v1365, 4
      %v1368 = vor.u32 %v1367, %v1363
      %v1369 = vrot.slane %v1368, 4
      %v1371 = vshll.u32 %v1287, 16
      %v1373 = vrot.slane %v1371, 5
      %v1374 = vsel %vm465, %v1369, %v1373
      %v1376 = vshrl.u32 %v1288, 16
      %v1378 = vrot.slane %v1376, 4
      %v1379 = vshll.u32 %v1288, 16
      %v1381 = vrot.slane %v1379, 5
      %v1382 = vor.u32 %v1378, %v1381
      %v1383 = vrot.slane %v1382, 4
      %v1385 = vshll.u32 %v1289, 16
      %v1387 = vrot.slane %v1385, 5
      %v1388 = vsel %vm465, %v1383, %v1387
      %v1389 = vshrl.u32 %v1289, 16
      %v1391 = vrot.slane %v1389, 4
      %v1392 = vor.u32 %v1391, %v1387
      %v1393 = vrot.slane %v1392, 4
      %v1395 = vshll.u32 %v1290, 16
      %v1397 = vrot.slane %v1395, 5
      %v1398 = vsel %vm465, %v1393, %v1397
      %v1400 = vshrl.u32 %v1291, 16
      %v1402 = vrot.slane %v1400, 4
      %v1403 = vshll.u32 %v1291, 16
      %v1405 = vrot.slane %v1403, 5
      %v1406 = vor.u32 %v1402, %v1405
      %v1407 = vrot.slane %v1406, 4
      %v1409 = vshll.u32 %v1292, 16
      %v1411 = vrot.slane %v1409, 5
      %v1412 = vsel %vm465, %v1407, %v1411
      %v1413 = vshrl.u32 %v1292, 16
      %v1415 = vrot.slane %v1413, 4
      %v1416 = vor.u32 %v1415, %v1411
      %v1417 = vrot.slane %v1416, 4
      %v1419 = vshll.u32 %v1293, 16
      %v1421 = vrot.slane %v1419, 5
      %v1422 = vsel %vm465, %v1417, %v1421
      %v1424 = vshrl.u32 %v1294, 16
      %v1426 = vrot.slane %v1424, 4
      %v1427 = vshll.u32 %v1294, 16
      %v1429 = vrot.slane %v1427, 5
      %v1430 = vor.u32 %v1426, %v1429
      %v1431 = vrot.slane %v1430, 4
      %v1433 = vshll.u32 %v1295, 16
      %v1435 = vrot.slane %v1433, 5
      %v1436 = vsel %vm465, %v1431, %v1435
      %v1437 = vshrl.u32 %v1295, 16
      %v1439 = vrot.slane %v1437, 4
      %v1440 = vor.u32 %v1439, %v1435
      %v1441 = vrot.slane %v1440, 4
      %v1443 = vshll.u32 %v1296, 16
      %v1445 = vrot.slane %v1443, 5
      %v1446 = vsel %vm465, %v1441, %v1445
      %v1448 = vshrl.u32 %v1297, 16
      %v1450 = vrot.slane %v1448, 4
      %v1451 = vshll.u32 %v1297, 16
      %v1453 = vrot.slane %v1451, 5
      %v1454 = vor.u32 %v1450, %v1453
      %v1455 = vrot.slane %v1454, 4
      %v1457 = vshll.u32 %v1298, 16
      %v1459 = vrot.slane %v1457, 5
      %v1460 = vsel %vm465, %v1455, %v1459
      %v1461 = vshrl.u32 %v1298, 16
      %v1463 = vrot.slane %v1461, 4
      %v1464 = vor.u32 %v1463, %v1459
      %v1465 = vrot.slane %v1464, 4
      %v1467 = vshll.u32 %v1299, 16
      %v1469 = vrot.slane %v1467, 5
      %v1470 = vsel %vm465, %v1465, %v1469
      %v1472 = vshrl.u32 %v1300, 16
      %v1474 = vrot.slane %v1472, 4
      %v1475 = vshll.u32 %v1300, 16
      %v1477 = vrot.slane %v1475, 5
      %v1478 = vor.u32 %v1474, %v1477
      %v1479 = vrot.slane %v1478, 4
      %v1481 = vshll.u32 %v1301, 16
      %v1483 = vrot.slane %v1481, 5
      %v1484 = vsel %vm465, %v1479, %v1483
      %v1485 = vshrl.u32 %v1301, 16
      %v1487 = vrot.slane %v1485, 4
      %v1488 = vor.u32 %v1487, %v1483
      %v1489 = vrot.slane %v1488, 4
      %v1491 = vshll.u32 %v1302, 16
      %v1493 = vrot.slane %v1491, 5
      %v1494 = vsel %vm465, %v1489, %v1493
      %1511 = vst [vmem:[#allocation3 + $0x1c] sm:$0xf] %v1316
      %1512 = vst [vmem:[#allocation3 + $0x40] sm:$0xf] %v1326
      %1513 = vst [vmem:[#allocation3 + $0x64] sm:$0xf] %v1340
      %1514 = vst [vmem:[#allocation3 + $0x88] sm:$0xf] %v1350
      %1515 = vst [vmem:[#allocation3 + $0xac] sm:$0xf] %v1364
      %1516 = vst [vmem:[#allocation3 + $0xd0] sm:$0xf] %v1374
      %1517 = vst [vmem:[#allocation3 + $0xf4] sm:$0xf] %v1388
      %1518 = vst [vmem:[#allocation3 + $0x118] sm:$0xf] %v1398
      %1519 = vst [vmem:[#allocation3 + $0x13c] sm:$0xf] %v1412
      %1520 = vst [vmem:[#allocation3 + $0x160] sm:$0xf] %v1422
      %1521 = vst [vmem:[#allocation3 + $0x184] sm:$0xf] %v1436
      %1522 = vst [vmem:[#allocation3 + $0x1a8] sm:$0xf] %v1446
      %1523 = vst [vmem:[#allocation3 + $0x1cc] sm:$0xf] %v1460
      %1524 = vst [vmem:[#allocation3 + $0x1f0] sm:$0xf] %v1470
      %1525 = vst [vmem:[#allocation3 + $0x214] sm:$0xf] %v1484
      %1526 = vst [vmem:[#allocation3 + $0x238] sm:$0xf] %v1494
      %v1527 = vld [vmem:[%s1246] sm:$0xe]
      %v1528 = vld [vmem:[%s1246 + $0x4] sm:$0xf]
      %v1529 = vld [vmem:[%s1246 + $0x8] sm:$0x1]
      %v1530 = vld [vmem:[%s1246 + $0xc] sm:$0xe]
      %v1531 = vld [vmem:[%s1246 + $0x10] sm:$0xf]
      %v1532 = vld [vmem:[%s1246 + $0x14] sm:$0x1]
      %v1533 = vld [vmem:[%s1246 + $0x18] sm:$0xe]
      %v1534 = vld [vmem:[%s1246 + $0x1c] sm:$0xf]
      %v1535 = vld [vmem:[%s1246 + $0x20] sm:$0x1]
      %v1536 = vld [vmem:[%s1246 + $0x24] sm:$0xe]
      %v1537 = vld [vmem:[%s1246 + $0x28] sm:$0xf]
      %v1538 = vld [vmem:[%s1246 + $0x2c] sm:$0x1]
      %v1539 = vld [vmem:[%s1246 + $0x30] sm:$0xe]
      %v1540 = vld [vmem:[%s1246 + $0x34] sm:$0xf]
      %v1541 = vld [vmem:[%s1246 + $0x38] sm:$0x1]
      %v1542 = vld [vmem:[%s1246 + $0x3c] sm:$0xe]
      %v1543 = vld [vmem:[%s1246 + $0x40] sm:$0xf]
      %v1544 = vld [vmem:[%s1246 + $0x44] sm:$0x1]
      %v1545 = vld [vmem:[%s1246 + $0x48] sm:$0xe]
      %v1546 = vld [vmem:[%s1246 + $0x4c] sm:$0xf]
      %v1547 = vld [vmem:[%s1246 + $0x50] sm:$0x1]
      %v1548 = vld [vmem:[%s1246 + $0x54] sm:$0xe]
      %v1549 = vld [vmem:[%s1246 + $0x58] sm:$0xf]
      %v1550 = vld [vmem:[%s1246 + $0x5c] sm:$0x1]
      %v1575 = vrot.slane %v1527, 5
      %v1576 = vrot.slane %v1575, 4
      %v1577 = vrot.slane %v1528, 5
      %v1578 = vsel %vm740, %v1576, %v1577
      %v1579 = vrot.slane %v1577, 4
      %v1580 = vrot.slane %v1529, 5
      %v1581 = vsel %vm740, %v1579, %v1580
      %v1582 = vrot.slane %v1530, 5
      %v1583 = vrot.slane %v1582, 4
      %v1584 = vrot.slane %v1531, 5
      %v1585 = vsel %vm740, %v1583, %v1584
      %v1586 = vrot.slane %v1584, 4
      %v1587 = vrot.slane %v1532, 5
      %v1588 = vsel %vm740, %v1586, %v1587
      %v1589 = vrot.slane %v1533, 5
      %v1590 = vrot.slane %v1589, 4
      %v1591 = vrot.slane %v1534, 5
      %v1592 = vsel %vm740, %v1590, %v1591
      %v1593 = vrot.slane %v1591, 4
      %v1594 = vrot.slane %v1535, 5
      %v1595 = vsel %vm740, %v1593, %v1594
      %v1596 = vrot.slane %v1536, 5
      %v1597 = vrot.slane %v1596, 4
      %v1598 = vrot.slane %v1537, 5
      %v1599 = vsel %vm740, %v1597, %v1598
      %v1600 = vrot.slane %v1598, 4
      %v1601 = vrot.slane %v1538, 5
      %v1602 = vsel %vm740, %v1600, %v1601
      %v1603 = vrot.slane %v1539, 5
      %v1604 = vrot.slane %v1603, 4
      %v1605 = vrot.slane %v1540, 5
      %v1606 = vsel %vm740, %v1604, %v1605
      %v1607 = vrot.slane %v1605, 4
      %v1608 = vrot.slane %v1541, 5
      %v1609 = vsel %vm740, %v1607, %v1608
      %v1610 = vrot.slane %v1542, 5
      %v1611 = vrot.slane %v1610, 4
      %v1612 = vrot.slane %v1543, 5
      %v1613 = vsel %vm740, %v1611, %v1612
      %v1614 = vrot.slane %v1612, 4
      %v1615 = vrot.slane %v1544, 5
      %v1616 = vsel %vm740, %v1614, %v1615
      %v1617 = vrot.slane %v1545, 5
      %v1618 = vrot.slane %v1617, 4
      %v1619 = vrot.slane %v1546, 5
      %v1620 = vsel %vm740, %v1618, %v1619
      %v1621 = vrot.slane %v1619, 4
      %v1622 = vrot.slane %v1547, 5
      %v1623 = vsel %vm740, %v1621, %v1622
      %v1624 = vrot.slane %v1548, 5
      %v1625 = vrot.slane %v1624, 4
      %v1626 = vrot.slane %v1549, 5
      %v1627 = vsel %vm740, %v1625, %v1626
      %v1628 = vrot.slane %v1626, 4
      %v1629 = vrot.slane %v1550, 5
      %v1630 = vsel %vm740, %v1628, %v1629
      %1647 = vst [vmem:[#allocation3 + $0x20] sm:$0xf] %v1578
      %1648 = vst [vmem:[#allocation3 + $0x44] sm:$0xf] %v1581
      %1649 = vst [vmem:[#allocation3 + $0x68] sm:$0xf] %v1585
      %1650 = vst [vmem:[#allocation3 + $0x8c] sm:$0xf] %v1588
      %1651 = vst [vmem:[#allocation3 + $0xb0] sm:$0xf] %v1592
      %1652 = vst [vmem:[#allocation3 + $0xd4] sm:$0xf] %v1595
      %1653 = vst [vmem:[#allocation3 + $0xf8] sm:$0xf] %v1599
      %1654 = vst [vmem:[#allocation3 + $0x11c] sm:$0xf] %v1602
      %1655 = vst [vmem:[#allocation3 + $0x140] sm:$0xf] %v1606
      %1656 = vst [vmem:[#allocation3 + $0x164] sm:$0xf] %v1609
      %1657 = vst [vmem:[#allocation3 + $0x188] sm:$0xf] %v1613
      %1658 = vst [vmem:[#allocation3 + $0x1ac] sm:$0xf] %v1616
      %1659 = vst [vmem:[#allocation3 + $0x1d0] sm:$0xf] %v1620
      %1660 = vst [vmem:[#allocation3 + $0x1f4] sm:$0xf] %v1623
      %1661 = vst [vmem:[#allocation3 + $0x218] sm:$0xf] %v1627
      %1662 = vst [vmem:[#allocation3 + $0x23c] sm:$0xf] %v1630
      %v1663 = vld [vmem:[#allocation3] sm:$0xff]
      %v1664 = vld [vmem:[#allocation3 + $0x8] sm:$0xff]
      %v1665 = vld [vmem:[#allocation3 + $0x10] sm:$0xff]
      %v1666 = vld [vmem:[#allocation3 + $0x18] sm:$0xff]
      %v1667 = vld [vmem:[#allocation3 + $0x20] sm:$0xf]
      %v1668 = vld [vmem:[#allocation3 + $0x24] sm:$0xff]
      %v1669 = vld [vmem:[#allocation3 + $0x2c] sm:$0xff]
      %v1670 = vld [vmem:[#allocation3 + $0x34] sm:$0xff]
      %v1671 = vld [vmem:[#allocation3 + $0x3c] sm:$0xff]
      %v1672 = vld [vmem:[#allocation3 + $0x44] sm:$0xf]
      %v1673 = vld [vmem:[#allocation3 + $0x48] sm:$0xff]
      %v1674 = vld [vmem:[#allocation3 + $0x50] sm:$0xff]
      %v1675 = vld [vmem:[#allocation3 + $0x58] sm:$0xff]
      %v1676 = vld [vmem:[#allocation3 + $0x60] sm:$0xff]
      %v1677 = vld [vmem:[#allocation3 + $0x68] sm:$0xf]
      %v1678 = vld [vmem:[#allocation3 + $0x6c] sm:$0xff]
      %v1679 = vld [vmem:[#allocation3 + $0x74] sm:$0xff]
      %v1680 = vld [vmem:[#allocation3 + $0x7c] sm:$0xff]
      %v1681 = vld [vmem:[#allocation3 + $0x84] sm:$0xff]
      %v1682 = vld [vmem:[#allocation3 + $0x8c] sm:$0xf]
      %v1683 = vld [vmem:[#allocation3 + $0x90] sm:$0xff]
      %v1684 = vld [vmem:[#allocation3 + $0x98] sm:$0xff]
      %v1685 = vld [vmem:[#allocation3 + $0xa0] sm:$0xff]
      %v1686 = vld [vmem:[#allocation3 + $0xa8] sm:$0xff]
      %v1687 = vld [vmem:[#allocation3 + $0xb0] sm:$0xf]
      %v1688 = vld [vmem:[#allocation3 + $0xb4] sm:$0xff]
      %v1689 = vld [vmem:[#allocation3 + $0xbc] sm:$0xff]
      %v1690 = vld [vmem:[#allocation3 + $0xc4] sm:$0xff]
      %v1691 = vld [vmem:[#allocation3 + $0xcc] sm:$0xff]
      %v1692 = vld [vmem:[#allocation3 + $0xd4] sm:$0xf]
      %v1693 = vld [vmem:[#allocation3 + $0xd8] sm:$0xff]
      %v1694 = vld [vmem:[#allocation3 + $0xe0] sm:$0xff]
      %v1695 = vld [vmem:[#allocation3 + $0xe8] sm:$0xff]
      %v1696 = vld [vmem:[#allocation3 + $0xf0] sm:$0xff]
      %v1697 = vld [vmem:[#allocation3 + $0xf8] sm:$0xf]
      %v1698 = vld [vmem:[#allocation3 + $0xfc] sm:$0xff]
      %v1699 = vld [vmem:[#allocation3 + $0x104] sm:$0xff]
      %v1700 = vld [vmem:[#allocation3 + $0x10c] sm:$0xff]
      %v1701 = vld [vmem:[#allocation3 + $0x114] sm:$0xff]
      %v1702 = vld [vmem:[#allocation3 + $0x11c] sm:$0xf]
      %v1703 = vld [vmem:[#allocation3 + $0x120] sm:$0xff]
      %v1704 = vld [vmem:[#allocation3 + $0x128] sm:$0xff]
      %v1705 = vld [vmem:[#allocation3 + $0x130] sm:$0xff]
      %v1706 = vld [vmem:[#allocation3 + $0x138] sm:$0xff]
      %v1707 = vld [vmem:[#allocation3 + $0x140] sm:$0xf]
      %v1708 = vld [vmem:[#allocation3 + $0x144] sm:$0xff]
      %v1709 = vld [vmem:[#allocation3 + $0x14c] sm:$0xff]
      %v1710 = vld [vmem:[#allocation3 + $0x154] sm:$0xff]
      %v1711 = vld [vmem:[#allocation3 + $0x15c] sm:$0xff]
      %v1712 = vld [vmem:[#allocation3 + $0x164] sm:$0xf]
      %v1713 = vld [vmem:[#allocation3 + $0x168] sm:$0xff]
      %v1714 = vld [vmem:[#allocation3 + $0x170] sm:$0xff]
      %v1715 = vld [vmem:[#allocation3 + $0x178] sm:$0xff]
      %v1716 = vld [vmem:[#allocation3 + $0x180] sm:$0xff]
      %v1717 = vld [vmem:[#allocation3 + $0x188] sm:$0xf]
      %v1718 = vld [vmem:[#allocation3 + $0x18c] sm:$0xff]
      %v1719 = vld [vmem:[#allocation3 + $0x194] sm:$0xff]
      %v1720 = vld [vmem:[#allocation3 + $0x19c] sm:$0xff]
      %v1721 = vld [vmem:[#allocation3 + $0x1a4] sm:$0xff]
      %v1722 = vld [vmem:[#allocation3 + $0x1ac] sm:$0xf]
      %v1723 = vld [vmem:[#allocation3 + $0x1b0] sm:$0xff]
      %v1724 = vld [vmem:[#allocation3 + $0x1b8] sm:$0xff]
      %v1725 = vld [vmem:[#allocation3 + $0x1c0] sm:$0xff]
      %v1726 = vld [vmem:[#allocation3 + $0x1c8] sm:$0xff]
      %v1727 = vld [vmem:[#allocation3 + $0x1d0] sm:$0xf]
      %v1728 = vld [vmem:[#allocation3 + $0x1d4] sm:$0xff]
      %v1729 = vld [vmem:[#allocation3 + $0x1dc] sm:$0xff]
      %v1730 = vld [vmem:[#allocation3 + $0x1e4] sm:$0xff]
      %v1731 = vld [vmem:[#allocation3 + $0x1ec] sm:$0xff]
      %v1732 = vld [vmem:[#allocation3 + $0x1f4] sm:$0xf]
      %v1733 = vld [vmem:[#allocation3 + $0x1f8] sm:$0xff]
      %v1734 = vld [vmem:[#allocation3 + $0x200] sm:$0xff]
      %v1735 = vld [vmem:[#allocation3 + $0x208] sm:$0xff]
      %v1736 = vld [vmem:[#allocation3 + $0x210] sm:$0xff]
      %v1737 = vld [vmem:[#allocation3 + $0x218] sm:$0xf]
      %v1738 = vld [vmem:[#allocation3 + $0x21c] sm:$0xff]
      %v1739 = vld [vmem:[#allocation3 + $0x224] sm:$0xff]
      %v1740 = vld [vmem:[#allocation3 + $0x22c] sm:$0xff]
      %v1741 = vld [vmem:[#allocation3 + $0x234] sm:$0xff]
      %v1742 = vld [vmem:[#allocation3 + $0x23c] sm:$0xf]
      %v1743 = vld [vmem:[%s2] sm:$0xf]
      %v1744 = vld [vmem:[%s2 + $0x4] sm:$0xf]
      %v1745 = vld [vmem:[%s2 + $0x8] sm:$0xf]
      %v1746 = vld [vmem:[%s2 + $0xc] sm:$0xf]
      %v1747 = vld [vmem:[%s2 + $0x10] sm:$0xf]
      %v1748 = vld [vmem:[%s2 + $0x14] sm:$0xf]
      %v1749 = vld [vmem:[%s2 + $0x18] sm:$0xf]
      %v1750 = vld [vmem:[%s2 + $0x1c] sm:$0xf]
      %v1751 = vld [vmem:[%s2 + $0x20] sm:$0xf]
      %v1752 = vld [vmem:[%s2 + $0x24] sm:$0xf]
      %v1753 = vld [vmem:[%s2 + $0x28] sm:$0xf]
      %v1754 = vld [vmem:[%s2 + $0x2c] sm:$0xf]
      %v1755 = vld [vmem:[%s2 + $0x30] sm:$0xf]
      %v1756 = vld [vmem:[%s2 + $0x34] sm:$0xf]
      %v1757 = vld [vmem:[%s2 + $0x38] sm:$0xf]
      %v1758 = vld [vmem:[%s2 + $0x3c] sm:$0xf]
      %v1759 = vld [vmem:[%s2 + $0x40] sm:$0xf]
      %v1760 = vld [vmem:[%s2 + $0x44] sm:$0xf]
      %v1761 = vld [vmem:[%s2 + $0x48] sm:$0xf]
      %v1762 = vld [vmem:[%s2 + $0x4c] sm:$0xf]
      %v1763 = vld [vmem:[%s2 + $0x50] sm:$0xf]
      %v1764 = vld [vmem:[%s2 + $0x54] sm:$0xf]
      %v1765 = vld [vmem:[%s2 + $0x58] sm:$0xf]
      %v1766 = vld [vmem:[%s2 + $0x5c] sm:$0xf]
      %v1767 = vld [vmem:[%s2 + $0x60] sm:$0xf]
      %v1768 = vld [vmem:[%s2 + $0x64] sm:$0xf]
      %v1769 = vld [vmem:[%s2 + $0x68] sm:$0xf]
      %v1770 = vld [vmem:[%s2 + $0x6c] sm:$0xf]
      %v1771 = vld [vmem:[%s2 + $0x70] sm:$0xf]
      %v1772 = vld [vmem:[%s2 + $0x74] sm:$0xf]
      %v1773 = vld [vmem:[%s2 + $0x78] sm:$0xf]
      %v1774 = vld [vmem:[%s2 + $0x7c] sm:$0xf]
      %v1775 = vld [vmem:[%s2 + $0x80] sm:$0xf]
      %v1776 = vld [vmem:[%s2 + $0x84] sm:$0xf]
      %v1777 = vld [vmem:[%s2 + $0x88] sm:$0xf]
      %v1778 = vld [vmem:[%s2 + $0x8c] sm:$0xf]
      %v1779 = vld [vmem:[%s2 + $0x90] sm:$0xf]
      %v1780 = vld [vmem:[%s2 + $0x94] sm:$0xf]
      %v1781 = vld [vmem:[%s2 + $0x98] sm:$0xf]
      %v1782 = vld [vmem:[%s2 + $0x9c] sm:$0xf]
      %v1783 = vld [vmem:[%s2 + $0xa0] sm:$0xf]
      %v1784 = vld [vmem:[%s2 + $0xa4] sm:$0xf]
      %v1785 = vld [vmem:[%s2 + $0xa8] sm:$0xf]
      %v1786 = vld [vmem:[%s2 + $0xac] sm:$0xf]
      %v1787 = vld [vmem:[%s2 + $0xb0] sm:$0xf]
      %v1788 = vld [vmem:[%s2 + $0xb4] sm:$0xf]
      %v1789 = vld [vmem:[%s2 + $0xb8] sm:$0xf]
      %v1790 = vld [vmem:[%s2 + $0xbc] sm:$0xf]
      %v1791 = vld [vmem:[%s2 + $0xc0] sm:$0xf]
      %v1792 = vld [vmem:[%s2 + $0xc4] sm:$0xf]
      %v1793 = vld [vmem:[%s2 + $0xc8] sm:$0xf]
      %v1794 = vld [vmem:[%s2 + $0xcc] sm:$0xf]
      %v1795 = vld [vmem:[%s2 + $0xd0] sm:$0xf]
      %v1796 = vld [vmem:[%s2 + $0xd4] sm:$0xf]
      %v1797 = vld [vmem:[%s2 + $0xd8] sm:$0xf]
      %v1798 = vld [vmem:[%s2 + $0xdc] sm:$0xf]
      %v1799 = vld [vmem:[%s2 + $0xe0] sm:$0xf]
      %v1800 = vld [vmem:[%s2 + $0xe4] sm:$0xf]
      %v1801 = vld [vmem:[%s2 + $0xe8] sm:$0xf]
      %v1802 = vld [vmem:[%s2 + $0xec] sm:$0xf]
      %v1803 = vld [vmem:[%s2 + $0xf0] sm:$0xf]
      %v1804 = vld [vmem:[%s2 + $0xf4] sm:$0xf]
      %v1805 = vld [vmem:[%s2 + $0xf8] sm:$0xf]
      %v1806 = vld [vmem:[%s2 + $0xfc] sm:$0xf]
      %v1807 = vld [vmem:[%s2 + $0x100] sm:$0xf]
      %v1808 = vld [vmem:[%s2 + $0x104] sm:$0xf]
      %v1809 = vld [vmem:[%s2 + $0x108] sm:$0xf]
      %v1810 = vld [vmem:[%s2 + $0x10c] sm:$0xf]
      %v1811 = vld [vmem:[%s2 + $0x110] sm:$0xf]
      %v1812 = vld [vmem:[%s2 + $0x114] sm:$0xf]
      %v1813 = vld [vmem:[%s2 + $0x118] sm:$0xf]
      %v1814 = vld [vmem:[%s2 + $0x11c] sm:$0xf]
      %v1815 = vld [vmem:[%s2 + $0x120] sm:$0xf]
      %v1816 = vld [vmem:[%s2 + $0x124] sm:$0xf]
      %v1817 = vld [vmem:[%s2 + $0x128] sm:$0xf]
      %v1818 = vld [vmem:[%s2 + $0x12c] sm:$0xf]
      %v1819 = vld [vmem:[%s2 + $0x130] sm:$0xf]
      %v1820 = vld [vmem:[%s2 + $0x134] sm:$0xf]
      %v1821 = vld [vmem:[%s2 + $0x138] sm:$0xf]
      %v1822 = vld [vmem:[%s2 + $0x13c] sm:$0xf]
      %v1823 = vld [vmem:[%s2 + $0x140] sm:$0xf]
      %v1824 = vld [vmem:[%s2 + $0x144] sm:$0xf]
      %v1825 = vld [vmem:[%s2 + $0x148] sm:$0xf]
      %v1826 = vld [vmem:[%s2 + $0x14c] sm:$0xf]
      %v1827 = vld [vmem:[%s2 + $0x150] sm:$0xf]
      %v1828 = vld [vmem:[%s2 + $0x154] sm:$0xf]
      %v1829 = vld [vmem:[%s2 + $0x158] sm:$0xf]
      %v1830 = vld [vmem:[%s2 + $0x15c] sm:$0xf]
      %v1831 = vld [vmem:[%s2 + $0x160] sm:$0xf]
      %v1832 = vld [vmem:[%s2 + $0x164] sm:$0xf]
      %v1833 = vld [vmem:[%s2 + $0x168] sm:$0xf]
      %v1834 = vld [vmem:[%s2 + $0x16c] sm:$0xf]
      %v1835 = vld [vmem:[%s2 + $0x170] sm:$0xf]
      %v1836 = vld [vmem:[%s2 + $0x174] sm:$0xf]
      %v1837 = vld [vmem:[%s2 + $0x178] sm:$0xf]
      %v1838 = vld [vmem:[%s2 + $0x17c] sm:$0xf]
      %v1839 = vld [vmem:[%s2 + $0x180] sm:$0xf]
      %v1840 = vld [vmem:[%s2 + $0x184] sm:$0xf]
      %v1841 = vld [vmem:[%s2 + $0x188] sm:$0xf]
      %v1842 = vld [vmem:[%s2 + $0x18c] sm:$0xf]
      %v1843 = vld [vmem:[%s2 + $0x190] sm:$0xf]
      %v1844 = vld [vmem:[%s2 + $0x194] sm:$0xf]
      %v1845 = vld [vmem:[%s2 + $0x198] sm:$0xf]
      %v1846 = vld [vmem:[%s2 + $0x19c] sm:$0xf]
      %v1847 = vld [vmem:[%s2 + $0x1a0] sm:$0xf]
      %v1848 = vld [vmem:[%s2 + $0x1a4] sm:$0xf]
      %v1849 = vld [vmem:[%s2 + $0x1a8] sm:$0xf]
      %v1850 = vld [vmem:[%s2 + $0x1ac] sm:$0xf]
      %v1851 = vld [vmem:[%s2 + $0x1b0] sm:$0xf]
      %v1852 = vld [vmem:[%s2 + $0x1b4] sm:$0xf]
      %v1853 = vld [vmem:[%s2 + $0x1b8] sm:$0xf]
      %v1854 = vld [vmem:[%s2 + $0x1bc] sm:$0xf]
      %v1855 = vld [vmem:[%s2 + $0x1c0] sm:$0xf]
      %v1856 = vld [vmem:[%s2 + $0x1c4] sm:$0xf]
      %v1857 = vld [vmem:[%s2 + $0x1c8] sm:$0xf]
      %v1858 = vld [vmem:[%s2 + $0x1cc] sm:$0xf]
      %v1859 = vld [vmem:[%s2 + $0x1d0] sm:$0xf]
      %v1860 = vld [vmem:[%s2 + $0x1d4] sm:$0xf]
      %v1861 = vld [vmem:[%s2 + $0x1d8] sm:$0xf]
      %v1862 = vld [vmem:[%s2 + $0x1dc] sm:$0xf]
      %v1863 = vld [vmem:[%s2 + $0x1e0] sm:$0xf]
      %v1864 = vld [vmem:[%s2 + $0x1e4] sm:$0xf]
      %v1865 = vld [vmem:[%s2 + $0x1e8] sm:$0xf]
      %v1866 = vld [vmem:[%s2 + $0x1ec] sm:$0xf]
      %v1867 = vld [vmem:[%s2 + $0x1f0] sm:$0xf]
      %v1868 = vld [vmem:[%s2 + $0x1f4] sm:$0xf]
      %v1869 = vld [vmem:[%s2 + $0x1f8] sm:$0xf]
      %v1870 = vld [vmem:[%s2 + $0x1fc] sm:$0xf]
      %v1871 = vld [vmem:[%s2 + $0x200] sm:$0xf]
      %v1872 = vld [vmem:[%s2 + $0x204] sm:$0xf]
      %v1873 = vld [vmem:[%s2 + $0x208] sm:$0xf]
      %v1874 = vld [vmem:[%s2 + $0x20c] sm:$0xf]
      %v1875 = vld [vmem:[%s2 + $0x210] sm:$0xf]
      %v1876 = vld [vmem:[%s2 + $0x214] sm:$0xf]
      %v1877 = vld [vmem:[%s2 + $0x218] sm:$0xf]
      %v1878 = vld [vmem:[%s2 + $0x21c] sm:$0xf]
      %v1879 = vld [vmem:[%s2 + $0x220] sm:$0xf]
      %v1880 = vld [vmem:[%s2 + $0x224] sm:$0xf]
      %v1881 = vld [vmem:[%s2 + $0x228] sm:$0xf]
      %v1882 = vld [vmem:[%s2 + $0x22c] sm:$0xf]
      %v1883 = vld [vmem:[%s2 + $0x230] sm:$0xf]
      %v1884 = vld [vmem:[%s2 + $0x234] sm:$0xf]
      %v1885 = vld [vmem:[%s2 + $0x238] sm:$0xf]
      %v1886 = vld [vmem:[%s2 + $0x23c] sm:$0xf]
      %v1967 = vunpack.c.l.b16 %v1663
      %v1968 = vunpack.c.h.b16 %v1663
      %v1969 = vunpack.c.l.b16 %v1664
      %v1970 = vunpack.c.h.b16 %v1664
      %v1971 = vunpack.c.l.b16 %v1665
      %v1972 = vunpack.c.h.b16 %v1665
      %v1973 = vunpack.c.l.b16 %v1666
      %v1974 = vunpack.c.h.b16 %v1666
      %v1975 = vunpack.c.l.b16 %v1667
      %v1976 = vunpack.c.l.b16 %v1668
      %v1977 = vunpack.c.h.b16 %v1668
      %v1978 = vunpack.c.l.b16 %v1669
      %v1979 = vunpack.c.h.b16 %v1669
      %v1980 = vunpack.c.l.b16 %v1670
      %v1981 = vunpack.c.h.b16 %v1670
      %v1982 = vunpack.c.l.b16 %v1671
      %v1983 = vunpack.c.h.b16 %v1671
      %v1984 = vunpack.c.l.b16 %v1672
      %v1985 = vunpack.c.l.b16 %v1673
      %v1986 = vunpack.c.h.b16 %v1673
      %v1987 = vunpack.c.l.b16 %v1674
      %v1988 = vunpack.c.h.b16 %v1674
      %v1989 = vunpack.c.l.b16 %v1675
      %v1990 = vunpack.c.h.b16 %v1675
      %v1991 = vunpack.c.l.b16 %v1676
      %v1992 = vunpack.c.h.b16 %v1676
      %v1993 = vunpack.c.l.b16 %v1677
      %v1994 = vunpack.c.l.b16 %v1678
      %v1995 = vunpack.c.h.b16 %v1678
      %v1996 = vunpack.c.l.b16 %v1679
      %v1997 = vunpack.c.h.b16 %v1679
      %v1998 = vunpack.c.l.b16 %v1680
      %v1999 = vunpack.c.h.b16 %v1680
      %v2000 = vunpack.c.l.b16 %v1681
      %v2001 = vunpack.c.h.b16 %v1681
      %v2002 = vunpack.c.l.b16 %v1682
      %v2003 = vunpack.c.l.b16 %v1683
      %v2004 = vunpack.c.h.b16 %v1683
      %v2005 = vunpack.c.l.b16 %v1684
      %v2006 = vunpack.c.h.b16 %v1684
      %v2007 = vunpack.c.l.b16 %v1685
      %v2008 = vunpack.c.h.b16 %v1685
      %v2009 = vunpack.c.l.b16 %v1686
      %v2010 = vunpack.c.h.b16 %v1686
      %v2011 = vunpack.c.l.b16 %v1687
      %v2012 = vunpack.c.l.b16 %v1688
      %v2013 = vunpack.c.h.b16 %v1688
      %v2014 = vunpack.c.l.b16 %v1689
      %v2015 = vunpack.c.h.b16 %v1689
      %v2016 = vunpack.c.l.b16 %v1690
      %v2017 = vunpack.c.h.b16 %v1690
      %v2018 = vunpack.c.l.b16 %v1691
      %v2019 = vunpack.c.h.b16 %v1691
      %v2020 = vunpack.c.l.b16 %v1692
      %v2021 = vunpack.c.l.b16 %v1693
      %v2022 = vunpack.c.h.b16 %v1693
      %v2023 = vunpack.c.l.b16 %v1694
      %v2024 = vunpack.c.h.b16 %v1694
      %v2025 = vunpack.c.l.b16 %v1695
      %v2026 = vunpack.c.h.b16 %v1695
      %v2027 = vunpack.c.l.b16 %v1696
      %v2028 = vunpack.c.h.b16 %v1696
      %v2029 = vunpack.c.l.b16 %v1697
      %v2030 = vunpack.c.l.b16 %v1698
      %v2031 = vunpack.c.h.b16 %v1698
      %v2032 = vunpack.c.l.b16 %v1699
      %v2033 = vunpack.c.h.b16 %v1699
      %v2034 = vunpack.c.l.b16 %v1700
      %v2035 = vunpack.c.h.b16 %v1700
      %v2036 = vunpack.c.l.b16 %v1701
      %v2037 = vunpack.c.h.b16 %v1701
      %v2038 = vunpack.c.l.b16 %v1702
      %v2039 = vunpack.c.l.b16 %v1703
      %v2040 = vunpack.c.h.b16 %v1703
      %v2041 = vunpack.c.l.b16 %v1704
      %v2042 = vunpack.c.h.b16 %v1704
      %v2043 = vunpack.c.l.b16 %v1705
      %v2044 = vunpack.c.h.b16 %v1705
      %v2045 = vunpack.c.l.b16 %v1706
      %v2046 = vunpack.c.h.b16 %v1706
      %v2047 = vunpack.c.l.b16 %v1707
      %v2048 = vunpack.c.l.b16 %v1708
      %v2049 = vunpack.c.h.b16 %v1708
      %v2050 = vunpack.c.l.b16 %v1709
      %v2051 = vunpack.c.h.b16 %v1709
      %v2052 = vunpack.c.l.b16 %v1710
      %v2053 = vunpack.c.h.b16 %v1710
      %v2054 = vunpack.c.l.b16 %v1711
      %v2055 = vunpack.c.h.b16 %v1711
      %v2056 = vunpack.c.l.b16 %v1712
      %v2057 = vunpack.c.l.b16 %v1713
      %v2058 = vunpack.c.h.b16 %v1713
      %v2059 = vunpack.c.l.b16 %v1714
      %v2060 = vunpack.c.h.b16 %v1714
      %v2061 = vunpack.c.l.b16 %v1715
      %v2062 = vunpack.c.h.b16 %v1715
      %v2063 = vunpack.c.l.b16 %v1716
      %v2064 = vunpack.c.h.b16 %v1716
      %v2065 = vunpack.c.l.b16 %v1717
      %v2066 = vunpack.c.l.b16 %v1718
      %v2067 = vunpack.c.h.b16 %v1718
      %v2068 = vunpack.c.l.b16 %v1719
      %v2069 = vunpack.c.h.b16 %v1719
      %v2070 = vunpack.c.l.b16 %v1720
      %v2071 = vunpack.c.h.b16 %v1720
      %v2072 = vunpack.c.l.b16 %v1721
      %v2073 = vunpack.c.h.b16 %v1721
      %v2074 = vunpack.c.l.b16 %v1722
      %v2075 = vunpack.c.l.b16 %v1723
      %v2076 = vunpack.c.h.b16 %v1723
      %v2077 = vunpack.c.l.b16 %v1724
      %v2078 = vunpack.c.h.b16 %v1724
      %v2079 = vunpack.c.l.b16 %v1725
      %v2080 = vunpack.c.h.b16 %v1725
      %v2081 = vunpack.c.l.b16 %v1726
      %v2082 = vunpack.c.h.b16 %v1726
      %v2083 = vunpack.c.l.b16 %v1727
      %v2084 = vunpack.c.l.b16 %v1728
      %v2085 = vunpack.c.h.b16 %v1728
      %v2086 = vunpack.c.l.b16 %v1729
      %v2087 = vunpack.c.h.b16 %v1729
      %v2088 = vunpack.c.l.b16 %v1730
      %v2089 = vunpack.c.h.b16 %v1730
      %v2090 = vunpack.c.l.b16 %v1731
      %v2091 = vunpack.c.h.b16 %v1731
      %v2092 = vunpack.c.l.b16 %v1732
      %v2093 = vunpack.c.l.b16 %v1733
      %v2094 = vunpack.c.h.b16 %v1733
      %v2095 = vunpack.c.l.b16 %v1734
      %v2096 = vunpack.c.h.b16 %v1734
      %v2097 = vunpack.c.l.b16 %v1735
      %v2098 = vunpack.c.h.b16 %v1735
      %v2099 = vunpack.c.l.b16 %v1736
      %v2100 = vunpack.c.h.b16 %v1736
      %v2101 = vunpack.c.l.b16 %v1737
      %v2102 = vunpack.c.l.b16 %v1738
      %v2103 = vunpack.c.h.b16 %v1738
      %v2104 = vunpack.c.l.b16 %v1739
      %v2105 = vunpack.c.h.b16 %v1739
      %v2106 = vunpack.c.l.b16 %v1740
      %v2107 = vunpack.c.h.b16 %v1740
      %v2108 = vunpack.c.l.b16 %v1741
      %v2109 = vunpack.c.h.b16 %v1741
      %v2110 = vunpack.c.l.b16 %v1742
      %v2111 = vpack.c.b16 %v1976, %v1967
      %v2112 = vpack.c.b16 %v1977, %v1968
      %v2113 = vpack.c.b16 %v1978, %v1969
      %v2114 = vpack.c.b16 %v1979, %v1970
      %v2115 = vpack.c.b16 %v1980, %v1971
      %v2116 = vpack.c.b16 %v1981, %v1972
      %v2117 = vpack.c.b16 %v1982, %v1973
      %v2118 = vpack.c.b16 %v1983, %v1974
      %v2119 = vpack.c.b16 %v1984, %v1975
      %v2120 = vpack.c.b16 %v1994, %v1985
      %v2121 = vpack.c.b16 %v1995, %v1986
      %v2122 = vpack.c.b16 %v1996, %v1987
      %v2123 = vpack.c.b16 %v1997, %v1988
      %v2124 = vpack.c.b16 %v1998, %v1989
      %v2125 = vpack.c.b16 %v1999, %v1990
      %v2126 = vpack.c.b16 %v2000, %v1991
      %v2127 = vpack.c.b16 %v2001, %v1992
      %v2128 = vpack.c.b16 %v2002, %v1993
      %v2129 = vpack.c.b16 %v2012, %v2003
      %v2130 = vpack.c.b16 %v2013, %v2004
      %v2131 = vpack.c.b16 %v2014, %v2005
      %v2132 = vpack.c.b16 %v2015, %v2006
      %v2133 = vpack.c.b16 %v2016, %v2007
      %v2134 = vpack.c.b16 %v2017, %v2008
      %v2135 = vpack.c.b16 %v2018, %v2009
      %v2136 = vpack.c.b16 %v2019, %v2010
      %v2137 = vpack.c.b16 %v2020, %v2011
      %v2138 = vpack.c.b16 %v2030, %v2021
      %v2139 = vpack.c.b16 %v2031, %v2022
      %v2140 = vpack.c.b16 %v2032, %v2023
      %v2141 = vpack.c.b16 %v2033, %v2024
      %v2142 = vpack.c.b16 %v2034, %v2025
      %v2143 = vpack.c.b16 %v2035, %v2026
      %v2144 = vpack.c.b16 %v2036, %v2027
      %v2145 = vpack.c.b16 %v2037, %v2028
      %v2146 = vpack.c.b16 %v2038, %v2029
      %v2147 = vpack.c.b16 %v2048, %v2039
      %v2148 = vpack.c.b16 %v2049, %v2040
      %v2149 = vpack.c.b16 %v2050, %v2041
      %v2150 = vpack.c.b16 %v2051, %v2042
      %v2151 = vpack.c.b16 %v2052, %v2043
      %v2152 = vpack.c.b16 %v2053, %v2044
      %v2153 = vpack.c.b16 %v2054, %v2045
      %v2154 = vpack.c.b16 %v2055, %v2046
      %v2155 = vpack.c.b16 %v2056, %v2047
      %v2156 = vpack.c.b16 %v2066, %v2057
      %v2157 = vpack.c.b16 %v2067, %v2058
      %v2158 = vpack.c.b16 %v2068, %v2059
      %v2159 = vpack.c.b16 %v2069, %v2060
      %v2160 = vpack.c.b16 %v2070, %v2061
      %v2161 = vpack.c.b16 %v2071, %v2062
      %v2162 = vpack.c.b16 %v2072, %v2063
      %v2163 = vpack.c.b16 %v2073, %v2064
      %v2164 = vpack.c.b16 %v2074, %v2065
      %v2165 = vpack.c.b16 %v2084, %v2075
      %v2166 = vpack.c.b16 %v2085, %v2076
      %v2167 = vpack.c.b16 %v2086, %v2077
      %v2168 = vpack.c.b16 %v2087, %v2078
      %v2169 = vpack.c.b16 %v2088, %v2079
      %v2170 = vpack.c.b16 %v2089, %v2080
      %v2171 = vpack.c.b16 %v2090, %v2081
      %v2172 = vpack.c.b16 %v2091, %v2082
      %v2173 = vpack.c.b16 %v2092, %v2083
      %v2174 = vpack.c.b16 %v2102, %v2093
      %v2175 = vpack.c.b16 %v2103, %v2094
      %v2176 = vpack.c.b16 %v2104, %v2095
      %v2177 = vpack.c.b16 %v2105, %v2096
      %v2178 = vpack.c.b16 %v2106, %v2097
      %v2179 = vpack.c.b16 %v2107, %v2098
      %v2180 = vpack.c.b16 %v2108, %v2099
      %v2181 = vpack.c.b16 %v2109, %v2100
      %v2182 = vpack.c.b16 %v2110, %v2101
      %v2399 = vunpack.c.l.b16 %v1743
      %v2400 = vunpack.c.l.b16 %v1744
      %v2401 = vunpack.c.l.b16 %v1745
      %v2402 = vunpack.c.l.b16 %v1746
      %v2403 = vunpack.c.l.b16 %v1747
      %v2404 = vunpack.c.l.b16 %v1748
      %v2405 = vunpack.c.l.b16 %v1749
      %v2406 = vunpack.c.l.b16 %v1750
      %v2407 = vunpack.c.l.b16 %v1751
      %v2408 = vunpack.c.l.b16 %v1752
      %v2409 = vunpack.c.l.b16 %v1753
      %v2410 = vunpack.c.l.b16 %v1754
      %v2411 = vunpack.c.l.b16 %v1755
      %v2412 = vunpack.c.l.b16 %v1756
      %v2413 = vunpack.c.l.b16 %v1757
      %v2414 = vunpack.c.l.b16 %v1758
      %v2415 = vunpack.c.l.b16 %v1759
      %v2416 = vunpack.c.l.b16 %v1760
      %v2417 = vunpack.c.l.b16 %v1761
      %v2418 = vunpack.c.l.b16 %v1762
      %v2419 = vunpack.c.l.b16 %v1763
      %v2420 = vunpack.c.l.b16 %v1764
      %v2421 = vunpack.c.l.b16 %v1765
      %v2422 = vunpack.c.l.b16 %v1766
      %v2423 = vunpack.c.l.b16 %v1767
      %v2424 = vunpack.c.l.b16 %v1768
      %v2425 = vunpack.c.l.b16 %v1769
      %v2426 = vunpack.c.l.b16 %v1770
      %v2427 = vunpack.c.l.b16 %v1771
      %v2428 = vunpack.c.l.b16 %v1772
      %v2429 = vunpack.c.l.b16 %v1773
      %v2430 = vunpack.c.l.b16 %v1774
      %v2431 = vunpack.c.l.b16 %v1775
      %v2432 = vunpack.c.l.b16 %v1776
      %v2433 = vunpack.c.l.b16 %v1777
      %v2434 = vunpack.c.l.b16 %v1778
      %v2435 = vunpack.c.l.b16 %v1779
      %v2436 = vunpack.c.l.b16 %v1780
      %v2437 = vunpack.c.l.b16 %v1781
      %v2438 = vunpack.c.l.b16 %v1782
      %v2439 = vunpack.c.l.b16 %v1783
      %v2440 = vunpack.c.l.b16 %v1784
      %v2441 = vunpack.c.l.b16 %v1785
      %v2442 = vunpack.c.l.b16 %v1786
      %v2443 = vunpack.c.l.b16 %v1787
      %v2444 = vunpack.c.l.b16 %v1788
      %v2445 = vunpack.c.l.b16 %v1789
      %v2446 = vunpack.c.l.b16 %v1790
      %v2447 = vunpack.c.l.b16 %v1791
      %v2448 = vunpack.c.l.b16 %v1792
      %v2449 = vunpack.c.l.b16 %v1793
      %v2450 = vunpack.c.l.b16 %v1794
      %v2451 = vunpack.c.l.b16 %v1795
      %v2452 = vunpack.c.l.b16 %v1796
      %v2453 = vunpack.c.l.b16 %v1797
      %v2454 = vunpack.c.l.b16 %v1798
      %v2455 = vunpack.c.l.b16 %v1799
      %v2456 = vunpack.c.l.b16 %v1800
      %v2457 = vunpack.c.l.b16 %v1801
      %v2458 = vunpack.c.l.b16 %v1802
      %v2459 = vunpack.c.l.b16 %v1803
      %v2460 = vunpack.c.l.b16 %v1804
      %v2461 = vunpack.c.l.b16 %v1805
      %v2462 = vunpack.c.l.b16 %v1806
      %v2463 = vunpack.c.l.b16 %v1807
      %v2464 = vunpack.c.l.b16 %v1808
      %v2465 = vunpack.c.l.b16 %v1809
      %v2466 = vunpack.c.l.b16 %v1810
      %v2467 = vunpack.c.l.b16 %v1811
      %v2468 = vunpack.c.l.b16 %v1812
      %v2469 = vunpack.c.l.b16 %v1813
      %v2470 = vunpack.c.l.b16 %v1814
      %v2471 = vunpack.c.l.b16 %v1815
      %v2472 = vunpack.c.l.b16 %v1816
      %v2473 = vunpack.c.l.b16 %v1817
      %v2474 = vunpack.c.l.b16 %v1818
      %v2475 = vunpack.c.l.b16 %v1819
      %v2476 = vunpack.c.l.b16 %v1820
      %v2477 = vunpack.c.l.b16 %v1821
      %v2478 = vunpack.c.l.b16 %v1822
      %v2479 = vunpack.c.l.b16 %v1823
      %v2480 = vunpack.c.l.b16 %v1824
      %v2481 = vunpack.c.l.b16 %v1825
      %v2482 = vunpack.c.l.b16 %v1826
      %v2483 = vunpack.c.l.b16 %v1827
      %v2484 = vunpack.c.l.b16 %v1828
      %v2485 = vunpack.c.l.b16 %v1829
      %v2486 = vunpack.c.l.b16 %v1830
      %v2487 = vunpack.c.l.b16 %v1831
      %v2488 = vunpack.c.l.b16 %v1832
      %v2489 = vunpack.c.l.b16 %v1833
      %v2490 = vunpack.c.l.b16 %v1834
      %v2491 = vunpack.c.l.b16 %v1835
      %v2492 = vunpack.c.l.b16 %v1836
      %v2493 = vunpack.c.l.b16 %v1837
      %v2494 = vunpack.c.l.b16 %v1838
      %v2495 = vunpack.c.l.b16 %v1839
      %v2496 = vunpack.c.l.b16 %v1840
      %v2497 = vunpack.c.l.b16 %v1841
      %v2498 = vunpack.c.l.b16 %v1842
      %v2499 = vunpack.c.l.b16 %v1843
      %v2500 = vunpack.c.l.b16 %v1844
      %v2501 = vunpack.c.l.b16 %v1845
      %v2502 = vunpack.c.l.b16 %v1846
      %v2503 = vunpack.c.l.b16 %v1847
      %v2504 = vunpack.c.l.b16 %v1848
      %v2505 = vunpack.c.l.b16 %v1849
      %v2506 = vunpack.c.l.b16 %v1850
      %v2507 = vunpack.c.l.b16 %v1851
      %v2508 = vunpack.c.l.b16 %v1852
      %v2509 = vunpack.c.l.b16 %v1853
      %v2510 = vunpack.c.l.b16 %v1854
      %v2511 = vunpack.c.l.b16 %v1855
      %v2512 = vunpack.c.l.b16 %v1856
      %v2513 = vunpack.c.l.b16 %v1857
      %v2514 = vunpack.c.l.b16 %v1858
      %v2515 = vunpack.c.l.b16 %v1859
      %v2516 = vunpack.c.l.b16 %v1860
      %v2517 = vunpack.c.l.b16 %v1861
      %v2518 = vunpack.c.l.b16 %v1862
      %v2519 = vunpack.c.l.b16 %v1863
      %v2520 = vunpack.c.l.b16 %v1864
      %v2521 = vunpack.c.l.b16 %v1865
      %v2522 = vunpack.c.l.b16 %v1866
      %v2523 = vunpack.c.l.b16 %v1867
      %v2524 = vunpack.c.l.b16 %v1868
      %v2525 = vunpack.c.l.b16 %v1869
      %v2526 = vunpack.c.l.b16 %v1870
      %v2527 = vunpack.c.l.b16 %v1871
      %v2528 = vunpack.c.l.b16 %v1872
      %v2529 = vunpack.c.l.b16 %v1873
      %v2530 = vunpack.c.l.b16 %v1874
      %v2531 = vunpack.c.l.b16 %v1875
      %v2532 = vunpack.c.l.b16 %v1876
      %v2533 = vunpack.c.l.b16 %v1877
      %v2534 = vunpack.c.l.b16 %v1878
      %v2535 = vunpack.c.l.b16 %v1879
      %v2536 = vunpack.c.l.b16 %v1880
      %v2537 = vunpack.c.l.b16 %v1881
      %v2538 = vunpack.c.l.b16 %v1882
      %v2539 = vunpack.c.l.b16 %v1883
      %v2540 = vunpack.c.l.b16 %v1884
      %v2541 = vunpack.c.l.b16 %v1885
      %v2542 = vunpack.c.l.b16 %v1886
      %v2543 = vpack.c.b16 %v2400, %v2399
      %v2544 = vpack.c.b16 %v2402, %v2401
      %v2545 = vpack.c.b16 %v2404, %v2403
      %v2546 = vpack.c.b16 %v2406, %v2405
      %v2547 = vpack.c.b16 %v2408, %v2407
      %v2548 = vpack.c.b16 %v2410, %v2409
      %v2549 = vpack.c.b16 %v2412, %v2411
      %v2550 = vpack.c.b16 %v2414, %v2413
      %v2551 = vpack.c.b16 %v2416, %v2415
      %v2552 = vpack.c.b16 %v2418, %v2417
      %v2553 = vpack.c.b16 %v2420, %v2419
      %v2554 = vpack.c.b16 %v2422, %v2421
      %v2555 = vpack.c.b16 %v2424, %v2423
      %v2556 = vpack.c.b16 %v2426, %v2425
      %v2557 = vpack.c.b16 %v2428, %v2427
      %v2558 = vpack.c.b16 %v2430, %v2429
      %v2559 = vpack.c.b16 %v2432, %v2431
      %v2560 = vpack.c.b16 %v2434, %v2433
      %v2561 = vpack.c.b16 %v2436, %v2435
      %v2562 = vpack.c.b16 %v2438, %v2437
      %v2563 = vpack.c.b16 %v2440, %v2439
      %v2564 = vpack.c.b16 %v2442, %v2441
      %v2565 = vpack.c.b16 %v2444, %v2443
      %v2566 = vpack.c.b16 %v2446, %v2445
      %v2567 = vpack.c.b16 %v2448, %v2447
      %v2568 = vpack.c.b16 %v2450, %v2449
      %v2569 = vpack.c.b16 %v2452, %v2451
      %v2570 = vpack.c.b16 %v2454, %v2453
      %v2571 = vpack.c.b16 %v2456, %v2455
      %v2572 = vpack.c.b16 %v2458, %v2457
      %v2573 = vpack.c.b16 %v2460, %v2459
      %v2574 = vpack.c.b16 %v2462, %v2461
      %v2575 = vpack.c.b16 %v2464, %v2463
      %v2576 = vpack.c.b16 %v2466, %v2465
      %v2577 = vpack.c.b16 %v2468, %v2467
      %v2578 = vpack.c.b16 %v2470, %v2469
      %v2579 = vpack.c.b16 %v2472, %v2471
      %v2580 = vpack.c.b16 %v2474, %v2473
      %v2581 = vpack.c.b16 %v2476, %v2475
      %v2582 = vpack.c.b16 %v2478, %v2477
      %v2583 = vpack.c.b16 %v2480, %v2479
      %v2584 = vpack.c.b16 %v2482, %v2481
      %v2585 = vpack.c.b16 %v2484, %v2483
      %v2586 = vpack.c.b16 %v2486, %v2485
      %v2587 = vpack.c.b16 %v2488, %v2487
      %v2588 = vpack.c.b16 %v2490, %v2489
      %v2589 = vpack.c.b16 %v2492, %v2491
      %v2590 = vpack.c.b16 %v2494, %v2493
      %v2591 = vpack.c.b16 %v2496, %v2495
      %v2592 = vpack.c.b16 %v2498, %v2497
      %v2593 = vpack.c.b16 %v2500, %v2499
      %v2594 = vpack.c.b16 %v2502, %v2501
      %v2595 = vpack.c.b16 %v2504, %v2503
      %v2596 = vpack.c.b16 %v2506, %v2505
      %v2597 = vpack.c.b16 %v2508, %v2507
      %v2598 = vpack.c.b16 %v2510, %v2509
      %v2599 = vpack.c.b16 %v2512, %v2511
      %v2600 = vpack.c.b16 %v2514, %v2513
      %v2601 = vpack.c.b16 %v2516, %v2515
      %v2602 = vpack.c.b16 %v2518, %v2517
      %v2603 = vpack.c.b16 %v2520, %v2519
      %v2604 = vpack.c.b16 %v2522, %v2521
      %v2605 = vpack.c.b16 %v2524, %v2523
      %v2606 = vpack.c.b16 %v2526, %v2525
      %v2607 = vpack.c.b16 %v2528, %v2527
      %v2608 = vpack.c.b16 %v2530, %v2529
      %v2609 = vpack.c.b16 %v2532, %v2531
      %v2610 = vpack.c.b16 %v2534, %v2533
      %v2611 = vpack.c.b16 %v2536, %v2535
      %v2612 = vpack.c.b16 %v2538, %v2537
      %v2613 = vpack.c.b16 %v2540, %v2539
      %v2614 = vpack.c.b16 %v2542, %v2541
      %2687 = vmatpush.bf16.msra.mxu0 %v2550
      %2688 = vmatpush.bf16.msra.mxu0 %v2549
      %2689 = vmatpush.bf16.msra.mxu0 %v2548
      %2690 = vmatpush.bf16.msra.mxu0 %v2547
      %2691 = vmatpush.bf16.msra.mxu0 %v2546
      %2692 = vmatpush.bf16.msra.mxu0 %v2545
      %2693 = vmatpush.bf16.msra.mxu0 %v2544
      %2694 = vmatpush.bf16.msra.mxu0 %v2543
      %2695 = vmatmul.bf16.gmra.mxu0 %v2111
      %v2696 = vpop.f32.mrf.mxu0
      %v2697 = vadd.f32 0.0, %v2696
      %v2698 = vpop.f32.mrf.mxu0
      %v2699 = vadd.f32 0.0, %v2698
      %2700 = vmatmul.bf16.gmra.mxu0 %v2120
      %v2701 = vpop.f32.mrf.mxu0
      %v2702 = vadd.f32 0.0, %v2701
      %v2703 = vpop.f32.mrf.mxu0
      %v2704 = vadd.f32 0.0, %v2703
      %2705 = vmatmul.bf16.gmra.mxu0 %v2129
      %v2706 = vpop.f32.mrf.mxu0
      %v2707 = vadd.f32 0.0, %v2706
      %v2708 = vpop.f32.mrf.mxu0
      %v2709 = vadd.f32 0.0, %v2708
      %2710 = vmatmul.bf16.gmra.mxu0 %v2138
      %v2711 = vpop.f32.mrf.mxu0
      %v2712 = vadd.f32 0.0, %v2711
      %v2713 = vpop.f32.mrf.mxu0
      %v2714 = vadd.f32 0.0, %v2713
      %2715 = vmatmul.bf16.gmra.mxu0 %v2147
      %v2716 = vpop.f32.mrf.mxu0
      %v2717 = vadd.f32 0.0, %v2716
      %v2718 = vpop.f32.mrf.mxu0
      %v2719 = vadd.f32 0.0, %v2718
      %2720 = vmatmul.bf16.gmra.mxu0 %v2156
      %v2721 = vpop.f32.mrf.mxu0
      %v2722 = vadd.f32 0.0, %v2721
      %v2723 = vpop.f32.mrf.mxu0
      %v2724 = vadd.f32 0.0, %v2723
      %2725 = vmatmul.bf16.gmra.mxu0 %v2165
      %v2726 = vpop.f32.mrf.mxu0
      %v2727 = vadd.f32 0.0, %v2726
      %v2728 = vpop.f32.mrf.mxu0
      %v2729 = vadd.f32 0.0, %v2728
      %2730 = vmatmul.bf16.gmra.mxu0 %v2174
      %v2731 = vpop.f32.mrf.mxu0
      %v2732 = vadd.f32 0.0, %v2731
      %v2733 = vpop.f32.mrf.mxu0
      %v2734 = vadd.f32 0.0, %v2733
      %2735 = vdwg.mxu0
      %2736 = vmatpush.bf16.msra.mxu0 %v2558
      %2737 = vmatpush.bf16.msra.mxu0 %v2557
      %2738 = vmatpush.bf16.msra.mxu0 %v2556
      %2739 = vmatpush.bf16.msra.mxu0 %v2555
      %2740 = vmatpush.bf16.msra.mxu0 %v2554
      %2741 = vmatpush.bf16.msra.mxu0 %v2553
      %2742 = vmatpush.bf16.msra.mxu0 %v2552
      %2743 = vmatpush.bf16.msra.mxu0 %v2551
      %2744 = vmatmul.bf16.gmra.mxu0 %v2112
      %v2745 = vpop.f32.mrf.mxu0
      %v2746 = vadd.f32 %v2697, %v2745
      %v2747 = vpop.f32.mrf.mxu0
      %v2748 = vadd.f32 %v2699, %v2747
      %2749 = vmatmul.bf16.gmra.mxu0 %v2121
      %v2750 = vpop.f32.mrf.mxu0
      %v2751 = vadd.f32 %v2702, %v2750
      %v2752 = vpop.f32.mrf.mxu0
      %v2753 = vadd.f32 %v2704, %v2752
      %2754 = vmatmul.bf16.gmra.mxu0 %v2130
      %v2755 = vpop.f32.mrf.mxu0
      %v2756 = vadd.f32 %v2707, %v2755
      %v2757 = vpop.f32.mrf.mxu0
      %v2758 = vadd.f32 %v2709, %v2757
      %2759 = vmatmul.bf16.gmra.mxu0 %v2139
      %v2760 = vpop.f32.mrf.mxu0
      %v2761 = vadd.f32 %v2712, %v2760
      %v2762 = vpop.f32.mrf.mxu0
      %v2763 = vadd.f32 %v2714, %v2762
      %2764 = vmatmul.bf16.gmra.mxu0 %v2148
      %v2765 = vpop.f32.mrf.mxu0
      %v2766 = vadd.f32 %v2717, %v2765
      %v2767 = vpop.f32.mrf.mxu0
      %v2768 = vadd.f32 %v2719, %v2767
      %2769 = vmatmul.bf16.gmra.mxu0 %v2157
      %v2770 = vpop.f32.mrf.mxu0
      %v2771 = vadd.f32 %v2722, %v2770
      %v2772 = vpop.f32.mrf.mxu0
      %v2773 = vadd.f32 %v2724, %v2772
      %2774 = vmatmul.bf16.gmra.mxu0 %v2166
      %v2775 = vpop.f32.mrf.mxu0
      %v2776 = vadd.f32 %v2727, %v2775
      %v2777 = vpop.f32.mrf.mxu0
      %v2778 = vadd.f32 %v2729, %v2777
      %2779 = vmatmul.bf16.gmra.mxu0 %v2175
      %v2780 = vpop.f32.mrf.mxu0
      %v2781 = vadd.f32 %v2732, %v2780
      %v2782 = vpop.f32.mrf.mxu0
      %v2783 = vadd.f32 %v2734, %v2782
      %2784 = vdwg.mxu0
      %2785 = vmatpush.bf16.msra.mxu0 %v2566
      %2786 = vmatpush.bf16.msra.mxu0 %v2565
      %2787 = vmatpush.bf16.msra.mxu0 %v2564
      %2788 = vmatpush.bf16.msra.mxu0 %v2563
      %2789 = vmatpush.bf16.msra.mxu0 %v2562
      %2790 = vmatpush.bf16.msra.mxu0 %v2561
      %2791 = vmatpush.bf16.msra.mxu0 %v2560
      %2792 = vmatpush.bf16.msra.mxu0 %v2559
      %2793 = vmatmul.bf16.gmra.mxu0 %v2113
      %v2794 = vpop.f32.mrf.mxu0
      %v2795 = vadd.f32 %v2746, %v2794
      %v2796 = vpop.f32.mrf.mxu0
      %v2797 = vadd.f32 %v2748, %v2796
      %2798 = vmatmul.bf16.gmra.mxu0 %v2122
      %v2799 = vpop.f32.mrf.mxu0
      %v2800 = vadd.f32 %v2751, %v2799
      %v2801 = vpop.f32.mrf.mxu0
      %v2802 = vadd.f32 %v2753, %v2801
      %2803 = vmatmul.bf16.gmra.mxu0 %v2131
      %v2804 = vpop.f32.mrf.mxu0
      %v2805 = vadd.f32 %v2756, %v2804
      %v2806 = vpop.f32.mrf.mxu0
      %v2807 = vadd.f32 %v2758, %v2806
      %2808 = vmatmul.bf16.gmra.mxu0 %v2140
      %v2809 = vpop.f32.mrf.mxu0
      %v2810 = vadd.f32 %v2761, %v2809
      %v2811 = vpop.f32.mrf.mxu0
      %v2812 = vadd.f32 %v2763, %v2811
      %2813 = vmatmul.bf16.gmra.mxu0 %v2149
      %v2814 = vpop.f32.mrf.mxu0
      %v2815 = vadd.f32 %v2766, %v2814
      %v2816 = vpop.f32.mrf.mxu0
      %v2817 = vadd.f32 %v2768, %v2816
      %2818 = vmatmul.bf16.gmra.mxu0 %v2158
      %v2819 = vpop.f32.mrf.mxu0
      %v2820 = vadd.f32 %v2771, %v2819
      %v2821 = vpop.f32.mrf.mxu0
      %v2822 = vadd.f32 %v2773, %v2821
      %2823 = vmatmul.bf16.gmra.mxu0 %v2167
      %v2824 = vpop.f32.mrf.mxu0
      %v2825 = vadd.f32 %v2776, %v2824
      %v2826 = vpop.f32.mrf.mxu0
      %v2827 = vadd.f32 %v2778, %v2826
      %2828 = vmatmul.bf16.gmra.mxu0 %v2176
      %v2829 = vpop.f32.mrf.mxu0
      %v2830 = vadd.f32 %v2781, %v2829
      %v2831 = vpop.f32.mrf.mxu0
      %v2832 = vadd.f32 %v2783, %v2831
      %2833 = vdwg.mxu0
      %2834 = vmatpush.bf16.msra.mxu0 %v2574
      %2835 = vmatpush.bf16.msra.mxu0 %v2573
      %2836 = vmatpush.bf16.msra.mxu0 %v2572
      %2837 = vmatpush.bf16.msra.mxu0 %v2571
      %2838 = vmatpush.bf16.msra.mxu0 %v2570
      %2839 = vmatpush.bf16.msra.mxu0 %v2569
      %2840 = vmatpush.bf16.msra.mxu0 %v2568
      %2841 = vmatpush.bf16.msra.mxu0 %v2567
      %2842 = vmatmul.bf16.gmra.mxu0 %v2114
      %v2843 = vpop.f32.mrf.mxu0
      %v2844 = vadd.f32 %v2795, %v2843
      %v2845 = vpop.f32.mrf.mxu0
      %v2846 = vadd.f32 %v2797, %v2845
      %2847 = vmatmul.bf16.gmra.mxu0 %v2123
      %v2848 = vpop.f32.mrf.mxu0
      %v2849 = vadd.f32 %v2800, %v2848
      %v2850 = vpop.f32.mrf.mxu0
      %v2851 = vadd.f32 %v2802, %v2850
      %2852 = vmatmul.bf16.gmra.mxu0 %v2132
      %v2853 = vpop.f32.mrf.mxu0
      %v2854 = vadd.f32 %v2805, %v2853
      %v2855 = vpop.f32.mrf.mxu0
      %v2856 = vadd.f32 %v2807, %v2855
      %2857 = vmatmul.bf16.gmra.mxu0 %v2141
      %v2858 = vpop.f32.mrf.mxu0
      %v2859 = vadd.f32 %v2810, %v2858
      %v2860 = vpop.f32.mrf.mxu0
      %v2861 = vadd.f32 %v2812, %v2860
      %2862 = vmatmul.bf16.gmra.mxu0 %v2150
      %v2863 = vpop.f32.mrf.mxu0
      %v2864 = vadd.f32 %v2815, %v2863
      %v2865 = vpop.f32.mrf.mxu0
      %v2866 = vadd.f32 %v2817, %v2865
      %2867 = vmatmul.bf16.gmra.mxu0 %v2159
      %v2868 = vpop.f32.mrf.mxu0
      %v2869 = vadd.f32 %v2820, %v2868
      %v2870 = vpop.f32.mrf.mxu0
      %v2871 = vadd.f32 %v2822, %v2870
      %2872 = vmatmul.bf16.gmra.mxu0 %v2168
      %v2873 = vpop.f32.mrf.mxu0
      %v2874 = vadd.f32 %v2825, %v2873
      %v2875 = vpop.f32.mrf.mxu0
      %v2876 = vadd.f32 %v2827, %v2875
      %2877 = vmatmul.bf16.gmra.mxu0 %v2177
      %v2878 = vpop.f32.mrf.mxu0
      %v2879 = vadd.f32 %v2830, %v2878
      %v2880 = vpop.f32.mrf.mxu0
      %v2881 = vadd.f32 %v2832, %v2880
      %2882 = vdwg.mxu0
      %2883 = vmatpush.bf16.msra.mxu0 %v2582
      %2884 = vmatpush.bf16.msra.mxu0 %v2581
      %2885 = vmatpush.bf16.msra.mxu0 %v2580
      %2886 = vmatpush.bf16.msra.mxu0 %v2579
      %2887 = vmatpush.bf16.msra.mxu0 %v2578
      %2888 = vmatpush.bf16.msra.mxu0 %v2577
      %2889 = vmatpush.bf16.msra.mxu0 %v2576
      %2890 = vmatpush.bf16.msra.mxu0 %v2575
      %2891 = vmatmul.bf16.gmra.mxu0 %v2115
      %v2892 = vpop.f32.mrf.mxu0
      %v2893 = vadd.f32 %v2844, %v2892
      %v2894 = vpop.f32.mrf.mxu0
      %v2895 = vadd.f32 %v2846, %v2894
      %2896 = vmatmul.bf16.gmra.mxu0 %v2124
      %v2897 = vpop.f32.mrf.mxu0
      %v2898 = vadd.f32 %v2849, %v2897
      %v2899 = vpop.f32.mrf.mxu0
      %v2900 = vadd.f32 %v2851, %v2899
      %2901 = vmatmul.bf16.gmra.mxu0 %v2133
      %v2902 = vpop.f32.mrf.mxu0
      %v2903 = vadd.f32 %v2854, %v2902
      %v2904 = vpop.f32.mrf.mxu0
      %v2905 = vadd.f32 %v2856, %v2904
      %2906 = vmatmul.bf16.gmra.mxu0 %v2142
      %v2907 = vpop.f32.mrf.mxu0
      %v2908 = vadd.f32 %v2859, %v2907
      %v2909 = vpop.f32.mrf.mxu0
      %v2910 = vadd.f32 %v2861, %v2909
      %2911 = vmatmul.bf16.gmra.mxu0 %v2151
      %v2912 = vpop.f32.mrf.mxu0
      %v2913 = vadd.f32 %v2864, %v2912
      %v2914 = vpop.f32.mrf.mxu0
      %v2915 = vadd.f32 %v2866, %v2914
      %2916 = vmatmul.bf16.gmra.mxu0 %v2160
      %v2917 = vpop.f32.mrf.mxu0
      %v2918 = vadd.f32 %v2869, %v2917
      %v2919 = vpop.f32.mrf.mxu0
      %v2920 = vadd.f32 %v2871, %v2919
      %2921 = vmatmul.bf16.gmra.mxu0 %v2169
      %v2922 = vpop.f32.mrf.mxu0
      %v2923 = vadd.f32 %v2874, %v2922
      %v2924 = vpop.f32.mrf.mxu0
      %v2925 = vadd.f32 %v2876, %v2924
      %2926 = vmatmul.bf16.gmra.mxu0 %v2178
      %v2927 = vpop.f32.mrf.mxu0
      %v2928 = vadd.f32 %v2879, %v2927
      %v2929 = vpop.f32.mrf.mxu0
      %v2930 = vadd.f32 %v2881, %v2929
      %2931 = vdwg.mxu0
      %2932 = vmatpush.bf16.msra.mxu0 %v2590
      %2933 = vmatpush.bf16.msra.mxu0 %v2589
      %2934 = vmatpush.bf16.msra.mxu0 %v2588
      %2935 = vmatpush.bf16.msra.mxu0 %v2587
      %2936 = vmatpush.bf16.msra.mxu0 %v2586
      %2937 = vmatpush.bf16.msra.mxu0 %v2585
      %2938 = vmatpush.bf16.msra.mxu0 %v2584
      %2939 = vmatpush.bf16.msra.mxu0 %v2583
      %2940 = vmatmul.bf16.gmra.mxu0 %v2116
      %v2941 = vpop.f32.mrf.mxu0
      %v2942 = vadd.f32 %v2893, %v2941
      %v2943 = vpop.f32.mrf.mxu0
      %v2944 = vadd.f32 %v2895, %v2943
      %2945 = vmatmul.bf16.gmra.mxu0 %v2125
      %v2946 = vpop.f32.mrf.mxu0
      %v2947 = vadd.f32 %v2898, %v2946
      %v2948 = vpop.f32.mrf.mxu0
      %v2949 = vadd.f32 %v2900, %v2948
      %2950 = vmatmul.bf16.gmra.mxu0 %v2134
      %v2951 = vpop.f32.mrf.mxu0
      %v2952 = vadd.f32 %v2903, %v2951
      %v2953 = vpop.f32.mrf.mxu0
      %v2954 = vadd.f32 %v2905, %v2953
      %2955 = vmatmul.bf16.gmra.mxu0 %v2143
      %v2956 = vpop.f32.mrf.mxu0
      %v2957 = vadd.f32 %v2908, %v2956
      %v2958 = vpop.f32.mrf.mxu0
      %v2959 = vadd.f32 %v2910, %v2958
      %2960 = vmatmul.bf16.gmra.mxu0 %v2152
      %v2961 = vpop.f32.mrf.mxu0
      %v2962 = vadd.f32 %v2913, %v2961
      %v2963 = vpop.f32.mrf.mxu0
      %v2964 = vadd.f32 %v2915, %v2963
      %2965 = vmatmul.bf16.gmra.mxu0 %v2161
      %v2966 = vpop.f32.mrf.mxu0
      %v2967 = vadd.f32 %v2918, %v2966
      %v2968 = vpop.f32.mrf.mxu0
      %v2969 = vadd.f32 %v2920, %v2968
      %2970 = vmatmul.bf16.gmra.mxu0 %v2170
      %v2971 = vpop.f32.mrf.mxu0
      %v2972 = vadd.f32 %v2923, %v2971
      %v2973 = vpop.f32.mrf.mxu0
      %v2974 = vadd.f32 %v2925, %v2973
      %2975 = vmatmul.bf16.gmra.mxu0 %v2179
      %v2976 = vpop.f32.mrf.mxu0
      %v2977 = vadd.f32 %v2928, %v2976
      %v2978 = vpop.f32.mrf.mxu0
      %v2979 = vadd.f32 %v2930, %v2978
      %2980 = vdwg.mxu0
      %2981 = vmatpush.bf16.msra.mxu0 %v2598
      %2982 = vmatpush.bf16.msra.mxu0 %v2597
      %2983 = vmatpush.bf16.msra.mxu0 %v2596
      %2984 = vmatpush.bf16.msra.mxu0 %v2595
      %2985 = vmatpush.bf16.msra.mxu0 %v2594
      %2986 = vmatpush.bf16.msra.mxu0 %v2593
      %2987 = vmatpush.bf16.msra.mxu0 %v2592
      %2988 = vmatpush.bf16.msra.mxu0 %v2591
      %2989 = vmatmul.bf16.gmra.mxu0 %v2117
      %v2990 = vpop.f32.mrf.mxu0
      %v2991 = vadd.f32 %v2942, %v2990
      %v2992 = vpop.f32.mrf.mxu0
      %v2993 = vadd.f32 %v2944, %v2992
      %2994 = vmatmul.bf16.gmra.mxu0 %v2126
      %v2995 = vpop.f32.mrf.mxu0
      %v2996 = vadd.f32 %v2947, %v2995
      %v2997 = vpop.f32.mrf.mxu0
      %v2998 = vadd.f32 %v2949, %v2997
      %2999 = vmatmul.bf16.gmra.mxu0 %v2135
      %v3000 = vpop.f32.mrf.mxu0
      %v3001 = vadd.f32 %v2952, %v3000
      %v3002 = vpop.f32.mrf.mxu0
      %v3003 = vadd.f32 %v2954, %v3002
      %3004 = vmatmul.bf16.gmra.mxu0 %v2144
      %v3005 = vpop.f32.mrf.mxu0
      %v3006 = vadd.f32 %v2957, %v3005
      %v3007 = vpop.f32.mrf.mxu0
      %v3008 = vadd.f32 %v2959, %v3007
      %3009 = vmatmul.bf16.gmra.mxu0 %v2153
      %v3010 = vpop.f32.mrf.mxu0
      %v3011 = vadd.f32 %v2962, %v3010
      %v3012 = vpop.f32.mrf.mxu0
      %v3013 = vadd.f32 %v2964, %v3012
      %3014 = vmatmul.bf16.gmra.mxu0 %v2162
      %v3015 = vpop.f32.mrf.mxu0
      %v3016 = vadd.f32 %v2967, %v3015
      %v3017 = vpop.f32.mrf.mxu0
      %v3018 = vadd.f32 %v2969, %v3017
      %3019 = vmatmul.bf16.gmra.mxu0 %v2171
      %v3020 = vpop.f32.mrf.mxu0
      %v3021 = vadd.f32 %v2972, %v3020
      %v3022 = vpop.f32.mrf.mxu0
      %v3023 = vadd.f32 %v2974, %v3022
      %3024 = vmatmul.bf16.gmra.mxu0 %v2180
      %v3025 = vpop.f32.mrf.mxu0
      %v3026 = vadd.f32 %v2977, %v3025
      %v3027 = vpop.f32.mrf.mxu0
      %v3028 = vadd.f32 %v2979, %v3027
      %3029 = vdwg.mxu0
      %3030 = vmatpush.bf16.msra.mxu0 %v2606
      %3031 = vmatpush.bf16.msra.mxu0 %v2605
      %3032 = vmatpush.bf16.msra.mxu0 %v2604
      %3033 = vmatpush.bf16.msra.mxu0 %v2603
      %3034 = vmatpush.bf16.msra.mxu0 %v2602
      %3035 = vmatpush.bf16.msra.mxu0 %v2601
      %3036 = vmatpush.bf16.msra.mxu0 %v2600
      %3037 = vmatpush.bf16.msra.mxu0 %v2599
      %3038 = vmatmul.bf16.gmra.mxu0 %v2118
      %v3039 = vpop.f32.mrf.mxu0
      %v3040 = vadd.f32 %v2991, %v3039
      %v3041 = vpop.f32.mrf.mxu0
      %v3042 = vadd.f32 %v2993, %v3041
      %3043 = vmatmul.bf16.gmra.mxu0 %v2127
      %v3044 = vpop.f32.mrf.mxu0
      %v3045 = vadd.f32 %v2996, %v3044
      %v3046 = vpop.f32.mrf.mxu0
      %v3047 = vadd.f32 %v2998, %v3046
      %3048 = vmatmul.bf16.gmra.mxu0 %v2136
      %v3049 = vpop.f32.mrf.mxu0
      %v3050 = vadd.f32 %v3001, %v3049
      %v3051 = vpop.f32.mrf.mxu0
      %v3052 = vadd.f32 %v3003, %v3051
      %3053 = vmatmul.bf16.gmra.mxu0 %v2145
      %v3054 = vpop.f32.mrf.mxu0
      %v3055 = vadd.f32 %v3006, %v3054
      %v3056 = vpop.f32.mrf.mxu0
      %v3057 = vadd.f32 %v3008, %v3056
      %3058 = vmatmul.bf16.gmra.mxu0 %v2154
      %v3059 = vpop.f32.mrf.mxu0
      %v3060 = vadd.f32 %v3011, %v3059
      %v3061 = vpop.f32.mrf.mxu0
      %v3062 = vadd.f32 %v3013, %v3061
      %3063 = vmatmul.bf16.gmra.mxu0 %v2163
      %v3064 = vpop.f32.mrf.mxu0
      %v3065 = vadd.f32 %v3016, %v3064
      %v3066 = vpop.f32.mrf.mxu0
      %v3067 = vadd.f32 %v3018, %v3066
      %3068 = vmatmul.bf16.gmra.mxu0 %v2172
      %v3069 = vpop.f32.mrf.mxu0
      %v3070 = vadd.f32 %v3021, %v3069
      %v3071 = vpop.f32.mrf.mxu0
      %v3072 = vadd.f32 %v3023, %v3071
      %3073 = vmatmul.bf16.gmra.mxu0 %v2181
      %v3074 = vpop.f32.mrf.mxu0
      %v3075 = vadd.f32 %v3026, %v3074
      %v3076 = vpop.f32.mrf.mxu0
      %v3077 = vadd.f32 %v3028, %v3076
      %3078 = vdwg.mxu0
      %3079 = vmatpush.bf16.msra.mxu0 %v2614
      %3080 = vmatpush.bf16.msra.mxu0 %v2613
      %3081 = vmatpush.bf16.msra.mxu0 %v2612
      %3082 = vmatpush.bf16.msra.mxu0 %v2611
      %3083 = vmatpush.bf16.msra.mxu0 %v2610
      %3084 = vmatpush.bf16.msra.mxu0 %v2609
      %3085 = vmatpush.bf16.msra.mxu0 %v2608
      %3086 = vmatpush.bf16.msra.mxu0 %v2607
      %3087 = vmatmul.bf16.gmra.mxu0 %v2119
      %v3088 = vpop.f32.mrf.mxu0
      %v3089 = vadd.f32 %v3040, %v3088
      %v3090 = vpop.f32.mrf.mxu0
      %v3091 = vadd.f32 %v3042, %v3090
      %3092 = vmatmul.bf16.gmra.mxu0 %v2128
      %v3093 = vpop.f32.mrf.mxu0
      %v3094 = vadd.f32 %v3045, %v3093
      %v3095 = vpop.f32.mrf.mxu0
      %v3096 = vadd.f32 %v3047, %v3095
      %3097 = vmatmul.bf16.gmra.mxu0 %v2137
      %v3098 = vpop.f32.mrf.mxu0
      %v3099 = vadd.f32 %v3050, %v3098
      %v3100 = vpop.f32.mrf.mxu0
      %v3101 = vadd.f32 %v3052, %v3100
      %3102 = vmatmul.bf16.gmra.mxu0 %v2146
      %v3103 = vpop.f32.mrf.mxu0
      %v3104 = vadd.f32 %v3055, %v3103
      %v3105 = vpop.f32.mrf.mxu0
      %v3106 = vadd.f32 %v3057, %v3105
      %3107 = vmatmul.bf16.gmra.mxu0 %v2155
      %v3108 = vpop.f32.mrf.mxu0
      %v3109 = vadd.f32 %v3060, %v3108
      %v3110 = vpop.f32.mrf.mxu0
      %v3111 = vadd.f32 %v3062, %v3110
      %3112 = vmatmul.bf16.gmra.mxu0 %v2164
      %v3113 = vpop.f32.mrf.mxu0
      %v3114 = vadd.f32 %v3065, %v3113
      %v3115 = vpop.f32.mrf.mxu0
      %v3116 = vadd.f32 %v3067, %v3115
      %3117 = vmatmul.bf16.gmra.mxu0 %v2173
      %v3118 = vpop.f32.mrf.mxu0
      %v3119 = vadd.f32 %v3070, %v3118
      %v3120 = vpop.f32.mrf.mxu0
      %v3121 = vadd.f32 %v3072, %v3120
      %3122 = vmatmul.bf16.gmra.mxu0 %v2182
      %v3123 = vpop.f32.mrf.mxu0
      %v3124 = vadd.f32 %v3075, %v3123
      %v3125 = vpop.f32.mrf.mxu0
      %v3126 = vadd.f32 %v3077, %v3125
      %3127 = vdwg.mxu0
      %3128 = vst [vmem:[%s306] sm:$0xff] %v3089
      %3129 = vst [vmem:[%s306 + $0x8] sm:$0xff] %v3091
      %3130 = vst [vmem:[%s306 + $0x10] sm:$0xff] %v3094
      %3131 = vst [vmem:[%s306 + $0x18] sm:$0xff] %v3096
      %3132 = vst [vmem:[%s306 + $0x20] sm:$0xff] %v3099
      %3133 = vst [vmem:[%s306 + $0x28] sm:$0xff] %v3101
      %3134 = vst [vmem:[%s306 + $0x30] sm:$0xff] %v3104
      %3135 = vst [vmem:[%s306 + $0x38] sm:$0xff] %v3106
      %3136 = vst [vmem:[%s306 + $0x40] sm:$0xff] %v3109
      %3137 = vst [vmem:[%s306 + $0x48] sm:$0xff] %v3111
      %3138 = vst [vmem:[%s306 + $0x50] sm:$0xff] %v3114
      %3139 = vst [vmem:[%s306 + $0x58] sm:$0xff] %v3116
      %3140 = vst [vmem:[%s306 + $0x60] sm:$0xff] %v3119
      %3141 = vst [vmem:[%s306 + $0x68] sm:$0xff] %v3121
      %3142 = vst [vmem:[%s306 + $0x70] sm:$0xff] %v3124
      %3143 = vst [vmem:[%s306 + $0x78] sm:$0xff] %v3126
      %v3144 = vadd.f32 %v3089, %v3091
      %v3145 = vadd.f32 %v3144, %v3094
      %v3146 = vadd.f32 %v3145, %v3096
      %v3147 = vadd.f32 %v3146, %v3099
      %v3148 = vadd.f32 %v3147, %v3101
      %v3149 = vadd.f32 %v3148, %v3104
      %v3150 = vadd.f32 %v3149, %v3106
      %v3151 = vadd.f32 %v3150, %v3109
      %v3152 = vadd.f32 %v3151, %v3111
      %v3153 = vadd.f32 %v3152, %v3114
      %v3154 = vadd.f32 %v3153, %v3116
      %v3155 = vadd.f32 %v3154, %v3119
      %v3156 = vadd.f32 %v3155, %v3121
      %v3157 = vadd.f32 %v3156, %v3124
      %v3158 = vadd.f32 %v3157, %v3126
      %v3159 = vrot.slane %v3158, 4
      %v3160 = vadd.f32 %v3158, %v3159
      %v3161 = vrot.slane %v3160, 2
      %v3162 = vadd.f32 %v3160, %v3161
      %v3163 = vrot.slane %v3162, 1
      %v3164 = vadd.f32 %v3162, %v3163
      %v3165 = vrcp.pop 128.0
      %v3166 = vmul.f32 128.0, %v3165
      %v3167 = vsub.f32 1.0, %v3166
      %v3168 = vmul.f32 %v3165, %v3167
      %v3169 = vadd.f32 %v3165, %v3168
      %vm3170 = vweird.f32 %v3165
      %v3171 = vsel %vm3170, %v3165, %v3169
      %v3172 = vmul.f32 %v3164, %v3171
      %v3173 = vsub.f32 %v3089, %v3172
      %v3174 = vsub.f32 %v3091, %v3172
      %v3175 = vsub.f32 %v3094, %v3172
      %v3176 = vsub.f32 %v3096, %v3172
      %v3177 = vsub.f32 %v3099, %v3172
      %v3178 = vsub.f32 %v3101, %v3172
      %v3179 = vsub.f32 %v3104, %v3172
      %v3180 = vsub.f32 %v3106, %v3172
      %v3181 = vsub.f32 %v3109, %v3172
      %v3182 = vsub.f32 %v3111, %v3172
      %v3183 = vsub.f32 %v3114, %v3172
      %v3184 = vsub.f32 %v3116, %v3172
      %v3185 = vsub.f32 %v3119, %v3172
      %v3186 = vsub.f32 %v3121, %v3172
      %v3187 = vsub.f32 %v3124, %v3172
      %v3188 = vsub.f32 %v3126, %v3172
      %v3189 = vmul.f32 %v3173, %v3173
      %v3190 = vmul.f32 %v3174, %v3174
      %v3191 = vmul.f32 %v3175, %v3175
      %v3192 = vmul.f32 %v3176, %v3176
      %v3193 = vmul.f32 %v3177, %v3177
      %v3194 = vmul.f32 %v3178, %v3178
      %v3195 = vmul.f32 %v3179, %v3179
      %v3196 = vmul.f32 %v3180, %v3180
      %v3197 = vmul.f32 %v3181, %v3181
      %v3198 = vmul.f32 %v3182, %v3182
      %v3199 = vmul.f32 %v3183, %v3183
      %v3200 = vmul.f32 %v3184, %v3184
      %v3201 = vmul.f32 %v3185, %v3185
      %v3202 = vmul.f32 %v3186, %v3186
      %v3203 = vmul.f32 %v3187, %v3187
      %v3204 = vmul.f32 %v3188, %v3188
      %v3205 = vadd.f32 %v3189, %v3190
      %v3206 = vadd.f32 %v3205, %v3191
      %v3207 = vadd.f32 %v3206, %v3192
      %v3208 = vadd.f32 %v3207, %v3193
      %v3209 = vadd.f32 %v3208, %v3194
      %v3210 = vadd.f32 %v3209, %v3195
      %v3211 = vadd.f32 %v3210, %v3196
      %v3212 = vadd.f32 %v3211, %v3197
      %v3213 = vadd.f32 %v3212, %v3198
      %v3214 = vadd.f32 %v3213, %v3199
      %v3215 = vadd.f32 %v3214, %v3200
      %v3216 = vadd.f32 %v3215, %v3201
      %v3217 = vadd.f32 %v3216, %v3202
      %v3218 = vadd.f32 %v3217, %v3203
      %v3219 = vadd.f32 %v3218, %v3204
      %v3220 = vrot.slane %v3219, 4
      %v3221 = vadd.f32 %v3219, %v3220
      %v3222 = vrot.slane %v3221, 2
      %v3223 = vadd.f32 %v3221, %v3222
      %v3224 = vrot.slane %v3223, 1
      %v3225 = vadd.f32 %v3223, %v3224
      %3226 = vst [vmem:[%s315] sm:$0x1] %v3172
      %3227 = vst [vmem:[%s315 + $0x1] sm:$0x1] %v3225
      %s3228 = smul.u32 8, %s21
      %p3229 = scmp.lt.s32.totalorder %s20, 1
      %s3230 = scalar_select %p3229, %s20, 1
      %p3231 = scmp.lt.s32.totalorder %s3228, 15
      %s3232 = scalar_select %p3231, %s3228, 15
      %s3233 = smul.addr %s3232, 2
      %s3234 = smul.addr %s3230, 32
      %s3235 = sadd.s32 %s3233, %s3234
      %s3236 = smul.addr %s3235, 8
      %s3237 = scalar_lea.vmem %s3, %s3236
      %p3238 = scmp.lt.s32.totalorder %s20, 1
      %s3239 = scalar_select %p3238, %s20, 1
      %p3240 = scmp.lt.s32.totalorder %s21, 1
      %s3241 = scalar_select %p3240, %s21, 1
      %s3242 = smul.addr %s3239, 2
      %s3243 = sadd.s32 %s3241, %s3242
      %s3244 = smul.addr %s3243, 8
      %s3245 = scalar_lea.vmem %s4, %s3244
      // Predicated region
      $region33: #{unet_double_up.8} parent=31 // pred_check
        %p3246 = pneg %p129
      $region34: #{unet_double_up.8} parent=31 // pred_check_branch
        %3248 = sbr.rel (%p3246) target = $region36
      $region35: #{unet_double_up.8} parent=31 // pred_region
        %s3249 = smul.u32 8, %s21
      $region36: #{unet_double_up.8} parent=31 // pred_fallthru
        _
      // Predicated region
      $region37: #{unet_double_up.8} parent=31 // pred_check
        %p3250 = pneg %p157
      $region38: #{unet_double_up.8} parent=31 // pred_check_branch
        %3252 = sbr.rel (%p3250) target = $region40
      $region39: #{unet_double_up.8} parent=31 // pred_region
        _
      $region40: #{unet_double_up.8} parent=31 // pred_fallthru
        _
    $region32: #{unet_double_up.8} parent=5 // pred_fallthru
      _
    %p3253 = scmp.le.s32.totalorder 2, %s11
    // Predicated region
    $region41: #{unet_double_up.8} parent=5 // pred_check
      %p3254 = pneg %p3253
    $region42: #{unet_double_up.8} parent=5 // pred_check_branch
      %3256 = sbr.rel (%p3254) target = $region44
    $region43: #{unet_double_up.8} parent=5 // pred_region
      %s3257 = ssub.s32 %s11, 2
      // Predicated region
      $region45: #{unet_double_up.8} parent=43 // pred_check
        %p3258 = pneg %p135
      $region46: #{unet_double_up.8} parent=43 // pred_check_branch
        %3260 = sbr.rel (%p3258) target = $region48
      $region47: #{unet_double_up.8} parent=43 // pred_region
        %s3261 = smul.u32 8, %s23
        %p3262 = scmp.lt.s32.totalorder %s22, 1
        %s3263 = scalar_select %p3262, %s22, 1
        %p3264 = scmp.lt.s32.totalorder %s3261, 15
        %s3265 = scalar_select %p3264, %s3261, 15
        %s3266 = smul.addr %s3265, 2
        %s3267 = smul.addr %s3263, 32
        %s3268 = sadd.s32 %s3266, %s3267
        %s3269 = smul.addr %s3268, 8
        %s3270 = scalar_lea.vmem %s3, %s3269
      $region48: #{unet_double_up.8} parent=43 // pred_fallthru
        _
      // Predicated region
      $region49: #{unet_double_up.8} parent=43 // pred_check
        %p3271 = pneg %p163
      $region50: #{unet_double_up.8} parent=43 // pred_check_branch
        %3273 = sbr.rel (%p3271) target = $region52
      $region51: #{unet_double_up.8} parent=43 // pred_region
        %p3274 = scmp.lt.s32.totalorder %s22, 1
        %s3275 = scalar_select %p3274, %s22, 1
        %p3276 = scmp.lt.s32.totalorder %s23, 1
        %s3277 = scalar_select %p3276, %s23, 1
        %s3278 = smul.addr %s3275, 2
        %s3279 = sadd.s32 %s3277, %s3278
        %s3280 = smul.addr %s3279, 8
        %s3281 = scalar_lea.vmem %s4, %s3280
      $region52: #{unet_double_up.8} parent=43 // pred_fallthru
        _
    $region44: #{unet_double_up.8} parent=5 // pred_fallthru
      _
  $region6: #{unet_double_up.8} parent=0 // loop_footer
    %s15 = sadd.s32 1, %s11
  $region7: #{unet_double_up.8} parent=0 // loop_footer_branch
    %10 = sbr.rel target = $region3
  $region8: #{unet_double_up.8} parent=0 // loop_exit
    _

</llo_original>
